<compile_context>
chip_gen: v7x
topology: tpu7x:2x2x1
jax: 0.10.0
libtpu: 0.0.40
codegen_flags: <defaults>
</compile_context>

<pallas_src>
import numpy as np
import jax
import jax.numpy as jnp
from jax import lax
from jax.experimental import pallas as pl
from jax.experimental.pallas import tpu as pltpu

KERNEL_SIZE = 15
NUM_INPUTS = 1
NUM_CHANNELS = [3, 6, 6, 6, 6, 6, 6, 6, 5]
MAX_CH = 8          # each tap occupies one 8-row sublane block; row 7 = folded bias


# ---------------------------------------------------------------------------
# Parameter init (PyTorch Conv1d layouts)
# ---------------------------------------------------------------------------
def init_params(key):
    params = []
    for i, C_out in enumerate(NUM_CHANNELS):
        C_in = NUM_INPUTS if i == 0 else NUM_CHANNELS[i - 1]
        key, *ks = jax.random.split(key, 7)
        blk = {
            "w1": 0.01 * jax.random.normal(ks[0], (C_out, C_in, KERNEL_SIZE), jnp.float32),
            "b1": 0.01 * jax.random.normal(ks[1], (C_out,), jnp.float32),
            "w2": 0.01 * jax.random.normal(ks[2], (C_out, C_out, KERNEL_SIZE), jnp.float32),
            "b2": 0.01 * jax.random.normal(ks[3], (C_out,), jnp.float32),
        }
        if C_in != C_out:  # downsample 1x1 conv on the residual path
            blk["wd"] = 0.01 * jax.random.normal(ks[4], (C_out, C_in, 1), jnp.float32)
            blk["bd"] = 0.01 * jax.random.normal(ks[5], (C_out,), jnp.float32)
        params.append(blk)
    key, k1, k2 = jax.random.split(key, 3)
    reg = {"w": 0.01 * jax.random.normal(k1, (1, NUM_CHANNELS[-1], 1), jnp.float32),
           "b": 0.01 * jax.random.normal(k2, (1,), jnp.float32)}
    return params, reg


def _live_taps(K, dilation, L):
    """Taps whose receptive window intersects [0, L).  Tap k reads x[t + (k-K//2)*d];
    it is provably all-zeros (reads only the 'same'-padding) iff |k - K//2|*d >= L."""
    half = (K - 1) // 2
    taps = [(k, (k - half) * dilation) for k in range(K)]
    return [(k, s) for (k, s) in taps if abs(s) < L]


# ---------------------------------------------------------------------------
# Host-side, one-time weight repack into a single VMEM-resident slab
# ---------------------------------------------------------------------------
def pack_params(params, reg, L):
    """Build ONE (8, TOTW) f32 weight slab + static layout metadata.

    Each conv -> (C_out, n_live_taps*8) matrix (column t*8+c = w[o, c, k_t]); the bias
    is folded into column (centre_tap*8 + 7) and matched by an all-ones slab row in
    the kernel.  Downsample / regression 1x1 convs -> (C_out, 8) blocks, bias in
    column 7 (added via a (C,1) lane broadcast, only 3 of those in the whole net).
    Conv blocks start at 128-lane-aligned column offsets for aligned weight loads."""
    cols, off = [], 0

    def add(arr, align):
        nonlocal off
        pad = (-off) % align
        if pad:
            cols.append(np.zeros((MAX_CH, pad), np.float32))
            off += pad
        start = off
        cols.append(np.asarray(arr, np.float32))
        off += arr.shape[1]
        return start

    blocks = []
    for i, blk in enumerate(params):
        dil = 2 ** i
        C_out, C_in, K = blk["w1"].shape
        # row MAX_CH-1 of every tap block is reserved for the folded bias
        assert max(C_in, C_out) <= MAX_CH - 1, "channel count too large for 8-row tap blocks"
        live = _live_taps(K, dil, L)
        shifts = tuple(s for _, s in live)
        ci = shifts.index(0)                      # centre tap is always live

        def pack_conv(w, b):
            w = np.asarray(w, np.float32)
            Co, Cs, _ = w.shape
            m = np.zeros((MAX_CH, len(live) * MAX_CH), np.float32)
            for t, (k, _) in enumerate(live):
                m[:Co, t * MAX_CH:t * MAX_CH + Cs] = w[:, :, k]
            m[:Co, ci * MAX_CH + MAX_CH - 1] = np.asarray(b, np.float32)   # folded bias
            return m

        c1 = add(pack_conv(blk["w1"], blk["b1"]), align=128)
        c2 = add(pack_conv(blk["w2"], blk["b2"]), align=128)
        ds = None
        if "wd" in blk:
            m = np.zeros((MAX_CH, MAX_CH), np.float32)
            m[:C_out, :C_in] = np.asarray(blk["wd"], np.float32)[:, :, 0]
            m[:C_out, MAX_CH - 1] = np.asarray(blk["bd"], np.float32)
            ds = add(m, align=MAX_CH)
        blocks.append(dict(C_in=C_in, C_out=C_out, shifts=shifts, ci=ci,
                           c1=c1, c2=c2, ds=ds))

    mreg = np.zeros((MAX_CH, MAX_CH), np.float32)
    mreg[:1, :NUM_CHANNELS[-1]] = np.asarray(reg["w"], np.float32)[:, :, 0]
    mreg[:1, MAX_CH - 1] = np.asarray(reg["b"], np.float32)
    reg_off = add(mreg, align=MAX_CH)

    pad = (-off) % 128                            # lane-tile align the total width
    if pad:
        cols.append(np.zeros((MAX_CH, pad), np.float32))
        off += pad
    W = jnp.asarray(np.concatenate(cols, axis=1))
    meta = dict(blocks=blocks, reg=reg_off, L=L,
                max_k=max(len(b["shifts"]) for b in blocks) * MAX_CH)
    return W, meta


# ---------------------------------------------------------------------------
# Fused Pallas kernel: all 9 TemporalBlocks + 1x1 regression in ONE kernel
# ---------------------------------------------------------------------------
def _make_kernel(meta, B, L):
    NL = B * L                     # batch elements stacked along lanes
    blocks = meta["blocks"]
    reg_off = meta["reg"]

    def kernel(x_ref, w_ref, o_ref, slab_ref):
        y = x_ref[0]                                          # (C0, NL) activations

        def conv(v, C_src, C_out, shifts, col0):
            """One dilated conv (+ folded bias) = one MXU matmul over the im2col slab.
            The slab rows used by this block were zeroed (and the bias row set to 1)
            once per block; only the valid, shifted column windows are (re)written."""
            K = len(shifts) * MAX_CH
            for t, s in enumerate(shifts):
                r0 = t * MAX_CH
                if s == 0:                                    # centre tap: full width
                    slab_ref[r0:r0 + C_src, :] = v
                else:
                    width = L - abs(s)
                    for b in range(B):                        # per-batch lane segment
                        src = b * L + max(0, s)
                        dst = b * L + max(0, -s)
                        slab_ref[r0:r0 + C_src, dst:dst + width] = v[:, src:src + width]
            wmat = w_ref[0:C_out, col0:col0 + K]              # (C_out, K), bias folded
            return jnp.dot(wmat, slab_ref[0:K, :], preferred_element_type=jnp.float32)

        for m in blocks:
            C_in, C_out, shifts = m["C_in"], m["C_out"], m["shifts"]
            K = len(shifts) * MAX_CH
            # (Re)initialise the slab once per block: zero the K rows this block's
            # taps use and set the all-ones bias row (row 7 of the centre tap).
            # conv2 reuses the same shifts, so its tap stores overwrite exactly the
            # same valid column ranges and the zero padding / ones row stay valid.
            slab_ref[0:K, :] = jnp.zeros((K, NL), jnp.float32)
            br_row = m["ci"] * MAX_CH + (MAX_CH - 1)
            slab_ref[br_row:br_row + 1, :] = jnp.ones((1, NL), jnp.float32)

            # conv1 + relu, conv2 + relu   (dropout1/2 are identity in eval mode)
            h = jnp.maximum(conv(y, C_in, C_out, shifts, m["c1"]), 0.0)
            h2 = jnp.maximum(conv(h, C_out, C_out, shifts, m["c2"]), 0.0)

            # residual path (1x1 downsample when channel count changes)
            if m["ds"] is not None:
                wd = w_ref[0:C_out, m["ds"]:m["ds"] + C_in]
                bd = w_ref[0:C_out, m["ds"] + MAX_CH - 1:m["ds"] + MAX_CH]
                res = jnp.dot(wd, y, preferred_element_type=jnp.float32) + bd
            else:
                res = y
            y = jnp.maximum(h2 + res, 0.0)

        # 1x1 regression conv -> lane-dense (1, NL) output store
        C_last = blocks[-1]["C_out"]
        wr = w_ref[0:1, reg_off:reg_off + C_last]
        br = w_ref[0:1, reg_off + MAX_CH - 1:reg_off + MAX_CH]
        o_ref[0] = jnp.dot(wr, y, preferred_element_type=jnp.float32) + br

    return kernel


def tcn_iv_1d_forward(x, W, meta):
    """x: (N, 1, L) float32 -> (N, 1, L).  Single fused pallas_call.

    Pairs of batch elements are stacked along lanes (NL = 2*L = 128 lanes -> full
    vregs, lane-dense output stores, every matmul serves both elements).  The grid
    runs over batch pairs and is 'parallel' so pairs spread across TensorCores when
    there are several (v7x with N > 2); for N == 2 on v7x a per-batch grid would use
    both cores, but this latency-bound kernel is already a few microseconds."""
    N, C0, L = x.shape
    assert C0 == NUM_INPUTS
    assert L == meta["L"], "weight slab was dead-tap pruned for a different sequence length"
    B = 2 if N % 2 == 0 else 1            # batch elements stacked along lanes
    G, NL = N // B, B * L

    # Layout plumbing only (tiny): present the kernel a lane-dense (C0, B*L) slab.
    xp = x.reshape(G, B, C0, L).transpose(0, 2, 1, 3).reshape(G, C0, NL)

    out = pl.pallas_call(
        _make_kernel(meta, B, L),
        out_shape=jax.ShapeDtypeStruct((G, 1, NL), jnp.float32),
        grid=(G,),
        in_specs=[pl.BlockSpec((1, C0, NL), lambda g: (g, 0, 0)),
                  pl.BlockSpec(W.shape, lambda g: (0, 0))],      # one packed weight slab
        out_specs=pl.BlockSpec((1, 1, NL), lambda g: (g, 0, 0)),
        scratch_shapes=[pltpu.VMEM((meta["max_k"], NL), jnp.float32)],   # im2col slab
        compiler_params=pltpu.CompilerParams(
            dimension_semantics=("parallel",)),
    )(xp, W)

    return out.reshape(G, 1, B, L).transpose(0, 2, 1, 3).reshape(N, 1, L)


# ---------------------------------------------------------------------------
# Pure-JAX reference (ground truth: full K-tap dilated convs via lax.conv)
# ---------------------------------------------------------------------------
def _ref_conv1d(x, w, b, dilation, pad):
    out = lax.conv_general_dilated(
        x, w, window_strides=(1,), padding=[(pad, pad)],
        rhs_dilation=(dilation,), dimension_numbers=("NCH", "OIH", "NCH"))
    return out + b[None, :, None]


def ref_forward(x, params, reg):
    # TODO(synk): nn.Dropout is treated as identity (eval mode); no RNG dropout.
    for i, blk in enumerate(params):
        dil = 2 ** i
        pad = (KERNEL_SIZE - 1) // 2 * dil
        h = jnp.maximum(_ref_conv1d(x, blk["w1"], blk["b1"], dil, pad), 0.0)
        h = jnp.maximum(_ref_conv1d(h, blk["w2"], blk["b2"], dil, pad), 0.0)
        res = x if "wd" not in blk else _ref_conv1d(x, blk["wd"], blk["bd"], 1, 0)
        x = jnp.maximum(h + res, 0.0)
    return _ref_conv1d(x, reg["w"], reg["b"], 1, 0)


# ---------------------------------------------------------------------------
if __name__ == "__main__":
    key = jax.random.PRNGKey(0)
    pkey, xkey = jax.random.split(key)
    params, reg = init_params(pkey)

    N, L = 2, 64
    x = jax.random.normal(xkey, (N, NUM_INPUTS, L), jnp.float32)

    W, meta = pack_params(params, reg, L)         # one-time weight repack
    out = jax.block_until_ready(tcn_iv_1d_forward(x, W, meta))
    assert out.shape == (N, 1, L), out.shape

    ref = jax.block_until_ready(ref_forward(x, params, reg))
    np.testing.assert_allclose(np.asarray(out), np.asarray(ref),
                               rtol=1e-3, atol=1e-4)
    print("KERNEL_OK")
</pallas_src>

<mosaic_0001>
module attributes {stable_mosaic.version = 11 : i64} {
  func.func @kernel(%arg0: i32, %arg1: memref<1x1x128xf32, #tpu.memory_space<vmem>>, %arg2: memref<8x2304xf32, #tpu.memory_space<vmem>>, %arg3: memref<1x1x128xf32, #tpu.memory_space<vmem>>, %arg4: memref<120x128xf32, #tpu.memory_space<vmem>>) attributes {dimension_semantics = [#tpu.dimension_semantics<parallel>], iteration_bounds = array<i64: 1>, scalar_prefetch = 0 : i64, scratch_operands = 1 : i64, tpu.core_type = #tpu.core_type<tc>, window_params = [{transform_indices = @transform_0, window_bounds = array<i64: 1, 1, 128>}, {pipeline_mode = #tpu.pipeline_mode<synchronous>, transform_indices = @transform_1, window_bounds = array<i64: 8, 2304>}, {transform_indices = @transform_2, window_bounds = array<i64: 1, 1, 128>}]} {
    %c0 = arith.constant 0 : index
    %c0_0 = arith.constant 0 : index
    %c0_1 = arith.constant 0 : index
    %0 = vector.load %arg1[%c0, %c0_0, %c0_1] : memref<1x1x128xf32, #tpu.memory_space<vmem>>, vector<1x1x128xf32>
    %1 = vector.shape_cast %0 : vector<1x1x128xf32> to vector<1x128xf32>
    %cst = arith.constant 0.000000e+00 : f32
    %2 = vector.broadcast %cst : f32 to vector<120x128xf32>
    %c0_2 = arith.constant 0 : index
    %c0_3 = arith.constant 0 : index
    %3 = vector.load %arg4[%c0_2, %c0_3] : memref<120x128xf32, #tpu.memory_space<vmem>>, vector<120x128xf32>
    tpu.vector_store %arg4[%c0_2, %c0_3], %2 {strides = array<i32>} : memref<120x128xf32, #tpu.memory_space<vmem>>, vector<120x128xf32>,
    %cst_4 = arith.constant 1.000000e+00 : f32
    %4 = vector.broadcast %cst_4 : f32 to vector<1x128xf32>
    %c63 = arith.constant 63 : index
    %c0_5 = arith.constant 0 : index
    %5 = vector.load %arg4[%c63, %c0_5] : memref<120x128xf32, #tpu.memory_space<vmem>>, vector<1x128xf32>
    tpu.vector_store %arg4[%c63, %c0_5], %4 {strides = array<i32>} : memref<120x128xf32, #tpu.memory_space<vmem>>, vector<1x128xf32>,
    %6 = vector.extract_strided_slice %1 {offsets = [0, 0], sizes = [1, 57], strides = [1, 1]} : vector<1x128xf32> to vector<1x57xf32>
    %c0_6 = arith.constant 0 : index
    %c7 = arith.constant 7 : index
    %7 = vector.load %arg4[%c0_6, %c7] : memref<120x128xf32, #tpu.memory_space<vmem>>, vector<1x57xf32>
    tpu.vector_store %arg4[%c0_6, %c7], %6 {strides = array<i32>} : memref<120x128xf32, #tpu.memory_space<vmem>>, vector<1x57xf32>,
    %8 = vector.extract_strided_slice %1 {offsets = [0, 64], sizes = [1, 57], strides = [1, 1]} : vector<1x128xf32> to vector<1x57xf32>
    %c0_7 = arith.constant 0 : index
    %c71 = arith.constant 71 : index
    %9 = vector.load %arg4[%c0_7, %c71] : memref<120x128xf32, #tpu.memory_space<vmem>>, vector<1x57xf32>
    tpu.vector_store %arg4[%c0_7, %c71], %8 {strides = array<i32>} : memref<120x128xf32, #tpu.memory_space<vmem>>, vector<1x57xf32>,
    %10 = vector.extract_strided_slice %1 {offsets = [0, 0], sizes = [1, 58], strides = [1, 1]} : vector<1x128xf32> to vector<1x58xf32>
    %c8 = arith.constant 8 : index
    %c6 = arith.constant 6 : index
    %11 = vector.load %arg4[%c8, %c6] : memref<120x128xf32, #tpu.memory_space<vmem>>, vector<1x58xf32>
    tpu.vector_store %arg4[%c8, %c6], %10 {strides = array<i32>} : memref<120x128xf32, #tpu.memory_space<vmem>>, vector<1x58xf32>,
    %12 = vector.extract_strided_slice %1 {offsets = [0, 64], sizes = [1, 58], strides = [1, 1]} : vector<1x128xf32> to vector<1x58xf32>
    %c8_8 = arith.constant 8 : index
    %c70 = arith.constant 70 : index
    %13 = vector.load %arg4[%c8_8, %c70] : memref<120x128xf32, #tpu.memory_space<vmem>>, vector<1x58xf32>
    tpu.vector_store %arg4[%c8_8, %c70], %12 {strides = array<i32>} : memref<120x128xf32, #tpu.memory_space<vmem>>, vector<1x58xf32>,
    %14 = vector.extract_strided_slice %1 {offsets = [0, 0], sizes = [1, 59], strides = [1, 1]} : vector<1x128xf32> to vector<1x59xf32>
    %c16 = arith.constant 16 : index
    %c5 = arith.constant 5 : index
    %15 = vector.load %arg4[%c16, %c5] : memref<120x128xf32, #tpu.memory_space<vmem>>, vector<1x59xf32>
    tpu.vector_store %arg4[%c16, %c5], %14 {strides = array<i32>} : memref<120x128xf32, #tpu.memory_space<vmem>>, vector<1x59xf32>,
    %16 = vector.extract_strided_slice %1 {offsets = [0, 64], sizes = [1, 59], strides = [1, 1]} : vector<1x128xf32> to vector<1x59xf32>
    %c16_9 = arith.constant 16 : index
    %c69 = arith.constant 69 : index
    %17 = vector.load %arg4[%c16_9, %c69] : memref<120x128xf32, #tpu.memory_space<vmem>>, vector<1x59xf32>
    tpu.vector_store %arg4[%c16_9, %c69], %16 {strides = array<i32>} : memref<120x128xf32, #tpu.memory_space<vmem>>, vector<1x59xf32>,
    %18 = vector.extract_strided_slice %1 {offsets = [0, 0], sizes = [1, 60], strides = [1, 1]} : vector<1x128xf32> to vector<1x60xf32>
    %c24 = arith.constant 24 : index
    %c4 = arith.constant 4 : index
    %19 = vector.load %arg4[%c24, %c4] : memref<120x128xf32, #tpu.memory_space<vmem>>, vector<1x60xf32>
    tpu.vector_store %arg4[%c24, %c4], %18 {strides = array<i32>} : memref<120x128xf32, #tpu.memory_space<vmem>>, vector<1x60xf32>,
    %20 = vector.extract_strided_slice %1 {offsets = [0, 64], sizes = [1, 60], strides = [1, 1]} : vector<1x128xf32> to vector<1x60xf32>
    %c24_10 = arith.constant 24 : index
    %c68 = arith.constant 68 : index
    %21 = vector.load %arg4[%c24_10, %c68] : memref<120x128xf32, #tpu.memory_space<vmem>>, vector<1x60xf32>
    tpu.vector_store %arg4[%c24_10, %c68], %20 {strides = array<i32>} : memref<120x128xf32, #tpu.memory_space<vmem>>, vector<1x60xf32>,
    %22 = vector.extract_strided_slice %1 {offsets = [0, 0], sizes = [1, 61], strides = [1, 1]} : vector<1x128xf32> to vector<1x61xf32>
    %c32 = arith.constant 32 : index
    %c3 = arith.constant 3 : index
    %23 = vector.load %arg4[%c32, %c3] : memref<120x128xf32, #tpu.memory_space<vmem>>, vector<1x61xf32>
    tpu.vector_store %arg4[%c32, %c3], %22 {strides = array<i32>} : memref<120x128xf32, #tpu.memory_space<vmem>>, vector<1x61xf32>,
    %24 = vector.extract_strided_slice %1 {offsets = [0, 64], sizes = [1, 61], strides = [1, 1]} : vector<1x128xf32> to vector<1x61xf32>
    %c32_11 = arith.constant 32 : index
    %c67 = arith.constant 67 : index
    %25 = vector.load %arg4[%c32_11, %c67] : memref<120x128xf32, #tpu.memory_space<vmem>>, vector<1x61xf32>
    tpu.vector_store %arg4[%c32_11, %c67], %24 {strides = array<i32>} : memref<120x128xf32, #tpu.memory_space<vmem>>, vector<1x61xf32>,
    %26 = vector.extract_strided_slice %1 {offsets = [0, 0], sizes = [1, 62], strides = [1, 1]} : vector<1x128xf32> to vector<1x62xf32>
    %c40 = arith.constant 40 : index
    %c2 = arith.constant 2 : index
    %27 = vector.load %arg4[%c40, %c2] : memref<120x128xf32, #tpu.memory_space<vmem>>, vector<1x62xf32>
    tpu.vector_store %arg4[%c40, %c2], %26 {strides = array<i32>} : memref<120x128xf32, #tpu.memory_space<vmem>>, vector<1x62xf32>,
    %28 = vector.extract_strided_slice %1 {offsets = [0, 64], sizes = [1, 62], strides = [1, 1]} : vector<1x128xf32> to vector<1x62xf32>
    %c40_12 = arith.constant 40 : index
    %c66 = arith.constant 66 : index
    %29 = vector.load %arg4[%c40_12, %c66] : memref<120x128xf32, #tpu.memory_space<vmem>>, vector<1x62xf32>
    tpu.vector_store %arg4[%c40_12, %c66], %28 {strides = array<i32>} : memref<120x128xf32, #tpu.memory_space<vmem>>, vector<1x62xf32>,
    %30 = vector.extract_strided_slice %1 {offsets = [0, 0], sizes = [1, 63], strides = [1, 1]} : vector<1x128xf32> to vector<1x63xf32>
    %c48 = arith.constant 48 : index
    %c1 = arith.constant 1 : index
    %31 = vector.load %arg4[%c48, %c1] : memref<120x128xf32, #tpu.memory_space<vmem>>, vector<1x63xf32>
    tpu.vector_store %arg4[%c48, %c1], %30 {strides = array<i32>} : memref<120x128xf32, #tpu.memory_space<vmem>>, vector<1x63xf32>,
    %32 = vector.extract_strided_slice %1 {offsets = [0, 64], sizes = [1, 63], strides = [1, 1]} : vector<1x128xf32> to vector<1x63xf32>
    %c48_13 = arith.constant 48 : index
    %c65 = arith.constant 65 : index
    %33 = vector.load %arg4[%c48_13, %c65] : memref<120x128xf32, #tpu.memory_space<vmem>>, vector<1x63xf32>
    tpu.vector_store %arg4[%c48_13, %c65], %32 {strides = array<i32>} : memref<120x128xf32, #tpu.memory_space<vmem>>, vector<1x63xf32>,
    %c56 = arith.constant 56 : index
    %c0_14 = arith.constant 0 : index
    %34 = vector.load %arg4[%c56, %c0_14] : memref<120x128xf32, #tpu.memory_space<vmem>>, vector<1x128xf32>
    tpu.vector_store %arg4[%c56, %c0_14], %1 {strides = array<i32>} : memref<120x128xf32, #tpu.memory_space<vmem>>, vector<1x128xf32>,
    %35 = vector.extract_strided_slice %1 {offsets = [0, 1], sizes = [1, 63], strides = [1, 1]} : vector<1x128xf32> to vector<1x63xf32>
    %c64 = arith.constant 64 : index
    %c0_15 = arith.constant 0 : index
    %36 = vector.load %arg4[%c64, %c0_15] : memref<120x128xf32, #tpu.memory_space<vmem>>, vector<1x63xf32>
    tpu.vector_store %arg4[%c64, %c0_15], %35 {strides = array<i32>} : memref<120x128xf32, #tpu.memory_space<vmem>>, vector<1x63xf32>,
    %37 = vector.extract_strided_slice %1 {offsets = [0, 65], sizes = [1, 63], strides = [1, 1]} : vector<1x128xf32> to vector<1x63xf32>
    %c64_16 = arith.constant 64 : index
    %c64_17 = arith.constant 64 : index
    %38 = vector.load %arg4[%c64_16, %c64_17] : memref<120x128xf32, #tpu.memory_space<vmem>>, vector<1x63xf32>
    tpu.vector_store %arg4[%c64_16, %c64_17], %37 {strides = array<i32>} : memref<120x128xf32, #tpu.memory_space<vmem>>, vector<1x63xf32>,
    %39 = vector.extract_strided_slice %1 {offsets = [0, 2], sizes = [1, 62], strides = [1, 1]} : vector<1x128xf32> to vector<1x62xf32>
    %c72 = arith.constant 72 : index
    %c0_18 = arith.constant 0 : index
    %40 = vector.load %arg4[%c72, %c0_18] : memref<120x128xf32, #tpu.memory_space<vmem>>, vector<1x62xf32>
    tpu.vector_store %arg4[%c72, %c0_18], %39 {strides = array<i32>} : memref<120x128xf32, #tpu.memory_space<vmem>>, vector<1x62xf32>,
    %41 = vector.extract_strided_slice %1 {offsets = [0, 66], sizes = [1, 62], strides = [1, 1]} : vector<1x128xf32> to vector<1x62xf32>
    %c72_19 = arith.constant 72 : index
    %c64_20 = arith.constant 64 : index
    %42 = vector.load %arg4[%c72_19, %c64_20] : memref<120x128xf32, #tpu.memory_space<vmem>>, vector<1x62xf32>
    tpu.vector_store %arg4[%c72_19, %c64_20], %41 {strides = array<i32>} : memref<120x128xf32, #tpu.memory_space<vmem>>, vector<1x62xf32>,
    %43 = vector.extract_strided_slice %1 {offsets = [0, 3], sizes = [1, 61], strides = [1, 1]} : vector<1x128xf32> to vector<1x61xf32>
    %c80 = arith.constant 80 : index
    %c0_21 = arith.constant 0 : index
    %44 = vector.load %arg4[%c80, %c0_21] : memref<120x128xf32, #tpu.memory_space<vmem>>, vector<1x61xf32>
    tpu.vector_store %arg4[%c80, %c0_21], %43 {strides = array<i32>} : memref<120x128xf32, #tpu.memory_space<vmem>>, vector<1x61xf32>,
    %45 = vector.extract_strided_slice %1 {offsets = [0, 67], sizes = [1, 61], strides = [1, 1]} : vector<1x128xf32> to vector<1x61xf32>
    %c80_22 = arith.constant 80 : index
    %c64_23 = arith.constant 64 : index
    %46 = vector.load %arg4[%c80_22, %c64_23] : memref<120x128xf32, #tpu.memory_space<vmem>>, vector<1x61xf32>
    tpu.vector_store %arg4[%c80_22, %c64_23], %45 {strides = array<i32>} : memref<120x128xf32, #tpu.memory_space<vmem>>, vector<1x61xf32>,
    %47 = vector.extract_strided_slice %1 {offsets = [0, 4], sizes = [1, 60], strides = [1, 1]} : vector<1x128xf32> to vector<1x60xf32>
    %c88 = arith.constant 88 : index
    %c0_24 = arith.constant 0 : index
    %48 = vector.load %arg4[%c88, %c0_24] : memref<120x128xf32, #tpu.memory_space<vmem>>, vector<1x60xf32>
    tpu.vector_store %arg4[%c88, %c0_24], %47 {strides = array<i32>} : memref<120x128xf32, #tpu.memory_space<vmem>>, vector<1x60xf32>,
    %49 = vector.extract_strided_slice %1 {offsets = [0, 68], sizes = [1, 60], strides = [1, 1]} : vector<1x128xf32> to vector<1x60xf32>
    %c88_25 = arith.constant 88 : index
    %c64_26 = arith.constant 64 : index
    %50 = vector.load %arg4[%c88_25, %c64_26] : memref<120x128xf32, #tpu.memory_space<vmem>>, vector<1x60xf32>
    tpu.vector_store %arg4[%c88_25, %c64_26], %49 {strides = array<i32>} : memref<120x128xf32, #tpu.memory_space<vmem>>, vector<1x60xf32>,
    %51 = vector.extract_strided_slice %1 {offsets = [0, 5], sizes = [1, 59], strides = [1, 1]} : vector<1x128xf32> to vector<1x59xf32>
    %c96 = arith.constant 96 : index
    %c0_27 = arith.constant 0 : index
    %52 = vector.load %arg4[%c96, %c0_27] : memref<120x128xf32, #tpu.memory_space<vmem>>, vector<1x59xf32>
    tpu.vector_store %arg4[%c96, %c0_27], %51 {strides = array<i32>} : memref<120x128xf32, #tpu.memory_space<vmem>>, vector<1x59xf32>,
    %53 = vector.extract_strided_slice %1 {offsets = [0, 69], sizes = [1, 59], strides = [1, 1]} : vector<1x128xf32> to vector<1x59xf32>
    %c96_28 = arith.constant 96 : index
    %c64_29 = arith.constant 64 : index
    %54 = vector.load %arg4[%c96_28, %c64_29] : memref<120x128xf32, #tpu.memory_space<vmem>>, vector<1x59xf32>
    tpu.vector_store %arg4[%c96_28, %c64_29], %53 {strides = array<i32>} : memref<120x128xf32, #tpu.memory_space<vmem>>, vector<1x59xf32>,
    %55 = vector.extract_strided_slice %1 {offsets = [0, 6], sizes = [1, 58], strides = [1, 1]} : vector<1x128xf32> to vector<1x58xf32>
    %c104 = arith.constant 104 : index
    %c0_30 = arith.constant 0 : index
    %56 = vector.load %arg4[%c104, %c0_30] : memref<120x128xf32, #tpu.memory_space<vmem>>, vector<1x58xf32>
    tpu.vector_store %arg4[%c104, %c0_30], %55 {strides = array<i32>} : memref<120x128xf32, #tpu.memory_space<vmem>>, vector<1x58xf32>,
    %57 = vector.extract_strided_slice %1 {offsets = [0, 70], sizes = [1, 58], strides = [1, 1]} : vector<1x128xf32> to vector<1x58xf32>
    %c104_31 = arith.constant 104 : index
    %c64_32 = arith.constant 64 : index
    %58 = vector.load %arg4[%c104_31, %c64_32] : memref<120x128xf32, #tpu.memory_space<vmem>>, vector<1x58xf32>
    tpu.vector_store %arg4[%c104_31, %c64_32], %57 {strides = array<i32>} : memref<120x128xf32, #tpu.memory_space<vmem>>, vector<1x58xf32>,
    %59 = vector.extract_strided_slice %1 {offsets = [0, 7], sizes = [1, 57], strides = [1, 1]} : vector<1x128xf32> to vector<1x57xf32>
    %c112 = arith.constant 112 : index
    %c0_33 = arith.constant 0 : index
    %60 = vector.load %arg4[%c112, %c0_33] : memref<120x128xf32, #tpu.memory_space<vmem>>, vector<1x57xf32>
    tpu.vector_store %arg4[%c112, %c0_33], %59 {strides = array<i32>} : memref<120x128xf32, #tpu.memory_space<vmem>>, vector<1x57xf32>,
    %61 = vector.extract_strided_slice %1 {offsets = [0, 71], sizes = [1, 57], strides = [1, 1]} : vector<1x128xf32> to vector<1x57xf32>
    %c112_34 = arith.constant 112 : index
    %c64_35 = arith.constant 64 : index
    %62 = vector.load %arg4[%c112_34, %c64_35] : memref<120x128xf32, #tpu.memory_space<vmem>>, vector<1x57xf32>
    tpu.vector_store %arg4[%c112_34, %c64_35], %61 {strides = array<i32>} : memref<120x128xf32, #tpu.memory_space<vmem>>, vector<1x57xf32>,
    %c0_36 = arith.constant 0 : index
    %c0_37 = arith.constant 0 : index
    %63 = vector.load %arg2[%c0_36, %c0_37] : memref<8x2304xf32, #tpu.memory_space<vmem>>, vector<3x120xf32>
    %c0_38 = arith.constant 0 : index
    %c0_39 = arith.constant 0 : index
    %64 = vector.load %arg4[%c0_38, %c0_39] : memref<120x128xf32, #tpu.memory_space<vmem>>, vector<120x128xf32>
    %cst_40 = arith.constant dense<0.000000e+00> : vector<3x128xf32>
    %65 = tpu.matmul %63, %64, %cst_40 {dimension_numbers = #tpu.dot_dimension_numbers<[1], [0], [0], [1], [0, 0, 1, 1], [], []>} : vector<3x120xf32>, vector<120x128xf32>, vector<3x128xf32> -> vector<3x128xf32>
    %cst_41 = arith.constant 0.000000e+00 : f32
    %66 = vector.broadcast %cst_41 : f32 to vector<3x128xf32>
    %67 = arith.maximumf %65, %66 : vector<3x128xf32>
    %68 = vector.extract_strided_slice %67 {offsets = [0, 0], sizes = [3, 57], strides = [1, 1]} : vector<3x128xf32> to vector<3x57xf32>
    %c0_42 = arith.constant 0 : index
    %c7_43 = arith.constant 7 : index
    %69 = vector.load %arg4[%c0_42, %c7_43] : memref<120x128xf32, #tpu.memory_space<vmem>>, vector<3x57xf32>
    tpu.vector_store %arg4[%c0_42, %c7_43], %68 {strides = array<i32>} : memref<120x128xf32, #tpu.memory_space<vmem>>, vector<3x57xf32>,
    %70 = vector.extract_strided_slice %67 {offsets = [0, 64], sizes = [3, 57], strides = [1, 1]} : vector<3x128xf32> to vector<3x57xf32>
    %c0_44 = arith.constant 0 : index
    %c71_45 = arith.constant 71 : index
    %71 = vector.load %arg4[%c0_44, %c71_45] : memref<120x128xf32, #tpu.memory_space<vmem>>, vector<3x57xf32>
    tpu.vector_store %arg4[%c0_44, %c71_45], %70 {strides = array<i32>} : memref<120x128xf32, #tpu.memory_space<vmem>>, vector<3x57xf32>,
    %72 = vector.extract_strided_slice %67 {offsets = [0, 0], sizes = [3, 58], strides = [1, 1]} : vector<3x128xf32> to vector<3x58xf32>
    %c8_46 = arith.constant 8 : index
    %c6_47 = arith.constant 6 : index
    %73 = vector.load %arg4[%c8_46, %c6_47] : memref<120x128xf32, #tpu.memory_space<vmem>>, vector<3x58xf32>
    tpu.vector_store %arg4[%c8_46, %c6_47], %72 {strides = array<i32>} : memref<120x128xf32, #tpu.memory_space<vmem>>, vector<3x58xf32>,
    %74 = vector.extract_strided_slice %67 {offsets = [0, 64], sizes = [3, 58], strides = [1, 1]} : vector<3x128xf32> to vector<3x58xf32>
    %c8_48 = arith.constant 8 : index
    %c70_49 = arith.constant 70 : index
    %75 = vector.load %arg4[%c8_48, %c70_49] : memref<120x128xf32, #tpu.memory_space<vmem>>, vector<3x58xf32>
    tpu.vector_store %arg4[%c8_48, %c70_49], %74 {strides = array<i32>} : memref<120x128xf32, #tpu.memory_space<vmem>>, vector<3x58xf32>,
    %76 = vector.extract_strided_slice %67 {offsets = [0, 0], sizes = [3, 59], strides = [1, 1]} : vector<3x128xf32> to vector<3x59xf32>
    %c16_50 = arith.constant 16 : index
    %c5_51 = arith.constant 5 : index
    %77 = vector.load %arg4[%c16_50, %c5_51] : memref<120x128xf32, #tpu.memory_space<vmem>>, vector<3x59xf32>
    tpu.vector_store %arg4[%c16_50, %c5_51], %76 {strides = array<i32>} : memref<120x128xf32, #tpu.memory_space<vmem>>, vector<3x59xf32>,
    %78 = vector.extract_strided_slice %67 {offsets = [0, 64], sizes = [3, 59], strides = [1, 1]} : vector<3x128xf32> to vector<3x59xf32>
    %c16_52 = arith.constant 16 : index
    %c69_53 = arith.constant 69 : index
    %79 = vector.load %arg4[%c16_52, %c69_53] : memref<120x128xf32, #tpu.memory_space<vmem>>, vector<3x59xf32>
    tpu.vector_store %arg4[%c16_52, %c69_53], %78 {strides = array<i32>} : memref<120x128xf32, #tpu.memory_space<vmem>>, vector<3x59xf32>,
    %80 = vector.extract_strided_slice %67 {offsets = [0, 0], sizes = [3, 60], strides = [1, 1]} : vector<3x128xf32> to vector<3x60xf32>
    %c24_54 = arith.constant 24 : index
    %c4_55 = arith.constant 4 : index
    %81 = vector.load %arg4[%c24_54, %c4_55] : memref<120x128xf32, #tpu.memory_space<vmem>>, vector<3x60xf32>
    tpu.vector_store %arg4[%c24_54, %c4_55], %80 {strides = array<i32>} : memref<120x128xf32, #tpu.memory_space<vmem>>, vector<3x60xf32>,
    %82 = vector.extract_strided_slice %67 {offsets = [0, 64], sizes = [3, 60], strides = [1, 1]} : vector<3x128xf32> to vector<3x60xf32>
    %c24_56 = arith.constant 24 : index
    %c68_57 = arith.constant 68 : index
    %83 = vector.load %arg4[%c24_56, %c68_57] : memref<120x128xf32, #tpu.memory_space<vmem>>, vector<3x60xf32>
    tpu.vector_store %arg4[%c24_56, %c68_57], %82 {strides = array<i32>} : memref<120x128xf32, #tpu.memory_space<vmem>>, vector<3x60xf32>,
    %84 = vector.extract_strided_slice %67 {offsets = [0, 0], sizes = [3, 61], strides = [1, 1]} : vector<3x128xf32> to vector<3x61xf32>
    %c32_58 = arith.constant 32 : index
    %c3_59 = arith.constant 3 : index
    %85 = vector.load %arg4[%c32_58, %c3_59] : memref<120x128xf32, #tpu.memory_space<vmem>>, vector<3x61xf32>
    tpu.vector_store %arg4[%c32_58, %c3_59], %84 {strides = array<i32>} : memref<120x128xf32, #tpu.memory_space<vmem>>, vector<3x61xf32>,
    %86 = vector.extract_strided_slice %67 {offsets = [0, 64], sizes = [3, 61], strides = [1, 1]} : vector<3x128xf32> to vector<3x61xf32>
    %c32_60 = arith.constant 32 : index
    %c67_61 = arith.constant 67 : index
    %87 = vector.load %arg4[%c32_60, %c67_61] : memref<120x128xf32, #tpu.memory_space<vmem>>, vector<3x61xf32>
    tpu.vector_store %arg4[%c32_60, %c67_61], %86 {strides = array<i32>} : memref<120x128xf32, #tpu.memory_space<vmem>>, vector<3x61xf32>,
    %88 = vector.extract_strided_slice %67 {offsets = [0, 0], sizes = [3, 62], strides = [1, 1]} : vector<3x128xf32> to vector<3x62xf32>
    %c40_62 = arith.constant 40 : index
    %c2_63 = arith.constant 2 : index
    %89 = vector.load %arg4[%c40_62, %c2_63] : memref<120x128xf32, #tpu.memory_space<vmem>>, vector<3x62xf32>
    tpu.vector_store %arg4[%c40_62, %c2_63], %88 {strides = array<i32>} : memref<120x128xf32, #tpu.memory_space<vmem>>, vector<3x62xf32>,
    %90 = vector.extract_strided_slice %67 {offsets = [0, 64], sizes = [3, 62], strides = [1, 1]} : vector<3x128xf32> to vector<3x62xf32>
    %c40_64 = arith.constant 40 : index
    %c66_65 = arith.constant 66 : index
    %91 = vector.load %arg4[%c40_64, %c66_65] : memref<120x128xf32, #tpu.memory_space<vmem>>, vector<3x62xf32>
    tpu.vector_store %arg4[%c40_64, %c66_65], %90 {strides = array<i32>} : memref<120x128xf32, #tpu.memory_space<vmem>>, vector<3x62xf32>,
    %92 = vector.extract_strided_slice %67 {offsets = [0, 0], sizes = [3, 63], strides = [1, 1]} : vector<3x128xf32> to vector<3x63xf32>
    %c48_66 = arith.constant 48 : index
    %c1_67 = arith.constant 1 : index
    %93 = vector.load %arg4[%c48_66, %c1_67] : memref<120x128xf32, #tpu.memory_space<vmem>>, vector<3x63xf32>
    tpu.vector_store %arg4[%c48_66, %c1_67], %92 {strides = array<i32>} : memref<120x128xf32, #tpu.memory_space<vmem>>, vector<3x63xf32>,
    %94 = vector.extract_strided_slice %67 {offsets = [0, 64], sizes = [3, 63], strides = [1, 1]} : vector<3x128xf32> to vector<3x63xf32>
    %c48_68 = arith.constant 48 : index
    %c65_69 = arith.constant 65 : index
    %95 = vector.load %arg4[%c48_68, %c65_69] : memref<120x128xf32, #tpu.memory_space<vmem>>, vector<3x63xf32>
    tpu.vector_store %arg4[%c48_68, %c65_69], %94 {strides = array<i32>} : memref<120x128xf32, #tpu.memory_space<vmem>>, vector<3x63xf32>,
    %c56_70 = arith.constant 56 : index
    %c0_71 = arith.constant 0 : index
    %96 = vector.load %arg4[%c56_70, %c0_71] : memref<120x128xf32, #tpu.memory_space<vmem>>, vector<3x128xf32>
    tpu.vector_store %arg4[%c56_70, %c0_71], %67 {strides = array<i32>} : memref<120x128xf32, #tpu.memory_space<vmem>>, vector<3x128xf32>,
    %97 = vector.extract_strided_slice %67 {offsets = [0, 1], sizes = [3, 63], strides = [1, 1]} : vector<3x128xf32> to vector<3x63xf32>
    %c64_72 = arith.constant 64 : index
    %c0_73 = arith.constant 0 : index
    %98 = vector.load %arg4[%c64_72, %c0_73] : memref<120x128xf32, #tpu.memory_space<vmem>>, vector<3x63xf32>
    tpu.vector_store %arg4[%c64_72, %c0_73], %97 {strides = array<i32>} : memref<120x128xf32, #tpu.memory_space<vmem>>, vector<3x63xf32>,
    %99 = vector.extract_strided_slice %67 {offsets = [0, 65], sizes = [3, 63], strides = [1, 1]} : vector<3x128xf32> to vector<3x63xf32>
    %c64_74 = arith.constant 64 : index
    %c64_75 = arith.constant 64 : index
    %100 = vector.load %arg4[%c64_74, %c64_75] : memref<120x128xf32, #tpu.memory_space<vmem>>, vector<3x63xf32>
    tpu.vector_store %arg4[%c64_74, %c64_75], %99 {strides = array<i32>} : memref<120x128xf32, #tpu.memory_space<vmem>>, vector<3x63xf32>,
    %101 = vector.extract_strided_slice %67 {offsets = [0, 2], sizes = [3, 62], strides = [1, 1]} : vector<3x128xf32> to vector<3x62xf32>
    %c72_76 = arith.constant 72 : index
    %c0_77 = arith.constant 0 : index
    %102 = vector.load %arg4[%c72_76, %c0_77] : memref<120x128xf32, #tpu.memory_space<vmem>>, vector<3x62xf32>
    tpu.vector_store %arg4[%c72_76, %c0_77], %101 {strides = array<i32>} : memref<120x128xf32, #tpu.memory_space<vmem>>, vector<3x62xf32>,
    %103 = vector.extract_strided_slice %67 {offsets = [0, 66], sizes = [3, 62], strides = [1, 1]} : vector<3x128xf32> to vector<3x62xf32>
    %c72_78 = arith.constant 72 : index
    %c64_79 = arith.constant 64 : index
    %104 = vector.load %arg4[%c72_78, %c64_79] : memref<120x128xf32, #tpu.memory_space<vmem>>, vector<3x62xf32>
    tpu.vector_store %arg4[%c72_78, %c64_79], %103 {strides = array<i32>} : memref<120x128xf32, #tpu.memory_space<vmem>>, vector<3x62xf32>,
    %105 = vector.extract_strided_slice %67 {offsets = [0, 3], sizes = [3, 61], strides = [1, 1]} : vector<3x128xf32> to vector<3x61xf32>
    %c80_80 = arith.constant 80 : index
    %c0_81 = arith.constant 0 : index
    %106 = vector.load %arg4[%c80_80, %c0_81] : memref<120x128xf32, #tpu.memory_space<vmem>>, vector<3x61xf32>
    tpu.vector_store %arg4[%c80_80, %c0_81], %105 {strides = array<i32>} : memref<120x128xf32, #tpu.memory_space<vmem>>, vector<3x61xf32>,
    %107 = vector.extract_strided_slice %67 {offsets = [0, 67], sizes = [3, 61], strides = [1, 1]} : vector<3x128xf32> to vector<3x61xf32>
    %c80_82 = arith.constant 80 : index
    %c64_83 = arith.constant 64 : index
    %108 = vector.load %arg4[%c80_82, %c64_83] : memref<120x128xf32, #tpu.memory_space<vmem>>, vector<3x61xf32>
    tpu.vector_store %arg4[%c80_82, %c64_83], %107 {strides = array<i32>} : memref<120x128xf32, #tpu.memory_space<vmem>>, vector<3x61xf32>,
    %109 = vector.extract_strided_slice %67 {offsets = [0, 4], sizes = [3, 60], strides = [1, 1]} : vector<3x128xf32> to vector<3x60xf32>
    %c88_84 = arith.constant 88 : index
    %c0_85 = arith.constant 0 : index
    %110 = vector.load %arg4[%c88_84, %c0_85] : memref<120x128xf32, #tpu.memory_space<vmem>>, vector<3x60xf32>
    tpu.vector_store %arg4[%c88_84, %c0_85], %109 {strides = array<i32>} : memref<120x128xf32, #tpu.memory_space<vmem>>, vector<3x60xf32>,
    %111 = vector.extract_strided_slice %67 {offsets = [0, 68], sizes = [3, 60], strides = [1, 1]} : vector<3x128xf32> to vector<3x60xf32>
    %c88_86 = arith.constant 88 : index
    %c64_87 = arith.constant 64 : index
    %112 = vector.load %arg4[%c88_86, %c64_87] : memref<120x128xf32, #tpu.memory_space<vmem>>, vector<3x60xf32>
    tpu.vector_store %arg4[%c88_86, %c64_87], %111 {strides = array<i32>} : memref<120x128xf32, #tpu.memory_space<vmem>>, vector<3x60xf32>,
    %113 = vector.extract_strided_slice %67 {offsets = [0, 5], sizes = [3, 59], strides = [1, 1]} : vector<3x128xf32> to vector<3x59xf32>
    %c96_88 = arith.constant 96 : index
    %c0_89 = arith.constant 0 : index
    %114 = vector.load %arg4[%c96_88, %c0_89] : memref<120x128xf32, #tpu.memory_space<vmem>>, vector<3x59xf32>
    tpu.vector_store %arg4[%c96_88, %c0_89], %113 {strides = array<i32>} : memref<120x128xf32, #tpu.memory_space<vmem>>, vector<3x59xf32>,
    %115 = vector.extract_strided_slice %67 {offsets = [0, 69], sizes = [3, 59], strides = [1, 1]} : vector<3x128xf32> to vector<3x59xf32>
    %c96_90 = arith.constant 96 : index
    %c64_91 = arith.constant 64 : index
    %116 = vector.load %arg4[%c96_90, %c64_91] : memref<120x128xf32, #tpu.memory_space<vmem>>, vector<3x59xf32>
    tpu.vector_store %arg4[%c96_90, %c64_91], %115 {strides = array<i32>} : memref<120x128xf32, #tpu.memory_space<vmem>>, vector<3x59xf32>,
    %117 = vector.extract_strided_slice %67 {offsets = [0, 6], sizes = [3, 58], strides = [1, 1]} : vector<3x128xf32> to vector<3x58xf32>
    %c104_92 = arith.constant 104 : index
    %c0_93 = arith.constant 0 : index
    %118 = vector.load %arg4[%c104_92, %c0_93] : memref<120x128xf32, #tpu.memory_space<vmem>>, vector<3x58xf32>
    tpu.vector_store %arg4[%c104_92, %c0_93], %117 {strides = array<i32>} : memref<120x128xf32, #tpu.memory_space<vmem>>, vector<3x58xf32>,
    %119 = vector.extract_strided_slice %67 {offsets = [0, 70], sizes = [3, 58], strides = [1, 1]} : vector<3x128xf32> to vector<3x58xf32>
    %c104_94 = arith.constant 104 : index
    %c64_95 = arith.constant 64 : index
    %120 = vector.load %arg4[%c104_94, %c64_95] : memref<120x128xf32, #tpu.memory_space<vmem>>, vector<3x58xf32>
    tpu.vector_store %arg4[%c104_94, %c64_95], %119 {strides = array<i32>} : memref<120x128xf32, #tpu.memory_space<vmem>>, vector<3x58xf32>,
    %121 = vector.extract_strided_slice %67 {offsets = [0, 7], sizes = [3, 57], strides = [1, 1]} : vector<3x128xf32> to vector<3x57xf32>
    %c112_96 = arith.constant 112 : index
    %c0_97 = arith.constant 0 : index
    %122 = vector.load %arg4[%c112_96, %c0_97] : memref<120x128xf32, #tpu.memory_space<vmem>>, vector<3x57xf32>
    tpu.vector_store %arg4[%c112_96, %c0_97], %121 {strides = array<i32>} : memref<120x128xf32, #tpu.memory_space<vmem>>, vector<3x57xf32>,
    %123 = vector.extract_strided_slice %67 {offsets = [0, 71], sizes = [3, 57], strides = [1, 1]} : vector<3x128xf32> to vector<3x57xf32>
    %c112_98 = arith.constant 112 : index
    %c64_99 = arith.constant 64 : index
    %124 = vector.load %arg4[%c112_98, %c64_99] : memref<120x128xf32, #tpu.memory_space<vmem>>, vector<3x57xf32>
    tpu.vector_store %arg4[%c112_98, %c64_99], %123 {strides = array<i32>} : memref<120x128xf32, #tpu.memory_space<vmem>>, vector<3x57xf32>,
    %c0_100 = arith.constant 0 : index
    %c128 = arith.constant 128 : index
    %125 = vector.load %arg2[%c0_100, %c128] : memref<8x2304xf32, #tpu.memory_space<vmem>>, vector<3x120xf32>
    %c0_101 = arith.constant 0 : index
    %c0_102 = arith.constant 0 : index
    %126 = vector.load %arg4[%c0_101, %c0_102] : memref<120x128xf32, #tpu.memory_space<vmem>>, vector<120x128xf32>
    %cst_103 = arith.constant dense<0.000000e+00> : vector<3x128xf32>
    %127 = tpu.matmul %125, %126, %cst_103 {dimension_numbers = #tpu.dot_dimension_numbers<[1], [0], [0], [1], [0, 0, 1, 1], [], []>} : vector<3x120xf32>, vector<120x128xf32>, vector<3x128xf32> -> vector<3x128xf32>
    %cst_104 = arith.constant 0.000000e+00 : f32
    %128 = vector.broadcast %cst_104 : f32 to vector<3x128xf32>
    %129 = arith.maximumf %127, %128 : vector<3x128xf32>
    %c0_105 = arith.constant 0 : index
    %c248 = arith.constant 248 : index
    %130 = vector.load %arg2[%c0_105, %c248] : memref<8x2304xf32, #tpu.memory_space<vmem>>, vector<3x1xf32>
    %c0_106 = arith.constant 0 : index
    %c255 = arith.constant 255 : index
    %131 = vector.load %arg2[%c0_106, %c255] : memref<8x2304xf32, #tpu.memory_space<vmem>>, vector<3x1xf32>
    %cst_107 = arith.constant dense<0.000000e+00> : vector<3x128xf32>
    %132 = tpu.matmul %130, %1, %cst_107 {dimension_numbers = #tpu.dot_dimension_numbers<[1], [0], [0], [1], [0, 0, 1, 1], [], []>} : vector<3x1xf32>, vector<1x128xf32>, vector<3x128xf32> -> vector<3x128xf32>
    %133 = vector.broadcast %131 : vector<3x1xf32> to vector<3x128xf32>
    %134 = arith.addf %132, %133 : vector<3x128xf32>
    %135 = arith.addf %129, %134 : vector<3x128xf32>
    %cst_108 = arith.constant 0.000000e+00 : f32
    %136 = vector.broadcast %cst_108 : f32 to vector<3x128xf32>
    %137 = arith.maximumf %135, %136 : vector<3x128xf32>
    %cst_109 = arith.constant 0.000000e+00 : f32
    %138 = vector.broadcast %cst_109 : f32 to vector<120x128xf32>
    %c0_110 = arith.constant 0 : index
    %c0_111 = arith.constant 0 : index
    %139 = vector.load %arg4[%c0_110, %c0_111] : memref<120x128xf32, #tpu.memory_space<vmem>>, vector<120x128xf32>
    tpu.vector_store %arg4[%c0_110, %c0_111], %138 {strides = array<i32>} : memref<120x128xf32, #tpu.memory_space<vmem>>, vector<120x128xf32>,
    %cst_112 = arith.constant 1.000000e+00 : f32
    %140 = vector.broadcast %cst_112 : f32 to vector<1x128xf32>
    %c63_113 = arith.constant 63 : index
    %c0_114 = arith.constant 0 : index
    %141 = vector.load %arg4[%c63_113, %c0_114] : memref<120x128xf32, #tpu.memory_space<vmem>>, vector<1x128xf32>
    tpu.vector_store %arg4[%c63_113, %c0_114], %140 {strides = array<i32>} : memref<120x128xf32, #tpu.memory_space<vmem>>, vector<1x128xf32>,
    %142 = vector.extract_strided_slice %137 {offsets = [0, 0], sizes = [3, 50], strides = [1, 1]} : vector<3x128xf32> to vector<3x50xf32>
    %c0_115 = arith.constant 0 : index
    %c14 = arith.constant 14 : index
    %143 = vector.load %arg4[%c0_115, %c14] : memref<120x128xf32, #tpu.memory_space<vmem>>, vector<3x50xf32>
    tpu.vector_store %arg4[%c0_115, %c14], %142 {strides = array<i32>} : memref<120x128xf32, #tpu.memory_space<vmem>>, vector<3x50xf32>,
    %144 = vector.extract_strided_slice %137 {offsets = [0, 64], sizes = [3, 50], strides = [1, 1]} : vector<3x128xf32> to vector<3x50xf32>
    %c0_116 = arith.constant 0 : index
    %c78 = arith.constant 78 : index
    %145 = vector.load %arg4[%c0_116, %c78] : memref<120x128xf32, #tpu.memory_space<vmem>>, vector<3x50xf32>
    tpu.vector_store %arg4[%c0_116, %c78], %144 {strides = array<i32>} : memref<120x128xf32, #tpu.memory_space<vmem>>, vector<3x50xf32>,
    %146 = vector.extract_strided_slice %137 {offsets = [0, 0], sizes = [3, 52], strides = [1, 1]} : vector<3x128xf32> to vector<3x52xf32>
    %c8_117 = arith.constant 8 : index
    %c12 = arith.constant 12 : index
    %147 = vector.load %arg4[%c8_117, %c12] : memref<120x128xf32, #tpu.memory_space<vmem>>, vector<3x52xf32>
    tpu.vector_store %arg4[%c8_117, %c12], %146 {strides = array<i32>} : memref<120x128xf32, #tpu.memory_space<vmem>>, vector<3x52xf32>,
    %148 = vector.extract_strided_slice %137 {offsets = [0, 64], sizes = [3, 52], strides = [1, 1]} : vector<3x128xf32> to vector<3x52xf32>
    %c8_118 = arith.constant 8 : index
    %c76 = arith.constant 76 : index
    %149 = vector.load %arg4[%c8_118, %c76] : memref<120x128xf32, #tpu.memory_space<vmem>>, vector<3x52xf32>
    tpu.vector_store %arg4[%c8_118, %c76], %148 {strides = array<i32>} : memref<120x128xf32, #tpu.memory_space<vmem>>, vector<3x52xf32>,
    %150 = vector.extract_strided_slice %137 {offsets = [0, 0], sizes = [3, 54], strides = [1, 1]} : vector<3x128xf32> to vector<3x54xf32>
    %c16_119 = arith.constant 16 : index
    %c10 = arith.constant 10 : index
    %151 = vector.load %arg4[%c16_119, %c10] : memref<120x128xf32, #tpu.memory_space<vmem>>, vector<3x54xf32>
    tpu.vector_store %arg4[%c16_119, %c10], %150 {strides = array<i32>} : memref<120x128xf32, #tpu.memory_space<vmem>>, vector<3x54xf32>,
    %152 = vector.extract_strided_slice %137 {offsets = [0, 64], sizes = [3, 54], strides = [1, 1]} : vector<3x128xf32> to vector<3x54xf32>
    %c16_120 = arith.constant 16 : index
    %c74 = arith.constant 74 : index
    %153 = vector.load %arg4[%c16_120, %c74] : memref<120x128xf32, #tpu.memory_space<vmem>>, vector<3x54xf32>
    tpu.vector_store %arg4[%c16_120, %c74], %152 {strides = array<i32>} : memref<120x128xf32, #tpu.memory_space<vmem>>, vector<3x54xf32>,
    %154 = vector.extract_strided_slice %137 {offsets = [0, 0], sizes = [3, 56], strides = [1, 1]} : vector<3x128xf32> to vector<3x56xf32>
    %c24_121 = arith.constant 24 : index
    %c8_122 = arith.constant 8 : index
    %155 = vector.load %arg4[%c24_121, %c8_122] : memref<120x128xf32, #tpu.memory_space<vmem>>, vector<3x56xf32>
    tpu.vector_store %arg4[%c24_121, %c8_122], %154 {strides = array<i32>} : memref<120x128xf32, #tpu.memory_space<vmem>>, vector<3x56xf32>,
    %156 = vector.extract_strided_slice %137 {offsets = [0, 64], sizes = [3, 56], strides = [1, 1]} : vector<3x128xf32> to vector<3x56xf32>
    %c24_123 = arith.constant 24 : index
    %c72_124 = arith.constant 72 : index
    %157 = vector.load %arg4[%c24_123, %c72_124] : memref<120x128xf32, #tpu.memory_space<vmem>>, vector<3x56xf32>
    tpu.vector_store %arg4[%c24_123, %c72_124], %156 {strides = array<i32>} : memref<120x128xf32, #tpu.memory_space<vmem>>, vector<3x56xf32>,
    %158 = vector.extract_strided_slice %137 {offsets = [0, 0], sizes = [3, 58], strides = [1, 1]} : vector<3x128xf32> to vector<3x58xf32>
    %c32_125 = arith.constant 32 : index
    %c6_126 = arith.constant 6 : index
    %159 = vector.load %arg4[%c32_125, %c6_126] : memref<120x128xf32, #tpu.memory_space<vmem>>, vector<3x58xf32>
    tpu.vector_store %arg4[%c32_125, %c6_126], %158 {strides = array<i32>} : memref<120x128xf32, #tpu.memory_space<vmem>>, vector<3x58xf32>,
    %160 = vector.extract_strided_slice %137 {offsets = [0, 64], sizes = [3, 58], strides = [1, 1]} : vector<3x128xf32> to vector<3x58xf32>
    %c32_127 = arith.constant 32 : index
    %c70_128 = arith.constant 70 : index
    %161 = vector.load %arg4[%c32_127, %c70_128] : memref<120x128xf32, #tpu.memory_space<vmem>>, vector<3x58xf32>
    tpu.vector_store %arg4[%c32_127, %c70_128], %160 {strides = array<i32>} : memref<120x128xf32, #tpu.memory_space<vmem>>, vector<3x58xf32>,
    %162 = vector.extract_strided_slice %137 {offsets = [0, 0], sizes = [3, 60], strides = [1, 1]} : vector<3x128xf32> to vector<3x60xf32>
    %c40_129 = arith.constant 40 : index
    %c4_130 = arith.constant 4 : index
    %163 = vector.load %arg4[%c40_129, %c4_130] : memref<120x128xf32, #tpu.memory_space<vmem>>, vector<3x60xf32>
    tpu.vector_store %arg4[%c40_129, %c4_130], %162 {strides = array<i32>} : memref<120x128xf32, #tpu.memory_space<vmem>>, vector<3x60xf32>,
    %164 = vector.extract_strided_slice %137 {offsets = [0, 64], sizes = [3, 60], strides = [1, 1]} : vector<3x128xf32> to vector<3x60xf32>
    %c40_131 = arith.constant 40 : index
    %c68_132 = arith.constant 68 : index
    %165 = vector.load %arg4[%c40_131, %c68_132] : memref<120x128xf32, #tpu.memory_space<vmem>>, vector<3x60xf32>
    tpu.vector_store %arg4[%c40_131, %c68_132], %164 {strides = array<i32>} : memref<120x128xf32, #tpu.memory_space<vmem>>, vector<3x60xf32>,
    %166 = vector.extract_strided_slice %137 {offsets = [0, 0], sizes = [3, 62], strides = [1, 1]} : vector<3x128xf32> to vector<3x62xf32>
    %c48_133 = arith.constant 48 : index
    %c2_134 = arith.constant 2 : index
    %167 = vector.load %arg4[%c48_133, %c2_134] : memref<120x128xf32, #tpu.memory_space<vmem>>, vector<3x62xf32>
    tpu.vector_store %arg4[%c48_133, %c2_134], %166 {strides = array<i32>} : memref<120x128xf32, #tpu.memory_space<vmem>>, vector<3x62xf32>,
    %168 = vector.extract_strided_slice %137 {offsets = [0, 64], sizes = [3, 62], strides = [1, 1]} : vector<3x128xf32> to vector<3x62xf32>
    %c48_135 = arith.constant 48 : index
    %c66_136 = arith.constant 66 : index
    %169 = vector.load %arg4[%c48_135, %c66_136] : memref<120x128xf32, #tpu.memory_space<vmem>>, vector<3x62xf32>
    tpu.vector_store %arg4[%c48_135, %c66_136], %168 {strides = array<i32>} : memref<120x128xf32, #tpu.memory_space<vmem>>, vector<3x62xf32>,
    %c56_137 = arith.constant 56 : index
    %c0_138 = arith.constant 0 : index
    %170 = vector.load %arg4[%c56_137, %c0_138] : memref<120x128xf32, #tpu.memory_space<vmem>>, vector<3x128xf32>
    tpu.vector_store %arg4[%c56_137, %c0_138], %137 {strides = array<i32>} : memref<120x128xf32, #tpu.memory_space<vmem>>, vector<3x128xf32>,
    %171 = vector.extract_strided_slice %137 {offsets = [0, 2], sizes = [3, 62], strides = [1, 1]} : vector<3x128xf32> to vector<3x62xf32>
    %c64_139 = arith.constant 64 : index
    %c0_140 = arith.constant 0 : index
    %172 = vector.load %arg4[%c64_139, %c0_140] : memref<120x128xf32, #tpu.memory_space<vmem>>, vector<3x62xf32>
    tpu.vector_store %arg4[%c64_139, %c0_140], %171 {strides = array<i32>} : memref<120x128xf32, #tpu.memory_space<vmem>>, vector<3x62xf32>,
    %173 = vector.extract_strided_slice %137 {offsets = [0, 66], sizes = [3, 62], strides = [1, 1]} : vector<3x128xf32> to vector<3x62xf32>
    %c64_141 = arith.constant 64 : index
    %c64_142 = arith.constant 64 : index
    %174 = vector.load %arg4[%c64_141, %c64_142] : memref<120x128xf32, #tpu.memory_space<vmem>>, vector<3x62xf32>
    tpu.vector_store %arg4[%c64_141, %c64_142], %173 {strides = array<i32>} : memref<120x128xf32, #tpu.memory_space<vmem>>, vector<3x62xf32>,
    %175 = vector.extract_strided_slice %137 {offsets = [0, 4], sizes = [3, 60], strides = [1, 1]} : vector<3x128xf32> to vector<3x60xf32>
    %c72_143 = arith.constant 72 : index
    %c0_144 = arith.constant 0 : index
    %176 = vector.load %arg4[%c72_143, %c0_144] : memref<120x128xf32, #tpu.memory_space<vmem>>, vector<3x60xf32>
    tpu.vector_store %arg4[%c72_143, %c0_144], %175 {strides = array<i32>} : memref<120x128xf32, #tpu.memory_space<vmem>>, vector<3x60xf32>,
    %177 = vector.extract_strided_slice %137 {offsets = [0, 68], sizes = [3, 60], strides = [1, 1]} : vector<3x128xf32> to vector<3x60xf32>
    %c72_145 = arith.constant 72 : index
    %c64_146 = arith.constant 64 : index
    %178 = vector.load %arg4[%c72_145, %c64_146] : memref<120x128xf32, #tpu.memory_space<vmem>>, vector<3x60xf32>
    tpu.vector_store %arg4[%c72_145, %c64_146], %177 {strides = array<i32>} : memref<120x128xf32, #tpu.memory_space<vmem>>, vector<3x60xf32>,
    %179 = vector.extract_strided_slice %137 {offsets = [0, 6], sizes = [3, 58], strides = [1, 1]} : vector<3x128xf32> to vector<3x58xf32>
    %c80_147 = arith.constant 80 : index
    %c0_148 = arith.constant 0 : index
    %180 = vector.load %arg4[%c80_147, %c0_148] : memref<120x128xf32, #tpu.memory_space<vmem>>, vector<3x58xf32>
    tpu.vector_store %arg4[%c80_147, %c0_148], %179 {strides = array<i32>} : memref<120x128xf32, #tpu.memory_space<vmem>>, vector<3x58xf32>,
    %181 = vector.extract_strided_slice %137 {offsets = [0, 70], sizes = [3, 58], strides = [1, 1]} : vector<3x128xf32> to vector<3x58xf32>
    %c80_149 = arith.constant 80 : index
    %c64_150 = arith.constant 64 : index
    %182 = vector.load %arg4[%c80_149, %c64_150] : memref<120x128xf32, #tpu.memory_space<vmem>>, vector<3x58xf32>
    tpu.vector_store %arg4[%c80_149, %c64_150], %181 {strides = array<i32>} : memref<120x128xf32, #tpu.memory_space<vmem>>, vector<3x58xf32>,
    %183 = vector.extract_strided_slice %137 {offsets = [0, 8], sizes = [3, 56], strides = [1, 1]} : vector<3x128xf32> to vector<3x56xf32>
    %c88_151 = arith.constant 88 : index
    %c0_152 = arith.constant 0 : index
    %184 = vector.load %arg4[%c88_151, %c0_152] : memref<120x128xf32, #tpu.memory_space<vmem>>, vector<3x56xf32>
    tpu.vector_store %arg4[%c88_151, %c0_152], %183 {strides = array<i32>} : memref<120x128xf32, #tpu.memory_space<vmem>>, vector<3x56xf32>,
    %185 = vector.extract_strided_slice %137 {offsets = [0, 72], sizes = [3, 56], strides = [1, 1]} : vector<3x128xf32> to vector<3x56xf32>
    %c88_153 = arith.constant 88 : index
    %c64_154 = arith.constant 64 : index
    %186 = vector.load %arg4[%c88_153, %c64_154] : memref<120x128xf32, #tpu.memory_space<vmem>>, vector<3x56xf32>
    tpu.vector_store %arg4[%c88_153, %c64_154], %185 {strides = array<i32>} : memref<120x128xf32, #tpu.memory_space<vmem>>, vector<3x56xf32>,
    %187 = vector.extract_strided_slice %137 {offsets = [0, 10], sizes = [3, 54], strides = [1, 1]} : vector<3x128xf32> to vector<3x54xf32>
    %c96_155 = arith.constant 96 : index
    %c0_156 = arith.constant 0 : index
    %188 = vector.load %arg4[%c96_155, %c0_156] : memref<120x128xf32, #tpu.memory_space<vmem>>, vector<3x54xf32>
    tpu.vector_store %arg4[%c96_155, %c0_156], %187 {strides = array<i32>} : memref<120x128xf32, #tpu.memory_space<vmem>>, vector<3x54xf32>,
    %189 = vector.extract_strided_slice %137 {offsets = [0, 74], sizes = [3, 54], strides = [1, 1]} : vector<3x128xf32> to vector<3x54xf32>
    %c96_157 = arith.constant 96 : index
    %c64_158 = arith.constant 64 : index
    %190 = vector.load %arg4[%c96_157, %c64_158] : memref<120x128xf32, #tpu.memory_space<vmem>>, vector<3x54xf32>
    tpu.vector_store %arg4[%c96_157, %c64_158], %189 {strides = array<i32>} : memref<120x128xf32, #tpu.memory_space<vmem>>, vector<3x54xf32>,
    %191 = vector.extract_strided_slice %137 {offsets = [0, 12], sizes = [3, 52], strides = [1, 1]} : vector<3x128xf32> to vector<3x52xf32>
    %c104_159 = arith.constant 104 : index
    %c0_160 = arith.constant 0 : index
    %192 = vector.load %arg4[%c104_159, %c0_160] : memref<120x128xf32, #tpu.memory_space<vmem>>, vector<3x52xf32>
    tpu.vector_store %arg4[%c104_159, %c0_160], %191 {strides = array<i32>} : memref<120x128xf32, #tpu.memory_space<vmem>>, vector<3x52xf32>,
    %193 = vector.extract_strided_slice %137 {offsets = [0, 76], sizes = [3, 52], strides = [1, 1]} : vector<3x128xf32> to vector<3x52xf32>
    %c104_161 = arith.constant 104 : index
    %c64_162 = arith.constant 64 : index
    %194 = vector.load %arg4[%c104_161, %c64_162] : memref<120x128xf32, #tpu.memory_space<vmem>>, vector<3x52xf32>
    tpu.vector_store %arg4[%c104_161, %c64_162], %193 {strides = array<i32>} : memref<120x128xf32, #tpu.memory_space<vmem>>, vector<3x52xf32>,
    %195 = vector.extract_strided_slice %137 {offsets = [0, 14], sizes = [3, 50], strides = [1, 1]} : vector<3x128xf32> to vector<3x50xf32>
    %c112_163 = arith.constant 112 : index
    %c0_164 = arith.constant 0 : index
    %196 = vector.load %arg4[%c112_163, %c0_164] : memref<120x128xf32, #tpu.memory_space<vmem>>, vector<3x50xf32>
    tpu.vector_store %arg4[%c112_163, %c0_164], %195 {strides = array<i32>} : memref<120x128xf32, #tpu.memory_space<vmem>>, vector<3x50xf32>,
    %197 = vector.extract_strided_slice %137 {offsets = [0, 78], sizes = [3, 50], strides = [1, 1]} : vector<3x128xf32> to vector<3x50xf32>
    %c112_165 = arith.constant 112 : index
    %c64_166 = arith.constant 64 : index
    %198 = vector.load %arg4[%c112_165, %c64_166] : memref<120x128xf32, #tpu.memory_space<vmem>>, vector<3x50xf32>
    tpu.vector_store %arg4[%c112_165, %c64_166], %197 {strides = array<i32>} : memref<120x128xf32, #tpu.memory_space<vmem>>, vector<3x50xf32>,
    %c0_167 = arith.constant 0 : index
    %c256 = arith.constant 256 : index
    %199 = vector.load %arg2[%c0_167, %c256] : memref<8x2304xf32, #tpu.memory_space<vmem>>, vector<6x120xf32>
    %c0_168 = arith.constant 0 : index
    %c0_169 = arith.constant 0 : index
    %200 = vector.load %arg4[%c0_168, %c0_169] : memref<120x128xf32, #tpu.memory_space<vmem>>, vector<120x128xf32>
    %cst_170 = arith.constant dense<0.000000e+00> : vector<6x128xf32>
    %201 = tpu.matmul %199, %200, %cst_170 {dimension_numbers = #tpu.dot_dimension_numbers<[1], [0], [0], [1], [0, 0, 1, 1], [], []>} : vector<6x120xf32>, vector<120x128xf32>, vector<6x128xf32> -> vector<6x128xf32>
    %cst_171 = arith.constant 0.000000e+00 : f32
    %202 = vector.broadcast %cst_171 : f32 to vector<6x128xf32>
    %203 = arith.maximumf %201, %202 : vector<6x128xf32>
    %204 = vector.extract_strided_slice %203 {offsets = [0, 0], sizes = [6, 50], strides = [1, 1]} : vector<6x128xf32> to vector<6x50xf32>
    %c0_172 = arith.constant 0 : index
    %c14_173 = arith.constant 14 : index
    %205 = vector.load %arg4[%c0_172, %c14_173] : memref<120x128xf32, #tpu.memory_space<vmem>>, vector<6x50xf32>
    tpu.vector_store %arg4[%c0_172, %c14_173], %204 {strides = array<i32>} : memref<120x128xf32, #tpu.memory_space<vmem>>, vector<6x50xf32>,
    %206 = vector.extract_strided_slice %203 {offsets = [0, 64], sizes = [6, 50], strides = [1, 1]} : vector<6x128xf32> to vector<6x50xf32>
    %c0_174 = arith.constant 0 : index
    %c78_175 = arith.constant 78 : index
    %207 = vector.load %arg4[%c0_174, %c78_175] : memref<120x128xf32, #tpu.memory_space<vmem>>, vector<6x50xf32>
    tpu.vector_store %arg4[%c0_174, %c78_175], %206 {strides = array<i32>} : memref<120x128xf32, #tpu.memory_space<vmem>>, vector<6x50xf32>,
    %208 = vector.extract_strided_slice %203 {offsets = [0, 0], sizes = [6, 52], strides = [1, 1]} : vector<6x128xf32> to vector<6x52xf32>
    %c8_176 = arith.constant 8 : index
    %c12_177 = arith.constant 12 : index
    %209 = vector.load %arg4[%c8_176, %c12_177] : memref<120x128xf32, #tpu.memory_space<vmem>>, vector<6x52xf32>
    tpu.vector_store %arg4[%c8_176, %c12_177], %208 {strides = array<i32>} : memref<120x128xf32, #tpu.memory_space<vmem>>, vector<6x52xf32>,
    %210 = vector.extract_strided_slice %203 {offsets = [0, 64], sizes = [6, 52], strides = [1, 1]} : vector<6x128xf32> to vector<6x52xf32>
    %c8_178 = arith.constant 8 : index
    %c76_179 = arith.constant 76 : index
    %211 = vector.load %arg4[%c8_178, %c76_179] : memref<120x128xf32, #tpu.memory_space<vmem>>, vector<6x52xf32>
    tpu.vector_store %arg4[%c8_178, %c76_179], %210 {strides = array<i32>} : memref<120x128xf32, #tpu.memory_space<vmem>>, vector<6x52xf32>,
    %212 = vector.extract_strided_slice %203 {offsets = [0, 0], sizes = [6, 54], strides = [1, 1]} : vector<6x128xf32> to vector<6x54xf32>
    %c16_180 = arith.constant 16 : index
    %c10_181 = arith.constant 10 : index
    %213 = vector.load %arg4[%c16_180, %c10_181] : memref<120x128xf32, #tpu.memory_space<vmem>>, vector<6x54xf32>
    tpu.vector_store %arg4[%c16_180, %c10_181], %212 {strides = array<i32>} : memref<120x128xf32, #tpu.memory_space<vmem>>, vector<6x54xf32>,
    %214 = vector.extract_strided_slice %203 {offsets = [0, 64], sizes = [6, 54], strides = [1, 1]} : vector<6x128xf32> to vector<6x54xf32>
    %c16_182 = arith.constant 16 : index
    %c74_183 = arith.constant 74 : index
    %215 = vector.load %arg4[%c16_182, %c74_183] : memref<120x128xf32, #tpu.memory_space<vmem>>, vector<6x54xf32>
    tpu.vector_store %arg4[%c16_182, %c74_183], %214 {strides = array<i32>} : memref<120x128xf32, #tpu.memory_space<vmem>>, vector<6x54xf32>,
    %216 = vector.extract_strided_slice %203 {offsets = [0, 0], sizes = [6, 56], strides = [1, 1]} : vector<6x128xf32> to vector<6x56xf32>
    %c24_184 = arith.constant 24 : index
    %c8_185 = arith.constant 8 : index
    %217 = vector.load %arg4[%c24_184, %c8_185] : memref<120x128xf32, #tpu.memory_space<vmem>>, vector<6x56xf32>
    tpu.vector_store %arg4[%c24_184, %c8_185], %216 {strides = array<i32>} : memref<120x128xf32, #tpu.memory_space<vmem>>, vector<6x56xf32>,
    %218 = vector.extract_strided_slice %203 {offsets = [0, 64], sizes = [6, 56], strides = [1, 1]} : vector<6x128xf32> to vector<6x56xf32>
    %c24_186 = arith.constant 24 : index
    %c72_187 = arith.constant 72 : index
    %219 = vector.load %arg4[%c24_186, %c72_187] : memref<120x128xf32, #tpu.memory_space<vmem>>, vector<6x56xf32>
    tpu.vector_store %arg4[%c24_186, %c72_187], %218 {strides = array<i32>} : memref<120x128xf32, #tpu.memory_space<vmem>>, vector<6x56xf32>,
    %220 = vector.extract_strided_slice %203 {offsets = [0, 0], sizes = [6, 58], strides = [1, 1]} : vector<6x128xf32> to vector<6x58xf32>
    %c32_188 = arith.constant 32 : index
    %c6_189 = arith.constant 6 : index
    %221 = vector.load %arg4[%c32_188, %c6_189] : memref<120x128xf32, #tpu.memory_space<vmem>>, vector<6x58xf32>
    tpu.vector_store %arg4[%c32_188, %c6_189], %220 {strides = array<i32>} : memref<120x128xf32, #tpu.memory_space<vmem>>, vector<6x58xf32>,
    %222 = vector.extract_strided_slice %203 {offsets = [0, 64], sizes = [6, 58], strides = [1, 1]} : vector<6x128xf32> to vector<6x58xf32>
    %c32_190 = arith.constant 32 : index
    %c70_191 = arith.constant 70 : index
    %223 = vector.load %arg4[%c32_190, %c70_191] : memref<120x128xf32, #tpu.memory_space<vmem>>, vector<6x58xf32>
    tpu.vector_store %arg4[%c32_190, %c70_191], %222 {strides = array<i32>} : memref<120x128xf32, #tpu.memory_space<vmem>>, vector<6x58xf32>,
    %224 = vector.extract_strided_slice %203 {offsets = [0, 0], sizes = [6, 60], strides = [1, 1]} : vector<6x128xf32> to vector<6x60xf32>
    %c40_192 = arith.constant 40 : index
    %c4_193 = arith.constant 4 : index
    %225 = vector.load %arg4[%c40_192, %c4_193] : memref<120x128xf32, #tpu.memory_space<vmem>>, vector<6x60xf32>
    tpu.vector_store %arg4[%c40_192, %c4_193], %224 {strides = array<i32>} : memref<120x128xf32, #tpu.memory_space<vmem>>, vector<6x60xf32>,
    %226 = vector.extract_strided_slice %203 {offsets = [0, 64], sizes = [6, 60], strides = [1, 1]} : vector<6x128xf32> to vector<6x60xf32>
    %c40_194 = arith.constant 40 : index
    %c68_195 = arith.constant 68 : index
    %227 = vector.load %arg4[%c40_194, %c68_195] : memref<120x128xf32, #tpu.memory_space<vmem>>, vector<6x60xf32>
    tpu.vector_store %arg4[%c40_194, %c68_195], %226 {strides = array<i32>} : memref<120x128xf32, #tpu.memory_space<vmem>>, vector<6x60xf32>,
    %228 = vector.extract_strided_slice %203 {offsets = [0, 0], sizes = [6, 62], strides = [1, 1]} : vector<6x128xf32> to vector<6x62xf32>
    %c48_196 = arith.constant 48 : index
    %c2_197 = arith.constant 2 : index
    %229 = vector.load %arg4[%c48_196, %c2_197] : memref<120x128xf32, #tpu.memory_space<vmem>>, vector<6x62xf32>
    tpu.vector_store %arg4[%c48_196, %c2_197], %228 {strides = array<i32>} : memref<120x128xf32, #tpu.memory_space<vmem>>, vector<6x62xf32>,
    %230 = vector.extract_strided_slice %203 {offsets = [0, 64], sizes = [6, 62], strides = [1, 1]} : vector<6x128xf32> to vector<6x62xf32>
    %c48_198 = arith.constant 48 : index
    %c66_199 = arith.constant 66 : index
    %231 = vector.load %arg4[%c48_198, %c66_199] : memref<120x128xf32, #tpu.memory_space<vmem>>, vector<6x62xf32>
    tpu.vector_store %arg4[%c48_198, %c66_199], %230 {strides = array<i32>} : memref<120x128xf32, #tpu.memory_space<vmem>>, vector<6x62xf32>,
    %c56_200 = arith.constant 56 : index
    %c0_201 = arith.constant 0 : index
    %232 = vector.load %arg4[%c56_200, %c0_201] : memref<120x128xf32, #tpu.memory_space<vmem>>, vector<6x128xf32>
    tpu.vector_store %arg4[%c56_200, %c0_201], %203 {strides = array<i32>} : memref<120x128xf32, #tpu.memory_space<vmem>>, vector<6x128xf32>,
    %233 = vector.extract_strided_slice %203 {offsets = [0, 2], sizes = [6, 62], strides = [1, 1]} : vector<6x128xf32> to vector<6x62xf32>
    %c64_202 = arith.constant 64 : index
    %c0_203 = arith.constant 0 : index
    %234 = vector.load %arg4[%c64_202, %c0_203] : memref<120x128xf32, #tpu.memory_space<vmem>>, vector<6x62xf32>
    tpu.vector_store %arg4[%c64_202, %c0_203], %233 {strides = array<i32>} : memref<120x128xf32, #tpu.memory_space<vmem>>, vector<6x62xf32>,
    %235 = vector.extract_strided_slice %203 {offsets = [0, 66], sizes = [6, 62], strides = [1, 1]} : vector<6x128xf32> to vector<6x62xf32>
    %c64_204 = arith.constant 64 : index
    %c64_205 = arith.constant 64 : index
    %236 = vector.load %arg4[%c64_204, %c64_205] : memref<120x128xf32, #tpu.memory_space<vmem>>, vector<6x62xf32>
    tpu.vector_store %arg4[%c64_204, %c64_205], %235 {strides = array<i32>} : memref<120x128xf32, #tpu.memory_space<vmem>>, vector<6x62xf32>,
    %237 = vector.extract_strided_slice %203 {offsets = [0, 4], sizes = [6, 60], strides = [1, 1]} : vector<6x128xf32> to vector<6x60xf32>
    %c72_206 = arith.constant 72 : index
    %c0_207 = arith.constant 0 : index
    %238 = vector.load %arg4[%c72_206, %c0_207] : memref<120x128xf32, #tpu.memory_space<vmem>>, vector<6x60xf32>
    tpu.vector_store %arg4[%c72_206, %c0_207], %237 {strides = array<i32>} : memref<120x128xf32, #tpu.memory_space<vmem>>, vector<6x60xf32>,
    %239 = vector.extract_strided_slice %203 {offsets = [0, 68], sizes = [6, 60], strides = [1, 1]} : vector<6x128xf32> to vector<6x60xf32>
    %c72_208 = arith.constant 72 : index
    %c64_209 = arith.constant 64 : index
    %240 = vector.load %arg4[%c72_208, %c64_209] : memref<120x128xf32, #tpu.memory_space<vmem>>, vector<6x60xf32>
    tpu.vector_store %arg4[%c72_208, %c64_209], %239 {strides = array<i32>} : memref<120x128xf32, #tpu.memory_space<vmem>>, vector<6x60xf32>,
    %241 = vector.extract_strided_slice %203 {offsets = [0, 6], sizes = [6, 58], strides = [1, 1]} : vector<6x128xf32> to vector<6x58xf32>
    %c80_210 = arith.constant 80 : index
    %c0_211 = arith.constant 0 : index
    %242 = vector.load %arg4[%c80_210, %c0_211] : memref<120x128xf32, #tpu.memory_space<vmem>>, vector<6x58xf32>
    tpu.vector_store %arg4[%c80_210, %c0_211], %241 {strides = array<i32>} : memref<120x128xf32, #tpu.memory_space<vmem>>, vector<6x58xf32>,
    %243 = vector.extract_strided_slice %203 {offsets = [0, 70], sizes = [6, 58], strides = [1, 1]} : vector<6x128xf32> to vector<6x58xf32>
    %c80_212 = arith.constant 80 : index
    %c64_213 = arith.constant 64 : index
    %244 = vector.load %arg4[%c80_212, %c64_213] : memref<120x128xf32, #tpu.memory_space<vmem>>, vector<6x58xf32>
    tpu.vector_store %arg4[%c80_212, %c64_213], %243 {strides = array<i32>} : memref<120x128xf32, #tpu.memory_space<vmem>>, vector<6x58xf32>,
    %245 = vector.extract_strided_slice %203 {offsets = [0, 8], sizes = [6, 56], strides = [1, 1]} : vector<6x128xf32> to vector<6x56xf32>
    %c88_214 = arith.constant 88 : index
    %c0_215 = arith.constant 0 : index
    %246 = vector.load %arg4[%c88_214, %c0_215] : memref<120x128xf32, #tpu.memory_space<vmem>>, vector<6x56xf32>
    tpu.vector_store %arg4[%c88_214, %c0_215], %245 {strides = array<i32>} : memref<120x128xf32, #tpu.memory_space<vmem>>, vector<6x56xf32>,
    %247 = vector.extract_strided_slice %203 {offsets = [0, 72], sizes = [6, 56], strides = [1, 1]} : vector<6x128xf32> to vector<6x56xf32>
    %c88_216 = arith.constant 88 : index
    %c64_217 = arith.constant 64 : index
    %248 = vector.load %arg4[%c88_216, %c64_217] : memref<120x128xf32, #tpu.memory_space<vmem>>, vector<6x56xf32>
    tpu.vector_store %arg4[%c88_216, %c64_217], %247 {strides = array<i32>} : memref<120x128xf32, #tpu.memory_space<vmem>>, vector<6x56xf32>,
    %249 = vector.extract_strided_slice %203 {offsets = [0, 10], sizes = [6, 54], strides = [1, 1]} : vector<6x128xf32> to vector<6x54xf32>
    %c96_218 = arith.constant 96 : index
    %c0_219 = arith.constant 0 : index
    %250 = vector.load %arg4[%c96_218, %c0_219] : memref<120x128xf32, #tpu.memory_space<vmem>>, vector<6x54xf32>
    tpu.vector_store %arg4[%c96_218, %c0_219], %249 {strides = array<i32>} : memref<120x128xf32, #tpu.memory_space<vmem>>, vector<6x54xf32>,
    %251 = vector.extract_strided_slice %203 {offsets = [0, 74], sizes = [6, 54], strides = [1, 1]} : vector<6x128xf32> to vector<6x54xf32>
    %c96_220 = arith.constant 96 : index
    %c64_221 = arith.constant 64 : index
    %252 = vector.load %arg4[%c96_220, %c64_221] : memref<120x128xf32, #tpu.memory_space<vmem>>, vector<6x54xf32>
    tpu.vector_store %arg4[%c96_220, %c64_221], %251 {strides = array<i32>} : memref<120x128xf32, #tpu.memory_space<vmem>>, vector<6x54xf32>,
    %253 = vector.extract_strided_slice %203 {offsets = [0, 12], sizes = [6, 52], strides = [1, 1]} : vector<6x128xf32> to vector<6x52xf32>
    %c104_222 = arith.constant 104 : index
    %c0_223 = arith.constant 0 : index
    %254 = vector.load %arg4[%c104_222, %c0_223] : memref<120x128xf32, #tpu.memory_space<vmem>>, vector<6x52xf32>
    tpu.vector_store %arg4[%c104_222, %c0_223], %253 {strides = array<i32>} : memref<120x128xf32, #tpu.memory_space<vmem>>, vector<6x52xf32>,
    %255 = vector.extract_strided_slice %203 {offsets = [0, 76], sizes = [6, 52], strides = [1, 1]} : vector<6x128xf32> to vector<6x52xf32>
    %c104_224 = arith.constant 104 : index
    %c64_225 = arith.constant 64 : index
    %256 = vector.load %arg4[%c104_224, %c64_225] : memref<120x128xf32, #tpu.memory_space<vmem>>, vector<6x52xf32>
    tpu.vector_store %arg4[%c104_224, %c64_225], %255 {strides = array<i32>} : memref<120x128xf32, #tpu.memory_space<vmem>>, vector<6x52xf32>,
    %257 = vector.extract_strided_slice %203 {offsets = [0, 14], sizes = [6, 50], strides = [1, 1]} : vector<6x128xf32> to vector<6x50xf32>
    %c112_226 = arith.constant 112 : index
    %c0_227 = arith.constant 0 : index
    %258 = vector.load %arg4[%c112_226, %c0_227] : memref<120x128xf32, #tpu.memory_space<vmem>>, vector<6x50xf32>
    tpu.vector_store %arg4[%c112_226, %c0_227], %257 {strides = array<i32>} : memref<120x128xf32, #tpu.memory_space<vmem>>, vector<6x50xf32>,
    %259 = vector.extract_strided_slice %203 {offsets = [0, 78], sizes = [6, 50], strides = [1, 1]} : vector<6x128xf32> to vector<6x50xf32>
    %c112_228 = arith.constant 112 : index
    %c64_229 = arith.constant 64 : index
    %260 = vector.load %arg4[%c112_228, %c64_229] : memref<120x128xf32, #tpu.memory_space<vmem>>, vector<6x50xf32>
    tpu.vector_store %arg4[%c112_228, %c64_229], %259 {strides = array<i32>} : memref<120x128xf32, #tpu.memory_space<vmem>>, vector<6x50xf32>,
    %c0_230 = arith.constant 0 : index
    %c384 = arith.constant 384 : index
    %261 = vector.load %arg2[%c0_230, %c384] : memref<8x2304xf32, #tpu.memory_space<vmem>>, vector<6x120xf32>
    %c0_231 = arith.constant 0 : index
    %c0_232 = arith.constant 0 : index
    %262 = vector.load %arg4[%c0_231, %c0_232] : memref<120x128xf32, #tpu.memory_space<vmem>>, vector<120x128xf32>
    %cst_233 = arith.constant dense<0.000000e+00> : vector<6x128xf32>
    %263 = tpu.matmul %261, %262, %cst_233 {dimension_numbers = #tpu.dot_dimension_numbers<[1], [0], [0], [1], [0, 0, 1, 1], [], []>} : vector<6x120xf32>, vector<120x128xf32>, vector<6x128xf32> -> vector<6x128xf32>
    %cst_234 = arith.constant 0.000000e+00 : f32
    %264 = vector.broadcast %cst_234 : f32 to vector<6x128xf32>
    %265 = arith.maximumf %263, %264 : vector<6x128xf32>
    %c0_235 = arith.constant 0 : index
    %c504 = arith.constant 504 : index
    %266 = vector.load %arg2[%c0_235, %c504] : memref<8x2304xf32, #tpu.memory_space<vmem>>, vector<6x3xf32>
    %c0_236 = arith.constant 0 : index
    %c511 = arith.constant 511 : index
    %267 = vector.load %arg2[%c0_236, %c511] : memref<8x2304xf32, #tpu.memory_space<vmem>>, vector<6x1xf32>
    %cst_237 = arith.constant dense<0.000000e+00> : vector<6x128xf32>
    %268 = tpu.matmul %266, %137, %cst_237 {dimension_numbers = #tpu.dot_dimension_numbers<[1], [0], [0], [1], [0, 0, 1, 1], [], []>} : vector<6x3xf32>, vector<3x128xf32>, vector<6x128xf32> -> vector<6x128xf32>
    %269 = vector.broadcast %267 : vector<6x1xf32> to vector<6x128xf32>
    %270 = arith.addf %268, %269 : vector<6x128xf32>
    %271 = arith.addf %265, %270 : vector<6x128xf32>
    %cst_238 = arith.constant 0.000000e+00 : f32
    %272 = vector.broadcast %cst_238 : f32 to vector<6x128xf32>
    %273 = arith.maximumf %271, %272 : vector<6x128xf32>
    %cst_239 = arith.constant 0.000000e+00 : f32
    %274 = vector.broadcast %cst_239 : f32 to vector<120x128xf32>
    %c0_240 = arith.constant 0 : index
    %c0_241 = arith.constant 0 : index
    %275 = vector.load %arg4[%c0_240, %c0_241] : memref<120x128xf32, #tpu.memory_space<vmem>>, vector<120x128xf32>
    tpu.vector_store %arg4[%c0_240, %c0_241], %274 {strides = array<i32>} : memref<120x128xf32, #tpu.memory_space<vmem>>, vector<120x128xf32>,
    %cst_242 = arith.constant 1.000000e+00 : f32
    %276 = vector.broadcast %cst_242 : f32 to vector<1x128xf32>
    %c63_243 = arith.constant 63 : index
    %c0_244 = arith.constant 0 : index
    %277 = vector.load %arg4[%c63_243, %c0_244] : memref<120x128xf32, #tpu.memory_space<vmem>>, vector<1x128xf32>
    tpu.vector_store %arg4[%c63_243, %c0_244], %276 {strides = array<i32>} : memref<120x128xf32, #tpu.memory_space<vmem>>, vector<1x128xf32>,
    %278 = vector.extract_strided_slice %273 {offsets = [0, 0], sizes = [6, 36], strides = [1, 1]} : vector<6x128xf32> to vector<6x36xf32>
    %c0_245 = arith.constant 0 : index
    %c28 = arith.constant 28 : index
    %279 = vector.load %arg4[%c0_245, %c28] : memref<120x128xf32, #tpu.memory_space<vmem>>, vector<6x36xf32>
    tpu.vector_store %arg4[%c0_245, %c28], %278 {strides = array<i32>} : memref<120x128xf32, #tpu.memory_space<vmem>>, vector<6x36xf32>,
    %280 = vector.extract_strided_slice %273 {offsets = [0, 64], sizes = [6, 36], strides = [1, 1]} : vector<6x128xf32> to vector<6x36xf32>
    %c0_246 = arith.constant 0 : index
    %c92 = arith.constant 92 : index
    %281 = vector.load %arg4[%c0_246, %c92] : memref<120x128xf32, #tpu.memory_space<vmem>>, vector<6x36xf32>
    tpu.vector_store %arg4[%c0_246, %c92], %280 {strides = array<i32>} : memref<120x128xf32, #tpu.memory_space<vmem>>, vector<6x36xf32>,
    %282 = vector.extract_strided_slice %273 {offsets = [0, 0], sizes = [6, 40], strides = [1, 1]} : vector<6x128xf32> to vector<6x40xf32>
    %c8_247 = arith.constant 8 : index
    %c24_248 = arith.constant 24 : index
    %283 = vector.load %arg4[%c8_247, %c24_248] : memref<120x128xf32, #tpu.memory_space<vmem>>, vector<6x40xf32>
    tpu.vector_store %arg4[%c8_247, %c24_248], %282 {strides = array<i32>} : memref<120x128xf32, #tpu.memory_space<vmem>>, vector<6x40xf32>,
    %284 = vector.extract_strided_slice %273 {offsets = [0, 64], sizes = [6, 40], strides = [1, 1]} : vector<6x128xf32> to vector<6x40xf32>
    %c8_249 = arith.constant 8 : index
    %c88_250 = arith.constant 88 : index
    %285 = vector.load %arg4[%c8_249, %c88_250] : memref<120x128xf32, #tpu.memory_space<vmem>>, vector<6x40xf32>
    tpu.vector_store %arg4[%c8_249, %c88_250], %284 {strides = array<i32>} : memref<120x128xf32, #tpu.memory_space<vmem>>, vector<6x40xf32>,
    %286 = vector.extract_strided_slice %273 {offsets = [0, 0], sizes = [6, 44], strides = [1, 1]} : vector<6x128xf32> to vector<6x44xf32>
    %c16_251 = arith.constant 16 : index
    %c20 = arith.constant 20 : index
    %287 = vector.load %arg4[%c16_251, %c20] : memref<120x128xf32, #tpu.memory_space<vmem>>, vector<6x44xf32>
    tpu.vector_store %arg4[%c16_251, %c20], %286 {strides = array<i32>} : memref<120x128xf32, #tpu.memory_space<vmem>>, vector<6x44xf32>,
    %288 = vector.extract_strided_slice %273 {offsets = [0, 64], sizes = [6, 44], strides = [1, 1]} : vector<6x128xf32> to vector<6x44xf32>
    %c16_252 = arith.constant 16 : index
    %c84 = arith.constant 84 : index
    %289 = vector.load %arg4[%c16_252, %c84] : memref<120x128xf32, #tpu.memory_space<vmem>>, vector<6x44xf32>
    tpu.vector_store %arg4[%c16_252, %c84], %288 {strides = array<i32>} : memref<120x128xf32, #tpu.memory_space<vmem>>, vector<6x44xf32>,
    %290 = vector.extract_strided_slice %273 {offsets = [0, 0], sizes = [6, 48], strides = [1, 1]} : vector<6x128xf32> to vector<6x48xf32>
    %c24_253 = arith.constant 24 : index
    %c16_254 = arith.constant 16 : index
    %291 = vector.load %arg4[%c24_253, %c16_254] : memref<120x128xf32, #tpu.memory_space<vmem>>, vector<6x48xf32>
    tpu.vector_store %arg4[%c24_253, %c16_254], %290 {strides = array<i32>} : memref<120x128xf32, #tpu.memory_space<vmem>>, vector<6x48xf32>,
    %292 = vector.extract_strided_slice %273 {offsets = [0, 64], sizes = [6, 48], strides = [1, 1]} : vector<6x128xf32> to vector<6x48xf32>
    %c24_255 = arith.constant 24 : index
    %c80_256 = arith.constant 80 : index
    %293 = vector.load %arg4[%c24_255, %c80_256] : memref<120x128xf32, #tpu.memory_space<vmem>>, vector<6x48xf32>
    tpu.vector_store %arg4[%c24_255, %c80_256], %292 {strides = array<i32>} : memref<120x128xf32, #tpu.memory_space<vmem>>, vector<6x48xf32>,
    %294 = vector.extract_strided_slice %273 {offsets = [0, 0], sizes = [6, 52], strides = [1, 1]} : vector<6x128xf32> to vector<6x52xf32>
    %c32_257 = arith.constant 32 : index
    %c12_258 = arith.constant 12 : index
    %295 = vector.load %arg4[%c32_257, %c12_258] : memref<120x128xf32, #tpu.memory_space<vmem>>, vector<6x52xf32>
    tpu.vector_store %arg4[%c32_257, %c12_258], %294 {strides = array<i32>} : memref<120x128xf32, #tpu.memory_space<vmem>>, vector<6x52xf32>,
    %296 = vector.extract_strided_slice %273 {offsets = [0, 64], sizes = [6, 52], strides = [1, 1]} : vector<6x128xf32> to vector<6x52xf32>
    %c32_259 = arith.constant 32 : index
    %c76_260 = arith.constant 76 : index
    %297 = vector.load %arg4[%c32_259, %c76_260] : memref<120x128xf32, #tpu.memory_space<vmem>>, vector<6x52xf32>
    tpu.vector_store %arg4[%c32_259, %c76_260], %296 {strides = array<i32>} : memref<120x128xf32, #tpu.memory_space<vmem>>, vector<6x52xf32>,
    %298 = vector.extract_strided_slice %273 {offsets = [0, 0], sizes = [6, 56], strides = [1, 1]} : vector<6x128xf32> to vector<6x56xf32>
    %c40_261 = arith.constant 40 : index
    %c8_262 = arith.constant 8 : index
    %299 = vector.load %arg4[%c40_261, %c8_262] : memref<120x128xf32, #tpu.memory_space<vmem>>, vector<6x56xf32>
    tpu.vector_store %arg4[%c40_261, %c8_262], %298 {strides = array<i32>} : memref<120x128xf32, #tpu.memory_space<vmem>>, vector<6x56xf32>,
    %300 = vector.extract_strided_slice %273 {offsets = [0, 64], sizes = [6, 56], strides = [1, 1]} : vector<6x128xf32> to vector<6x56xf32>
    %c40_263 = arith.constant 40 : index
    %c72_264 = arith.constant 72 : index
    %301 = vector.load %arg4[%c40_263, %c72_264] : memref<120x128xf32, #tpu.memory_space<vmem>>, vector<6x56xf32>
    tpu.vector_store %arg4[%c40_263, %c72_264], %300 {strides = array<i32>} : memref<120x128xf32, #tpu.memory_space<vmem>>, vector<6x56xf32>,
    %302 = vector.extract_strided_slice %273 {offsets = [0, 0], sizes = [6, 60], strides = [1, 1]} : vector<6x128xf32> to vector<6x60xf32>
    %c48_265 = arith.constant 48 : index
    %c4_266 = arith.constant 4 : index
    %303 = vector.load %arg4[%c48_265, %c4_266] : memref<120x128xf32, #tpu.memory_space<vmem>>, vector<6x60xf32>
    tpu.vector_store %arg4[%c48_265, %c4_266], %302 {strides = array<i32>} : memref<120x128xf32, #tpu.memory_space<vmem>>, vector<6x60xf32>,
    %304 = vector.extract_strided_slice %273 {offsets = [0, 64], sizes = [6, 60], strides = [1, 1]} : vector<6x128xf32> to vector<6x60xf32>
    %c48_267 = arith.constant 48 : index
    %c68_268 = arith.constant 68 : index
    %305 = vector.load %arg4[%c48_267, %c68_268] : memref<120x128xf32, #tpu.memory_space<vmem>>, vector<6x60xf32>
    tpu.vector_store %arg4[%c48_267, %c68_268], %304 {strides = array<i32>} : memref<120x128xf32, #tpu.memory_space<vmem>>, vector<6x60xf32>,
    %c56_269 = arith.constant 56 : index
    %c0_270 = arith.constant 0 : index
    %306 = vector.load %arg4[%c56_269, %c0_270] : memref<120x128xf32, #tpu.memory_space<vmem>>, vector<6x128xf32>
    tpu.vector_store %arg4[%c56_269, %c0_270], %273 {strides = array<i32>} : memref<120x128xf32, #tpu.memory_space<vmem>>, vector<6x128xf32>,
    %307 = vector.extract_strided_slice %273 {offsets = [0, 4], sizes = [6, 60], strides = [1, 1]} : vector<6x128xf32> to vector<6x60xf32>
    %c64_271 = arith.constant 64 : index
    %c0_272 = arith.constant 0 : index
    %308 = vector.load %arg4[%c64_271, %c0_272] : memref<120x128xf32, #tpu.memory_space<vmem>>, vector<6x60xf32>
    tpu.vector_store %arg4[%c64_271, %c0_272], %307 {strides = array<i32>} : memref<120x128xf32, #tpu.memory_space<vmem>>, vector<6x60xf32>,
    %309 = vector.extract_strided_slice %273 {offsets = [0, 68], sizes = [6, 60], strides = [1, 1]} : vector<6x128xf32> to vector<6x60xf32>
    %c64_273 = arith.constant 64 : index
    %c64_274 = arith.constant 64 : index
    %310 = vector.load %arg4[%c64_273, %c64_274] : memref<120x128xf32, #tpu.memory_space<vmem>>, vector<6x60xf32>
    tpu.vector_store %arg4[%c64_273, %c64_274], %309 {strides = array<i32>} : memref<120x128xf32, #tpu.memory_space<vmem>>, vector<6x60xf32>,
    %311 = vector.extract_strided_slice %273 {offsets = [0, 8], sizes = [6, 56], strides = [1, 1]} : vector<6x128xf32> to vector<6x56xf32>
    %c72_275 = arith.constant 72 : index
    %c0_276 = arith.constant 0 : index
    %312 = vector.load %arg4[%c72_275, %c0_276] : memref<120x128xf32, #tpu.memory_space<vmem>>, vector<6x56xf32>
    tpu.vector_store %arg4[%c72_275, %c0_276], %311 {strides = array<i32>} : memref<120x128xf32, #tpu.memory_space<vmem>>, vector<6x56xf32>,
    %313 = vector.extract_strided_slice %273 {offsets = [0, 72], sizes = [6, 56], strides = [1, 1]} : vector<6x128xf32> to vector<6x56xf32>
    %c72_277 = arith.constant 72 : index
    %c64_278 = arith.constant 64 : index
    %314 = vector.load %arg4[%c72_277, %c64_278] : memref<120x128xf32, #tpu.memory_space<vmem>>, vector<6x56xf32>
    tpu.vector_store %arg4[%c72_277, %c64_278], %313 {strides = array<i32>} : memref<120x128xf32, #tpu.memory_space<vmem>>, vector<6x56xf32>,
    %315 = vector.extract_strided_slice %273 {offsets = [0, 12], sizes = [6, 52], strides = [1, 1]} : vector<6x128xf32> to vector<6x52xf32>
    %c80_279 = arith.constant 80 : index
    %c0_280 = arith.constant 0 : index
    %316 = vector.load %arg4[%c80_279, %c0_280] : memref<120x128xf32, #tpu.memory_space<vmem>>, vector<6x52xf32>
    tpu.vector_store %arg4[%c80_279, %c0_280], %315 {strides = array<i32>} : memref<120x128xf32, #tpu.memory_space<vmem>>, vector<6x52xf32>,
    %317 = vector.extract_strided_slice %273 {offsets = [0, 76], sizes = [6, 52], strides = [1, 1]} : vector<6x128xf32> to vector<6x52xf32>
    %c80_281 = arith.constant 80 : index
    %c64_282 = arith.constant 64 : index
    %318 = vector.load %arg4[%c80_281, %c64_282] : memref<120x128xf32, #tpu.memory_space<vmem>>, vector<6x52xf32>
    tpu.vector_store %arg4[%c80_281, %c64_282], %317 {strides = array<i32>} : memref<120x128xf32, #tpu.memory_space<vmem>>, vector<6x52xf32>,
    %319 = vector.extract_strided_slice %273 {offsets = [0, 16], sizes = [6, 48], strides = [1, 1]} : vector<6x128xf32> to vector<6x48xf32>
    %c88_283 = arith.constant 88 : index
    %c0_284 = arith.constant 0 : index
    %320 = vector.load %arg4[%c88_283, %c0_284] : memref<120x128xf32, #tpu.memory_space<vmem>>, vector<6x48xf32>
    tpu.vector_store %arg4[%c88_283, %c0_284], %319 {strides = array<i32>} : memref<120x128xf32, #tpu.memory_space<vmem>>, vector<6x48xf32>,
    %321 = vector.extract_strided_slice %273 {offsets = [0, 80], sizes = [6, 48], strides = [1, 1]} : vector<6x128xf32> to vector<6x48xf32>
    %c88_285 = arith.constant 88 : index
    %c64_286 = arith.constant 64 : index
    %322 = vector.load %arg4[%c88_285, %c64_286] : memref<120x128xf32, #tpu.memory_space<vmem>>, vector<6x48xf32>
    tpu.vector_store %arg4[%c88_285, %c64_286], %321 {strides = array<i32>} : memref<120x128xf32, #tpu.memory_space<vmem>>, vector<6x48xf32>,
    %323 = vector.extract_strided_slice %273 {offsets = [0, 20], sizes = [6, 44], strides = [1, 1]} : vector<6x128xf32> to vector<6x44xf32>
    %c96_287 = arith.constant 96 : index
    %c0_288 = arith.constant 0 : index
    %324 = vector.load %arg4[%c96_287, %c0_288] : memref<120x128xf32, #tpu.memory_space<vmem>>, vector<6x44xf32>
    tpu.vector_store %arg4[%c96_287, %c0_288], %323 {strides = array<i32>} : memref<120x128xf32, #tpu.memory_space<vmem>>, vector<6x44xf32>,
    %325 = vector.extract_strided_slice %273 {offsets = [0, 84], sizes = [6, 44], strides = [1, 1]} : vector<6x128xf32> to vector<6x44xf32>
    %c96_289 = arith.constant 96 : index
    %c64_290 = arith.constant 64 : index
    %326 = vector.load %arg4[%c96_289, %c64_290] : memref<120x128xf32, #tpu.memory_space<vmem>>, vector<6x44xf32>
    tpu.vector_store %arg4[%c96_289, %c64_290], %325 {strides = array<i32>} : memref<120x128xf32, #tpu.memory_space<vmem>>, vector<6x44xf32>,
    %327 = vector.extract_strided_slice %273 {offsets = [0, 24], sizes = [6, 40], strides = [1, 1]} : vector<6x128xf32> to vector<6x40xf32>
    %c104_291 = arith.constant 104 : index
    %c0_292 = arith.constant 0 : index
    %328 = vector.load %arg4[%c104_291, %c0_292] : memref<120x128xf32, #tpu.memory_space<vmem>>, vector<6x40xf32>
    tpu.vector_store %arg4[%c104_291, %c0_292], %327 {strides = array<i32>} : memref<120x128xf32, #tpu.memory_space<vmem>>, vector<6x40xf32>,
    %329 = vector.extract_strided_slice %273 {offsets = [0, 88], sizes = [6, 40], strides = [1, 1]} : vector<6x128xf32> to vector<6x40xf32>
    %c104_293 = arith.constant 104 : index
    %c64_294 = arith.constant 64 : index
    %330 = vector.load %arg4[%c104_293, %c64_294] : memref<120x128xf32, #tpu.memory_space<vmem>>, vector<6x40xf32>
    tpu.vector_store %arg4[%c104_293, %c64_294], %329 {strides = array<i32>} : memref<120x128xf32, #tpu.memory_space<vmem>>, vector<6x40xf32>,
    %331 = vector.extract_strided_slice %273 {offsets = [0, 28], sizes = [6, 36], strides = [1, 1]} : vector<6x128xf32> to vector<6x36xf32>
    %c112_295 = arith.constant 112 : index
    %c0_296 = arith.constant 0 : index
    %332 = vector.load %arg4[%c112_295, %c0_296] : memref<120x128xf32, #tpu.memory_space<vmem>>, vector<6x36xf32>
    tpu.vector_store %arg4[%c112_295, %c0_296], %331 {strides = array<i32>} : memref<120x128xf32, #tpu.memory_space<vmem>>, vector<6x36xf32>,
    %333 = vector.extract_strided_slice %273 {offsets = [0, 92], sizes = [6, 36], strides = [1, 1]} : vector<6x128xf32> to vector<6x36xf32>
    %c112_297 = arith.constant 112 : index
    %c64_298 = arith.constant 64 : index
    %334 = vector.load %arg4[%c112_297, %c64_298] : memref<120x128xf32, #tpu.memory_space<vmem>>, vector<6x36xf32>
    tpu.vector_store %arg4[%c112_297, %c64_298], %333 {strides = array<i32>} : memref<120x128xf32, #tpu.memory_space<vmem>>, vector<6x36xf32>,
    %c0_299 = arith.constant 0 : index
    %c512 = arith.constant 512 : index
    %335 = vector.load %arg2[%c0_299, %c512] : memref<8x2304xf32, #tpu.memory_space<vmem>>, vector<6x120xf32>
    %c0_300 = arith.constant 0 : index
    %c0_301 = arith.constant 0 : index
    %336 = vector.load %arg4[%c0_300, %c0_301] : memref<120x128xf32, #tpu.memory_space<vmem>>, vector<120x128xf32>
    %cst_302 = arith.constant dense<0.000000e+00> : vector<6x128xf32>
    %337 = tpu.matmul %335, %336, %cst_302 {dimension_numbers = #tpu.dot_dimension_numbers<[1], [0], [0], [1], [0, 0, 1, 1], [], []>} : vector<6x120xf32>, vector<120x128xf32>, vector<6x128xf32> -> vector<6x128xf32>
    %cst_303 = arith.constant 0.000000e+00 : f32
    %338 = vector.broadcast %cst_303 : f32 to vector<6x128xf32>
    %339 = arith.maximumf %337, %338 : vector<6x128xf32>
    %340 = vector.extract_strided_slice %339 {offsets = [0, 0], sizes = [6, 36], strides = [1, 1]} : vector<6x128xf32> to vector<6x36xf32>
    %c0_304 = arith.constant 0 : index
    %c28_305 = arith.constant 28 : index
    %341 = vector.load %arg4[%c0_304, %c28_305] : memref<120x128xf32, #tpu.memory_space<vmem>>, vector<6x36xf32>
    tpu.vector_store %arg4[%c0_304, %c28_305], %340 {strides = array<i32>} : memref<120x128xf32, #tpu.memory_space<vmem>>, vector<6x36xf32>,
    %342 = vector.extract_strided_slice %339 {offsets = [0, 64], sizes = [6, 36], strides = [1, 1]} : vector<6x128xf32> to vector<6x36xf32>
    %c0_306 = arith.constant 0 : index
    %c92_307 = arith.constant 92 : index
    %343 = vector.load %arg4[%c0_306, %c92_307] : memref<120x128xf32, #tpu.memory_space<vmem>>, vector<6x36xf32>
    tpu.vector_store %arg4[%c0_306, %c92_307], %342 {strides = array<i32>} : memref<120x128xf32, #tpu.memory_space<vmem>>, vector<6x36xf32>,
    %344 = vector.extract_strided_slice %339 {offsets = [0, 0], sizes = [6, 40], strides = [1, 1]} : vector<6x128xf32> to vector<6x40xf32>
    %c8_308 = arith.constant 8 : index
    %c24_309 = arith.constant 24 : index
    %345 = vector.load %arg4[%c8_308, %c24_309] : memref<120x128xf32, #tpu.memory_space<vmem>>, vector<6x40xf32>
    tpu.vector_store %arg4[%c8_308, %c24_309], %344 {strides = array<i32>} : memref<120x128xf32, #tpu.memory_space<vmem>>, vector<6x40xf32>,
    %346 = vector.extract_strided_slice %339 {offsets = [0, 64], sizes = [6, 40], strides = [1, 1]} : vector<6x128xf32> to vector<6x40xf32>
    %c8_310 = arith.constant 8 : index
    %c88_311 = arith.constant 88 : index
    %347 = vector.load %arg4[%c8_310, %c88_311] : memref<120x128xf32, #tpu.memory_space<vmem>>, vector<6x40xf32>
    tpu.vector_store %arg4[%c8_310, %c88_311], %346 {strides = array<i32>} : memref<120x128xf32, #tpu.memory_space<vmem>>, vector<6x40xf32>,
    %348 = vector.extract_strided_slice %339 {offsets = [0, 0], sizes = [6, 44], strides = [1, 1]} : vector<6x128xf32> to vector<6x44xf32>
    %c16_312 = arith.constant 16 : index
    %c20_313 = arith.constant 20 : index
    %349 = vector.load %arg4[%c16_312, %c20_313] : memref<120x128xf32, #tpu.memory_space<vmem>>, vector<6x44xf32>
    tpu.vector_store %arg4[%c16_312, %c20_313], %348 {strides = array<i32>} : memref<120x128xf32, #tpu.memory_space<vmem>>, vector<6x44xf32>,
    %350 = vector.extract_strided_slice %339 {offsets = [0, 64], sizes = [6, 44], strides = [1, 1]} : vector<6x128xf32> to vector<6x44xf32>
    %c16_314 = arith.constant 16 : index
    %c84_315 = arith.constant 84 : index
    %351 = vector.load %arg4[%c16_314, %c84_315] : memref<120x128xf32, #tpu.memory_space<vmem>>, vector<6x44xf32>
    tpu.vector_store %arg4[%c16_314, %c84_315], %350 {strides = array<i32>} : memref<120x128xf32, #tpu.memory_space<vmem>>, vector<6x44xf32>,
    %352 = vector.extract_strided_slice %339 {offsets = [0, 0], sizes = [6, 48], strides = [1, 1]} : vector<6x128xf32> to vector<6x48xf32>
    %c24_316 = arith.constant 24 : index
    %c16_317 = arith.constant 16 : index
    %353 = vector.load %arg4[%c24_316, %c16_317] : memref<120x128xf32, #tpu.memory_space<vmem>>, vector<6x48xf32>
    tpu.vector_store %arg4[%c24_316, %c16_317], %352 {strides = array<i32>} : memref<120x128xf32, #tpu.memory_space<vmem>>, vector<6x48xf32>,
    %354 = vector.extract_strided_slice %339 {offsets = [0, 64], sizes = [6, 48], strides = [1, 1]} : vector<6x128xf32> to vector<6x48xf32>
    %c24_318 = arith.constant 24 : index
    %c80_319 = arith.constant 80 : index
    %355 = vector.load %arg4[%c24_318, %c80_319] : memref<120x128xf32, #tpu.memory_space<vmem>>, vector<6x48xf32>
    tpu.vector_store %arg4[%c24_318, %c80_319], %354 {strides = array<i32>} : memref<120x128xf32, #tpu.memory_space<vmem>>, vector<6x48xf32>,
    %356 = vector.extract_strided_slice %339 {offsets = [0, 0], sizes = [6, 52], strides = [1, 1]} : vector<6x128xf32> to vector<6x52xf32>
    %c32_320 = arith.constant 32 : index
    %c12_321 = arith.constant 12 : index
    %357 = vector.load %arg4[%c32_320, %c12_321] : memref<120x128xf32, #tpu.memory_space<vmem>>, vector<6x52xf32>
    tpu.vector_store %arg4[%c32_320, %c12_321], %356 {strides = array<i32>} : memref<120x128xf32, #tpu.memory_space<vmem>>, vector<6x52xf32>,
    %358 = vector.extract_strided_slice %339 {offsets = [0, 64], sizes = [6, 52], strides = [1, 1]} : vector<6x128xf32> to vector<6x52xf32>
    %c32_322 = arith.constant 32 : index
    %c76_323 = arith.constant 76 : index
    %359 = vector.load %arg4[%c32_322, %c76_323] : memref<120x128xf32, #tpu.memory_space<vmem>>, vector<6x52xf32>
    tpu.vector_store %arg4[%c32_322, %c76_323], %358 {strides = array<i32>} : memref<120x128xf32, #tpu.memory_space<vmem>>, vector<6x52xf32>,
    %360 = vector.extract_strided_slice %339 {offsets = [0, 0], sizes = [6, 56], strides = [1, 1]} : vector<6x128xf32> to vector<6x56xf32>
    %c40_324 = arith.constant 40 : index
    %c8_325 = arith.constant 8 : index
    %361 = vector.load %arg4[%c40_324, %c8_325] : memref<120x128xf32, #tpu.memory_space<vmem>>, vector<6x56xf32>
    tpu.vector_store %arg4[%c40_324, %c8_325], %360 {strides = array<i32>} : memref<120x128xf32, #tpu.memory_space<vmem>>, vector<6x56xf32>,
    %362 = vector.extract_strided_slice %339 {offsets = [0, 64], sizes = [6, 56], strides = [1, 1]} : vector<6x128xf32> to vector<6x56xf32>
    %c40_326 = arith.constant 40 : index
    %c72_327 = arith.constant 72 : index
    %363 = vector.load %arg4[%c40_326, %c72_327] : memref<120x128xf32, #tpu.memory_space<vmem>>, vector<6x56xf32>
    tpu.vector_store %arg4[%c40_326, %c72_327], %362 {strides = array<i32>} : memref<120x128xf32, #tpu.memory_space<vmem>>, vector<6x56xf32>,
    %364 = vector.extract_strided_slice %339 {offsets = [0, 0], sizes = [6, 60], strides = [1, 1]} : vector<6x128xf32> to vector<6x60xf32>
    %c48_328 = arith.constant 48 : index
    %c4_329 = arith.constant 4 : index
    %365 = vector.load %arg4[%c48_328, %c4_329] : memref<120x128xf32, #tpu.memory_space<vmem>>, vector<6x60xf32>
    tpu.vector_store %arg4[%c48_328, %c4_329], %364 {strides = array<i32>} : memref<120x128xf32, #tpu.memory_space<vmem>>, vector<6x60xf32>,
    %366 = vector.extract_strided_slice %339 {offsets = [0, 64], sizes = [6, 60], strides = [1, 1]} : vector<6x128xf32> to vector<6x60xf32>
    %c48_330 = arith.constant 48 : index
    %c68_331 = arith.constant 68 : index
    %367 = vector.load %arg4[%c48_330, %c68_331] : memref<120x128xf32, #tpu.memory_space<vmem>>, vector<6x60xf32>
    tpu.vector_store %arg4[%c48_330, %c68_331], %366 {strides = array<i32>} : memref<120x128xf32, #tpu.memory_space<vmem>>, vector<6x60xf32>,
    %c56_332 = arith.constant 56 : index
    %c0_333 = arith.constant 0 : index
    %368 = vector.load %arg4[%c56_332, %c0_333] : memref<120x128xf32, #tpu.memory_space<vmem>>, vector<6x128xf32>
    tpu.vector_store %arg4[%c56_332, %c0_333], %339 {strides = array<i32>} : memref<120x128xf32, #tpu.memory_space<vmem>>, vector<6x128xf32>,
    %369 = vector.extract_strided_slice %339 {offsets = [0, 4], sizes = [6, 60], strides = [1, 1]} : vector<6x128xf32> to vector<6x60xf32>
    %c64_334 = arith.constant 64 : index
    %c0_335 = arith.constant 0 : index
    %370 = vector.load %arg4[%c64_334, %c0_335] : memref<120x128xf32, #tpu.memory_space<vmem>>, vector<6x60xf32>
    tpu.vector_store %arg4[%c64_334, %c0_335], %369 {strides = array<i32>} : memref<120x128xf32, #tpu.memory_space<vmem>>, vector<6x60xf32>,
    %371 = vector.extract_strided_slice %339 {offsets = [0, 68], sizes = [6, 60], strides = [1, 1]} : vector<6x128xf32> to vector<6x60xf32>
    %c64_336 = arith.constant 64 : index
    %c64_337 = arith.constant 64 : index
    %372 = vector.load %arg4[%c64_336, %c64_337] : memref<120x128xf32, #tpu.memory_space<vmem>>, vector<6x60xf32>
    tpu.vector_store %arg4[%c64_336, %c64_337], %371 {strides = array<i32>} : memref<120x128xf32, #tpu.memory_space<vmem>>, vector<6x60xf32>,
    %373 = vector.extract_strided_slice %339 {offsets = [0, 8], sizes = [6, 56], strides = [1, 1]} : vector<6x128xf32> to vector<6x56xf32>
    %c72_338 = arith.constant 72 : index
    %c0_339 = arith.constant 0 : index
    %374 = vector.load %arg4[%c72_338, %c0_339] : memref<120x128xf32, #tpu.memory_space<vmem>>, vector<6x56xf32>
    tpu.vector_store %arg4[%c72_338, %c0_339], %373 {strides = array<i32>} : memref<120x128xf32, #tpu.memory_space<vmem>>, vector<6x56xf32>,
    %375 = vector.extract_strided_slice %339 {offsets = [0, 72], sizes = [6, 56], strides = [1, 1]} : vector<6x128xf32> to vector<6x56xf32>
    %c72_340 = arith.constant 72 : index
    %c64_341 = arith.constant 64 : index
    %376 = vector.load %arg4[%c72_340, %c64_341] : memref<120x128xf32, #tpu.memory_space<vmem>>, vector<6x56xf32>
    tpu.vector_store %arg4[%c72_340, %c64_341], %375 {strides = array<i32>} : memref<120x128xf32, #tpu.memory_space<vmem>>, vector<6x56xf32>,
    %377 = vector.extract_strided_slice %339 {offsets = [0, 12], sizes = [6, 52], strides = [1, 1]} : vector<6x128xf32> to vector<6x52xf32>
    %c80_342 = arith.constant 80 : index
    %c0_343 = arith.constant 0 : index
    %378 = vector.load %arg4[%c80_342, %c0_343] : memref<120x128xf32, #tpu.memory_space<vmem>>, vector<6x52xf32>
    tpu.vector_store %arg4[%c80_342, %c0_343], %377 {strides = array<i32>} : memref<120x128xf32, #tpu.memory_space<vmem>>, vector<6x52xf32>,
    %379 = vector.extract_strided_slice %339 {offsets = [0, 76], sizes = [6, 52], strides = [1, 1]} : vector<6x128xf32> to vector<6x52xf32>
    %c80_344 = arith.constant 80 : index
    %c64_345 = arith.constant 64 : index
    %380 = vector.load %arg4[%c80_344, %c64_345] : memref<120x128xf32, #tpu.memory_space<vmem>>, vector<6x52xf32>
    tpu.vector_store %arg4[%c80_344, %c64_345], %379 {strides = array<i32>} : memref<120x128xf32, #tpu.memory_space<vmem>>, vector<6x52xf32>,
    %381 = vector.extract_strided_slice %339 {offsets = [0, 16], sizes = [6, 48], strides = [1, 1]} : vector<6x128xf32> to vector<6x48xf32>
    %c88_346 = arith.constant 88 : index
    %c0_347 = arith.constant 0 : index
    %382 = vector.load %arg4[%c88_346, %c0_347] : memref<120x128xf32, #tpu.memory_space<vmem>>, vector<6x48xf32>
    tpu.vector_store %arg4[%c88_346, %c0_347], %381 {strides = array<i32>} : memref<120x128xf32, #tpu.memory_space<vmem>>, vector<6x48xf32>,
    %383 = vector.extract_strided_slice %339 {offsets = [0, 80], sizes = [6, 48], strides = [1, 1]} : vector<6x128xf32> to vector<6x48xf32>
    %c88_348 = arith.constant 88 : index
    %c64_349 = arith.constant 64 : index
    %384 = vector.load %arg4[%c88_348, %c64_349] : memref<120x128xf32, #tpu.memory_space<vmem>>, vector<6x48xf32>
    tpu.vector_store %arg4[%c88_348, %c64_349], %383 {strides = array<i32>} : memref<120x128xf32, #tpu.memory_space<vmem>>, vector<6x48xf32>,
    %385 = vector.extract_strided_slice %339 {offsets = [0, 20], sizes = [6, 44], strides = [1, 1]} : vector<6x128xf32> to vector<6x44xf32>
    %c96_350 = arith.constant 96 : index
    %c0_351 = arith.constant 0 : index
    %386 = vector.load %arg4[%c96_350, %c0_351] : memref<120x128xf32, #tpu.memory_space<vmem>>, vector<6x44xf32>
    tpu.vector_store %arg4[%c96_350, %c0_351], %385 {strides = array<i32>} : memref<120x128xf32, #tpu.memory_space<vmem>>, vector<6x44xf32>,
    %387 = vector.extract_strided_slice %339 {offsets = [0, 84], sizes = [6, 44], strides = [1, 1]} : vector<6x128xf32> to vector<6x44xf32>
    %c96_352 = arith.constant 96 : index
    %c64_353 = arith.constant 64 : index
    %388 = vector.load %arg4[%c96_352, %c64_353] : memref<120x128xf32, #tpu.memory_space<vmem>>, vector<6x44xf32>
    tpu.vector_store %arg4[%c96_352, %c64_353], %387 {strides = array<i32>} : memref<120x128xf32, #tpu.memory_space<vmem>>, vector<6x44xf32>,
    %389 = vector.extract_strided_slice %339 {offsets = [0, 24], sizes = [6, 40], strides = [1, 1]} : vector<6x128xf32> to vector<6x40xf32>
    %c104_354 = arith.constant 104 : index
    %c0_355 = arith.constant 0 : index
    %390 = vector.load %arg4[%c104_354, %c0_355] : memref<120x128xf32, #tpu.memory_space<vmem>>, vector<6x40xf32>
    tpu.vector_store %arg4[%c104_354, %c0_355], %389 {strides = array<i32>} : memref<120x128xf32, #tpu.memory_space<vmem>>, vector<6x40xf32>,
    %391 = vector.extract_strided_slice %339 {offsets = [0, 88], sizes = [6, 40], strides = [1, 1]} : vector<6x128xf32> to vector<6x40xf32>
    %c104_356 = arith.constant 104 : index
    %c64_357 = arith.constant 64 : index
    %392 = vector.load %arg4[%c104_356, %c64_357] : memref<120x128xf32, #tpu.memory_space<vmem>>, vector<6x40xf32>
    tpu.vector_store %arg4[%c104_356, %c64_357], %391 {strides = array<i32>} : memref<120x128xf32, #tpu.memory_space<vmem>>, vector<6x40xf32>,
    %393 = vector.extract_strided_slice %339 {offsets = [0, 28], sizes = [6, 36], strides = [1, 1]} : vector<6x128xf32> to vector<6x36xf32>
    %c112_358 = arith.constant 112 : index
    %c0_359 = arith.constant 0 : index
    %394 = vector.load %arg4[%c112_358, %c0_359] : memref<120x128xf32, #tpu.memory_space<vmem>>, vector<6x36xf32>
    tpu.vector_store %arg4[%c112_358, %c0_359], %393 {strides = array<i32>} : memref<120x128xf32, #tpu.memory_space<vmem>>, vector<6x36xf32>,
    %395 = vector.extract_strided_slice %339 {offsets = [0, 92], sizes = [6, 36], strides = [1, 1]} : vector<6x128xf32> to vector<6x36xf32>
    %c112_360 = arith.constant 112 : index
    %c64_361 = arith.constant 64 : index
    %396 = vector.load %arg4[%c112_360, %c64_361] : memref<120x128xf32, #tpu.memory_space<vmem>>, vector<6x36xf32>
    tpu.vector_store %arg4[%c112_360, %c64_361], %395 {strides = array<i32>} : memref<120x128xf32, #tpu.memory_space<vmem>>, vector<6x36xf32>,
    %c0_362 = arith.constant 0 : index
    %c640 = arith.constant 640 : index
    %397 = vector.load %arg2[%c0_362, %c640] : memref<8x2304xf32, #tpu.memory_space<vmem>>, vector<6x120xf32>
    %c0_363 = arith.constant 0 : index
    %c0_364 = arith.constant 0 : index
    %398 = vector.load %arg4[%c0_363, %c0_364] : memref<120x128xf32, #tpu.memory_space<vmem>>, vector<120x128xf32>
    %cst_365 = arith.constant dense<0.000000e+00> : vector<6x128xf32>
    %399 = tpu.matmul %397, %398, %cst_365 {dimension_numbers = #tpu.dot_dimension_numbers<[1], [0], [0], [1], [0, 0, 1, 1], [], []>} : vector<6x120xf32>, vector<120x128xf32>, vector<6x128xf32> -> vector<6x128xf32>
    %cst_366 = arith.constant 0.000000e+00 : f32
    %400 = vector.broadcast %cst_366 : f32 to vector<6x128xf32>
    %401 = arith.maximumf %399, %400 : vector<6x128xf32>
    %402 = arith.addf %401, %273 : vector<6x128xf32>
    %cst_367 = arith.constant 0.000000e+00 : f32
    %403 = vector.broadcast %cst_367 : f32 to vector<6x128xf32>
    %404 = arith.maximumf %402, %403 : vector<6x128xf32>
    %cst_368 = arith.constant 0.000000e+00 : f32
    %405 = vector.broadcast %cst_368 : f32 to vector<120x128xf32>
    %c0_369 = arith.constant 0 : index
    %c0_370 = arith.constant 0 : index
    %406 = vector.load %arg4[%c0_369, %c0_370] : memref<120x128xf32, #tpu.memory_space<vmem>>, vector<120x128xf32>
    tpu.vector_store %arg4[%c0_369, %c0_370], %405 {strides = array<i32>} : memref<120x128xf32, #tpu.memory_space<vmem>>, vector<120x128xf32>,
    %cst_371 = arith.constant 1.000000e+00 : f32
    %407 = vector.broadcast %cst_371 : f32 to vector<1x128xf32>
    %c63_372 = arith.constant 63 : index
    %c0_373 = arith.constant 0 : index
    %408 = vector.load %arg4[%c63_372, %c0_373] : memref<120x128xf32, #tpu.memory_space<vmem>>, vector<1x128xf32>
    tpu.vector_store %arg4[%c63_372, %c0_373], %407 {strides = array<i32>} : memref<120x128xf32, #tpu.memory_space<vmem>>, vector<1x128xf32>,
    %409 = vector.extract_strided_slice %404 {offsets = [0, 0], sizes = [6, 8], strides = [1, 1]} : vector<6x128xf32> to vector<6x8xf32>
    %c0_374 = arith.constant 0 : index
    %c56_375 = arith.constant 56 : index
    %410 = vector.load %arg4[%c0_374, %c56_375] : memref<120x128xf32, #tpu.memory_space<vmem>>, vector<6x8xf32>
    tpu.vector_store %arg4[%c0_374, %c56_375], %409 {strides = array<i32>} : memref<120x128xf32, #tpu.memory_space<vmem>>, vector<6x8xf32>,
    %411 = vector.extract_strided_slice %404 {offsets = [0, 64], sizes = [6, 8], strides = [1, 1]} : vector<6x128xf32> to vector<6x8xf32>
    %c0_376 = arith.constant 0 : index
    %c120 = arith.constant 120 : index
    %412 = vector.load %arg4[%c0_376, %c120] : memref<120x128xf32, #tpu.memory_space<vmem>>, vector<6x8xf32>
    tpu.vector_store %arg4[%c0_376, %c120], %411 {strides = array<i32>} : memref<120x128xf32, #tpu.memory_space<vmem>>, vector<6x8xf32>,
    %413 = vector.extract_strided_slice %404 {offsets = [0, 0], sizes = [6, 16], strides = [1, 1]} : vector<6x128xf32> to vector<6x16xf32>
    %c8_377 = arith.constant 8 : index
    %c48_378 = arith.constant 48 : index
    %414 = vector.load %arg4[%c8_377, %c48_378] : memref<120x128xf32, #tpu.memory_space<vmem>>, vector<6x16xf32>
    tpu.vector_store %arg4[%c8_377, %c48_378], %413 {strides = array<i32>} : memref<120x128xf32, #tpu.memory_space<vmem>>, vector<6x16xf32>,
    %415 = vector.extract_strided_slice %404 {offsets = [0, 64], sizes = [6, 16], strides = [1, 1]} : vector<6x128xf32> to vector<6x16xf32>
    %c8_379 = arith.constant 8 : index
    %c112_380 = arith.constant 112 : index
    %416 = vector.load %arg4[%c8_379, %c112_380] : memref<120x128xf32, #tpu.memory_space<vmem>>, vector<6x16xf32>
    tpu.vector_store %arg4[%c8_379, %c112_380], %415 {strides = array<i32>} : memref<120x128xf32, #tpu.memory_space<vmem>>, vector<6x16xf32>,
    %417 = vector.extract_strided_slice %404 {offsets = [0, 0], sizes = [6, 24], strides = [1, 1]} : vector<6x128xf32> to vector<6x24xf32>
    %c16_381 = arith.constant 16 : index
    %c40_382 = arith.constant 40 : index
    %418 = vector.load %arg4[%c16_381, %c40_382] : memref<120x128xf32, #tpu.memory_space<vmem>>, vector<6x24xf32>
    tpu.vector_store %arg4[%c16_381, %c40_382], %417 {strides = array<i32>} : memref<120x128xf32, #tpu.memory_space<vmem>>, vector<6x24xf32>,
    %419 = vector.extract_strided_slice %404 {offsets = [0, 64], sizes = [6, 24], strides = [1, 1]} : vector<6x128xf32> to vector<6x24xf32>
    %c16_383 = arith.constant 16 : index
    %c104_384 = arith.constant 104 : index
    %420 = vector.load %arg4[%c16_383, %c104_384] : memref<120x128xf32, #tpu.memory_space<vmem>>, vector<6x24xf32>
    tpu.vector_store %arg4[%c16_383, %c104_384], %419 {strides = array<i32>} : memref<120x128xf32, #tpu.memory_space<vmem>>, vector<6x24xf32>,
    %421 = vector.extract_strided_slice %404 {offsets = [0, 0], sizes = [6, 32], strides = [1, 1]} : vector<6x128xf32> to vector<6x32xf32>
    %c24_385 = arith.constant 24 : index
    %c32_386 = arith.constant 32 : index
    %422 = vector.load %arg4[%c24_385, %c32_386] : memref<120x128xf32, #tpu.memory_space<vmem>>, vector<6x32xf32>
    tpu.vector_store %arg4[%c24_385, %c32_386], %421 {strides = array<i32>} : memref<120x128xf32, #tpu.memory_space<vmem>>, vector<6x32xf32>,
    %423 = vector.extract_strided_slice %404 {offsets = [0, 64], sizes = [6, 32], strides = [1, 1]} : vector<6x128xf32> to vector<6x32xf32>
    %c24_387 = arith.constant 24 : index
    %c96_388 = arith.constant 96 : index
    %424 = vector.load %arg4[%c24_387, %c96_388] : memref<120x128xf32, #tpu.memory_space<vmem>>, vector<6x32xf32>
    tpu.vector_store %arg4[%c24_387, %c96_388], %423 {strides = array<i32>} : memref<120x128xf32, #tpu.memory_space<vmem>>, vector<6x32xf32>,
    %425 = vector.extract_strided_slice %404 {offsets = [0, 0], sizes = [6, 40], strides = [1, 1]} : vector<6x128xf32> to vector<6x40xf32>
    %c32_389 = arith.constant 32 : index
    %c24_390 = arith.constant 24 : index
    %426 = vector.load %arg4[%c32_389, %c24_390] : memref<120x128xf32, #tpu.memory_space<vmem>>, vector<6x40xf32>
    tpu.vector_store %arg4[%c32_389, %c24_390], %425 {strides = array<i32>} : memref<120x128xf32, #tpu.memory_space<vmem>>, vector<6x40xf32>,
    %427 = vector.extract_strided_slice %404 {offsets = [0, 64], sizes = [6, 40], strides = [1, 1]} : vector<6x128xf32> to vector<6x40xf32>
    %c32_391 = arith.constant 32 : index
    %c88_392 = arith.constant 88 : index
    %428 = vector.load %arg4[%c32_391, %c88_392] : memref<120x128xf32, #tpu.memory_space<vmem>>, vector<6x40xf32>
    tpu.vector_store %arg4[%c32_391, %c88_392], %427 {strides = array<i32>} : memref<120x128xf32, #tpu.memory_space<vmem>>, vector<6x40xf32>,
    %429 = vector.extract_strided_slice %404 {offsets = [0, 0], sizes = [6, 48], strides = [1, 1]} : vector<6x128xf32> to vector<6x48xf32>
    %c40_393 = arith.constant 40 : index
    %c16_394 = arith.constant 16 : index
    %430 = vector.load %arg4[%c40_393, %c16_394] : memref<120x128xf32, #tpu.memory_space<vmem>>, vector<6x48xf32>
    tpu.vector_store %arg4[%c40_393, %c16_394], %429 {strides = array<i32>} : memref<120x128xf32, #tpu.memory_space<vmem>>, vector<6x48xf32>,
    %431 = vector.extract_strided_slice %404 {offsets = [0, 64], sizes = [6, 48], strides = [1, 1]} : vector<6x128xf32> to vector<6x48xf32>
    %c40_395 = arith.constant 40 : index
    %c80_396 = arith.constant 80 : index
    %432 = vector.load %arg4[%c40_395, %c80_396] : memref<120x128xf32, #tpu.memory_space<vmem>>, vector<6x48xf32>
    tpu.vector_store %arg4[%c40_395, %c80_396], %431 {strides = array<i32>} : memref<120x128xf32, #tpu.memory_space<vmem>>, vector<6x48xf32>,
    %433 = vector.extract_strided_slice %404 {offsets = [0, 0], sizes = [6, 56], strides = [1, 1]} : vector<6x128xf32> to vector<6x56xf32>
    %c48_397 = arith.constant 48 : index
    %c8_398 = arith.constant 8 : index
    %434 = vector.load %arg4[%c48_397, %c8_398] : memref<120x128xf32, #tpu.memory_space<vmem>>, vector<6x56xf32>
    tpu.vector_store %arg4[%c48_397, %c8_398], %433 {strides = array<i32>} : memref<120x128xf32, #tpu.memory_space<vmem>>, vector<6x56xf32>,
    %435 = vector.extract_strided_slice %404 {offsets = [0, 64], sizes = [6, 56], strides = [1, 1]} : vector<6x128xf32> to vector<6x56xf32>
    %c48_399 = arith.constant 48 : index
    %c72_400 = arith.constant 72 : index
    %436 = vector.load %arg4[%c48_399, %c72_400] : memref<120x128xf32, #tpu.memory_space<vmem>>, vector<6x56xf32>
    tpu.vector_store %arg4[%c48_399, %c72_400], %435 {strides = array<i32>} : memref<120x128xf32, #tpu.memory_space<vmem>>, vector<6x56xf32>,
    %c56_401 = arith.constant 56 : index
    %c0_402 = arith.constant 0 : index
    %437 = vector.load %arg4[%c56_401, %c0_402] : memref<120x128xf32, #tpu.memory_space<vmem>>, vector<6x128xf32>
    tpu.vector_store %arg4[%c56_401, %c0_402], %404 {strides = array<i32>} : memref<120x128xf32, #tpu.memory_space<vmem>>, vector<6x128xf32>,
    %438 = vector.extract_strided_slice %404 {offsets = [0, 8], sizes = [6, 56], strides = [1, 1]} : vector<6x128xf32> to vector<6x56xf32>
    %c64_403 = arith.constant 64 : index
    %c0_404 = arith.constant 0 : index
    %439 = vector.load %arg4[%c64_403, %c0_404] : memref<120x128xf32, #tpu.memory_space<vmem>>, vector<6x56xf32>
    tpu.vector_store %arg4[%c64_403, %c0_404], %438 {strides = array<i32>} : memref<120x128xf32, #tpu.memory_space<vmem>>, vector<6x56xf32>,
    %440 = vector.extract_strided_slice %404 {offsets = [0, 72], sizes = [6, 56], strides = [1, 1]} : vector<6x128xf32> to vector<6x56xf32>
    %c64_405 = arith.constant 64 : index
    %c64_406 = arith.constant 64 : index
    %441 = vector.load %arg4[%c64_405, %c64_406] : memref<120x128xf32, #tpu.memory_space<vmem>>, vector<6x56xf32>
    tpu.vector_store %arg4[%c64_405, %c64_406], %440 {strides = array<i32>} : memref<120x128xf32, #tpu.memory_space<vmem>>, vector<6x56xf32>,
    %442 = vector.extract_strided_slice %404 {offsets = [0, 16], sizes = [6, 48], strides = [1, 1]} : vector<6x128xf32> to vector<6x48xf32>
    %c72_407 = arith.constant 72 : index
    %c0_408 = arith.constant 0 : index
    %443 = vector.load %arg4[%c72_407, %c0_408] : memref<120x128xf32, #tpu.memory_space<vmem>>, vector<6x48xf32>
    tpu.vector_store %arg4[%c72_407, %c0_408], %442 {strides = array<i32>} : memref<120x128xf32, #tpu.memory_space<vmem>>, vector<6x48xf32>,
    %444 = vector.extract_strided_slice %404 {offsets = [0, 80], sizes = [6, 48], strides = [1, 1]} : vector<6x128xf32> to vector<6x48xf32>
    %c72_409 = arith.constant 72 : index
    %c64_410 = arith.constant 64 : index
    %445 = vector.load %arg4[%c72_409, %c64_410] : memref<120x128xf32, #tpu.memory_space<vmem>>, vector<6x48xf32>
    tpu.vector_store %arg4[%c72_409, %c64_410], %444 {strides = array<i32>} : memref<120x128xf32, #tpu.memory_space<vmem>>, vector<6x48xf32>,
    %446 = vector.extract_strided_slice %404 {offsets = [0, 24], sizes = [6, 40], strides = [1, 1]} : vector<6x128xf32> to vector<6x40xf32>
    %c80_411 = arith.constant 80 : index
    %c0_412 = arith.constant 0 : index
    %447 = vector.load %arg4[%c80_411, %c0_412] : memref<120x128xf32, #tpu.memory_space<vmem>>, vector<6x40xf32>
    tpu.vector_store %arg4[%c80_411, %c0_412], %446 {strides = array<i32>} : memref<120x128xf32, #tpu.memory_space<vmem>>, vector<6x40xf32>,
    %448 = vector.extract_strided_slice %404 {offsets = [0, 88], sizes = [6, 40], strides = [1, 1]} : vector<6x128xf32> to vector<6x40xf32>
    %c80_413 = arith.constant 80 : index
    %c64_414 = arith.constant 64 : index
    %449 = vector.load %arg4[%c80_413, %c64_414] : memref<120x128xf32, #tpu.memory_space<vmem>>, vector<6x40xf32>
    tpu.vector_store %arg4[%c80_413, %c64_414], %448 {strides = array<i32>} : memref<120x128xf32, #tpu.memory_space<vmem>>, vector<6x40xf32>,
    %450 = vector.extract_strided_slice %404 {offsets = [0, 32], sizes = [6, 32], strides = [1, 1]} : vector<6x128xf32> to vector<6x32xf32>
    %c88_415 = arith.constant 88 : index
    %c0_416 = arith.constant 0 : index
    %451 = vector.load %arg4[%c88_415, %c0_416] : memref<120x128xf32, #tpu.memory_space<vmem>>, vector<6x32xf32>
    tpu.vector_store %arg4[%c88_415, %c0_416], %450 {strides = array<i32>} : memref<120x128xf32, #tpu.memory_space<vmem>>, vector<6x32xf32>,
    %452 = vector.extract_strided_slice %404 {offsets = [0, 96], sizes = [6, 32], strides = [1, 1]} : vector<6x128xf32> to vector<6x32xf32>
    %c88_417 = arith.constant 88 : index
    %c64_418 = arith.constant 64 : index
    %453 = vector.load %arg4[%c88_417, %c64_418] : memref<120x128xf32, #tpu.memory_space<vmem>>, vector<6x32xf32>
    tpu.vector_store %arg4[%c88_417, %c64_418], %452 {strides = array<i32>} : memref<120x128xf32, #tpu.memory_space<vmem>>, vector<6x32xf32>,
    %454 = vector.extract_strided_slice %404 {offsets = [0, 40], sizes = [6, 24], strides = [1, 1]} : vector<6x128xf32> to vector<6x24xf32>
    %c96_419 = arith.constant 96 : index
    %c0_420 = arith.constant 0 : index
    %455 = vector.load %arg4[%c96_419, %c0_420] : memref<120x128xf32, #tpu.memory_space<vmem>>, vector<6x24xf32>
    tpu.vector_store %arg4[%c96_419, %c0_420], %454 {strides = array<i32>} : memref<120x128xf32, #tpu.memory_space<vmem>>, vector<6x24xf32>,
    %456 = vector.extract_strided_slice %404 {offsets = [0, 104], sizes = [6, 24], strides = [1, 1]} : vector<6x128xf32> to vector<6x24xf32>
    %c96_421 = arith.constant 96 : index
    %c64_422 = arith.constant 64 : index
    %457 = vector.load %arg4[%c96_421, %c64_422] : memref<120x128xf32, #tpu.memory_space<vmem>>, vector<6x24xf32>
    tpu.vector_store %arg4[%c96_421, %c64_422], %456 {strides = array<i32>} : memref<120x128xf32, #tpu.memory_space<vmem>>, vector<6x24xf32>,
    %458 = vector.extract_strided_slice %404 {offsets = [0, 48], sizes = [6, 16], strides = [1, 1]} : vector<6x128xf32> to vector<6x16xf32>
    %c104_423 = arith.constant 104 : index
    %c0_424 = arith.constant 0 : index
    %459 = vector.load %arg4[%c104_423, %c0_424] : memref<120x128xf32, #tpu.memory_space<vmem>>, vector<6x16xf32>
    tpu.vector_store %arg4[%c104_423, %c0_424], %458 {strides = array<i32>} : memref<120x128xf32, #tpu.memory_space<vmem>>, vector<6x16xf32>,
    %460 = vector.extract_strided_slice %404 {offsets = [0, 112], sizes = [6, 16], strides = [1, 1]} : vector<6x128xf32> to vector<6x16xf32>
    %c104_425 = arith.constant 104 : index
    %c64_426 = arith.constant 64 : index
    %461 = vector.load %arg4[%c104_425, %c64_426] : memref<120x128xf32, #tpu.memory_space<vmem>>, vector<6x16xf32>
    tpu.vector_store %arg4[%c104_425, %c64_426], %460 {strides = array<i32>} : memref<120x128xf32, #tpu.memory_space<vmem>>, vector<6x16xf32>,
    %462 = vector.extract_strided_slice %404 {offsets = [0, 56], sizes = [6, 8], strides = [1, 1]} : vector<6x128xf32> to vector<6x8xf32>
    %c112_427 = arith.constant 112 : index
    %c0_428 = arith.constant 0 : index
    %463 = vector.load %arg4[%c112_427, %c0_428] : memref<120x128xf32, #tpu.memory_space<vmem>>, vector<6x8xf32>
    tpu.vector_store %arg4[%c112_427, %c0_428], %462 {strides = array<i32>} : memref<120x128xf32, #tpu.memory_space<vmem>>, vector<6x8xf32>,
    %464 = vector.extract_strided_slice %404 {offsets = [0, 120], sizes = [6, 8], strides = [1, 1]} : vector<6x128xf32> to vector<6x8xf32>
    %c112_429 = arith.constant 112 : index
    %c64_430 = arith.constant 64 : index
    %465 = vector.load %arg4[%c112_429, %c64_430] : memref<120x128xf32, #tpu.memory_space<vmem>>, vector<6x8xf32>
    tpu.vector_store %arg4[%c112_429, %c64_430], %464 {strides = array<i32>} : memref<120x128xf32, #tpu.memory_space<vmem>>, vector<6x8xf32>,
    %c0_431 = arith.constant 0 : index
    %c768 = arith.constant 768 : index
    %466 = vector.load %arg2[%c0_431, %c768] : memref<8x2304xf32, #tpu.memory_space<vmem>>, vector<6x120xf32>
    %c0_432 = arith.constant 0 : index
    %c0_433 = arith.constant 0 : index
    %467 = vector.load %arg4[%c0_432, %c0_433] : memref<120x128xf32, #tpu.memory_space<vmem>>, vector<120x128xf32>
    %cst_434 = arith.constant dense<0.000000e+00> : vector<6x128xf32>
    %468 = tpu.matmul %466, %467, %cst_434 {dimension_numbers = #tpu.dot_dimension_numbers<[1], [0], [0], [1], [0, 0, 1, 1], [], []>} : vector<6x120xf32>, vector<120x128xf32>, vector<6x128xf32> -> vector<6x128xf32>
    %cst_435 = arith.constant 0.000000e+00 : f32
    %469 = vector.broadcast %cst_435 : f32 to vector<6x128xf32>
    %470 = arith.maximumf %468, %469 : vector<6x128xf32>
    %471 = vector.extract_strided_slice %470 {offsets = [0, 0], sizes = [6, 8], strides = [1, 1]} : vector<6x128xf32> to vector<6x8xf32>
    %c0_436 = arith.constant 0 : index
    %c56_437 = arith.constant 56 : index
    %472 = vector.load %arg4[%c0_436, %c56_437] : memref<120x128xf32, #tpu.memory_space<vmem>>, vector<6x8xf32>
    tpu.vector_store %arg4[%c0_436, %c56_437], %471 {strides = array<i32>} : memref<120x128xf32, #tpu.memory_space<vmem>>, vector<6x8xf32>,
    %473 = vector.extract_strided_slice %470 {offsets = [0, 64], sizes = [6, 8], strides = [1, 1]} : vector<6x128xf32> to vector<6x8xf32>
    %c0_438 = arith.constant 0 : index
    %c120_439 = arith.constant 120 : index
    %474 = vector.load %arg4[%c0_438, %c120_439] : memref<120x128xf32, #tpu.memory_space<vmem>>, vector<6x8xf32>
    tpu.vector_store %arg4[%c0_438, %c120_439], %473 {strides = array<i32>} : memref<120x128xf32, #tpu.memory_space<vmem>>, vector<6x8xf32>,
    %475 = vector.extract_strided_slice %470 {offsets = [0, 0], sizes = [6, 16], strides = [1, 1]} : vector<6x128xf32> to vector<6x16xf32>
    %c8_440 = arith.constant 8 : index
    %c48_441 = arith.constant 48 : index
    %476 = vector.load %arg4[%c8_440, %c48_441] : memref<120x128xf32, #tpu.memory_space<vmem>>, vector<6x16xf32>
    tpu.vector_store %arg4[%c8_440, %c48_441], %475 {strides = array<i32>} : memref<120x128xf32, #tpu.memory_space<vmem>>, vector<6x16xf32>,
    %477 = vector.extract_strided_slice %470 {offsets = [0, 64], sizes = [6, 16], strides = [1, 1]} : vector<6x128xf32> to vector<6x16xf32>
    %c8_442 = arith.constant 8 : index
    %c112_443 = arith.constant 112 : index
    %478 = vector.load %arg4[%c8_442, %c112_443] : memref<120x128xf32, #tpu.memory_space<vmem>>, vector<6x16xf32>
    tpu.vector_store %arg4[%c8_442, %c112_443], %477 {strides = array<i32>} : memref<120x128xf32, #tpu.memory_space<vmem>>, vector<6x16xf32>,
    %479 = vector.extract_strided_slice %470 {offsets = [0, 0], sizes = [6, 24], strides = [1, 1]} : vector<6x128xf32> to vector<6x24xf32>
    %c16_444 = arith.constant 16 : index
    %c40_445 = arith.constant 40 : index
    %480 = vector.load %arg4[%c16_444, %c40_445] : memref<120x128xf32, #tpu.memory_space<vmem>>, vector<6x24xf32>
    tpu.vector_store %arg4[%c16_444, %c40_445], %479 {strides = array<i32>} : memref<120x128xf32, #tpu.memory_space<vmem>>, vector<6x24xf32>,
    %481 = vector.extract_strided_slice %470 {offsets = [0, 64], sizes = [6, 24], strides = [1, 1]} : vector<6x128xf32> to vector<6x24xf32>
    %c16_446 = arith.constant 16 : index
    %c104_447 = arith.constant 104 : index
    %482 = vector.load %arg4[%c16_446, %c104_447] : memref<120x128xf32, #tpu.memory_space<vmem>>, vector<6x24xf32>
    tpu.vector_store %arg4[%c16_446, %c104_447], %481 {strides = array<i32>} : memref<120x128xf32, #tpu.memory_space<vmem>>, vector<6x24xf32>,
    %483 = vector.extract_strided_slice %470 {offsets = [0, 0], sizes = [6, 32], strides = [1, 1]} : vector<6x128xf32> to vector<6x32xf32>
    %c24_448 = arith.constant 24 : index
    %c32_449 = arith.constant 32 : index
    %484 = vector.load %arg4[%c24_448, %c32_449] : memref<120x128xf32, #tpu.memory_space<vmem>>, vector<6x32xf32>
    tpu.vector_store %arg4[%c24_448, %c32_449], %483 {strides = array<i32>} : memref<120x128xf32, #tpu.memory_space<vmem>>, vector<6x32xf32>,
    %485 = vector.extract_strided_slice %470 {offsets = [0, 64], sizes = [6, 32], strides = [1, 1]} : vector<6x128xf32> to vector<6x32xf32>
    %c24_450 = arith.constant 24 : index
    %c96_451 = arith.constant 96 : index
    %486 = vector.load %arg4[%c24_450, %c96_451] : memref<120x128xf32, #tpu.memory_space<vmem>>, vector<6x32xf32>
    tpu.vector_store %arg4[%c24_450, %c96_451], %485 {strides = array<i32>} : memref<120x128xf32, #tpu.memory_space<vmem>>, vector<6x32xf32>,
    %487 = vector.extract_strided_slice %470 {offsets = [0, 0], sizes = [6, 40], strides = [1, 1]} : vector<6x128xf32> to vector<6x40xf32>
    %c32_452 = arith.constant 32 : index
    %c24_453 = arith.constant 24 : index
    %488 = vector.load %arg4[%c32_452, %c24_453] : memref<120x128xf32, #tpu.memory_space<vmem>>, vector<6x40xf32>
    tpu.vector_store %arg4[%c32_452, %c24_453], %487 {strides = array<i32>} : memref<120x128xf32, #tpu.memory_space<vmem>>, vector<6x40xf32>,
    %489 = vector.extract_strided_slice %470 {offsets = [0, 64], sizes = [6, 40], strides = [1, 1]} : vector<6x128xf32> to vector<6x40xf32>
    %c32_454 = arith.constant 32 : index
    %c88_455 = arith.constant 88 : index
    %490 = vector.load %arg4[%c32_454, %c88_455] : memref<120x128xf32, #tpu.memory_space<vmem>>, vector<6x40xf32>
    tpu.vector_store %arg4[%c32_454, %c88_455], %489 {strides = array<i32>} : memref<120x128xf32, #tpu.memory_space<vmem>>, vector<6x40xf32>,
    %491 = vector.extract_strided_slice %470 {offsets = [0, 0], sizes = [6, 48], strides = [1, 1]} : vector<6x128xf32> to vector<6x48xf32>
    %c40_456 = arith.constant 40 : index
    %c16_457 = arith.constant 16 : index
    %492 = vector.load %arg4[%c40_456, %c16_457] : memref<120x128xf32, #tpu.memory_space<vmem>>, vector<6x48xf32>
    tpu.vector_store %arg4[%c40_456, %c16_457], %491 {strides = array<i32>} : memref<120x128xf32, #tpu.memory_space<vmem>>, vector<6x48xf32>,
    %493 = vector.extract_strided_slice %470 {offsets = [0, 64], sizes = [6, 48], strides = [1, 1]} : vector<6x128xf32> to vector<6x48xf32>
    %c40_458 = arith.constant 40 : index
    %c80_459 = arith.constant 80 : index
    %494 = vector.load %arg4[%c40_458, %c80_459] : memref<120x128xf32, #tpu.memory_space<vmem>>, vector<6x48xf32>
    tpu.vector_store %arg4[%c40_458, %c80_459], %493 {strides = array<i32>} : memref<120x128xf32, #tpu.memory_space<vmem>>, vector<6x48xf32>,
    %495 = vector.extract_strided_slice %470 {offsets = [0, 0], sizes = [6, 56], strides = [1, 1]} : vector<6x128xf32> to vector<6x56xf32>
    %c48_460 = arith.constant 48 : index
    %c8_461 = arith.constant 8 : index
    %496 = vector.load %arg4[%c48_460, %c8_461] : memref<120x128xf32, #tpu.memory_space<vmem>>, vector<6x56xf32>
    tpu.vector_store %arg4[%c48_460, %c8_461], %495 {strides = array<i32>} : memref<120x128xf32, #tpu.memory_space<vmem>>, vector<6x56xf32>,
    %497 = vector.extract_strided_slice %470 {offsets = [0, 64], sizes = [6, 56], strides = [1, 1]} : vector<6x128xf32> to vector<6x56xf32>
    %c48_462 = arith.constant 48 : index
    %c72_463 = arith.constant 72 : index
    %498 = vector.load %arg4[%c48_462, %c72_463] : memref<120x128xf32, #tpu.memory_space<vmem>>, vector<6x56xf32>
    tpu.vector_store %arg4[%c48_462, %c72_463], %497 {strides = array<i32>} : memref<120x128xf32, #tpu.memory_space<vmem>>, vector<6x56xf32>,
    %c56_464 = arith.constant 56 : index
    %c0_465 = arith.constant 0 : index
    %499 = vector.load %arg4[%c56_464, %c0_465] : memref<120x128xf32, #tpu.memory_space<vmem>>, vector<6x128xf32>
    tpu.vector_store %arg4[%c56_464, %c0_465], %470 {strides = array<i32>} : memref<120x128xf32, #tpu.memory_space<vmem>>, vector<6x128xf32>,
    %500 = vector.extract_strided_slice %470 {offsets = [0, 8], sizes = [6, 56], strides = [1, 1]} : vector<6x128xf32> to vector<6x56xf32>
    %c64_466 = arith.constant 64 : index
    %c0_467 = arith.constant 0 : index
    %501 = vector.load %arg4[%c64_466, %c0_467] : memref<120x128xf32, #tpu.memory_space<vmem>>, vector<6x56xf32>
    tpu.vector_store %arg4[%c64_466, %c0_467], %500 {strides = array<i32>} : memref<120x128xf32, #tpu.memory_space<vmem>>, vector<6x56xf32>,
    %502 = vector.extract_strided_slice %470 {offsets = [0, 72], sizes = [6, 56], strides = [1, 1]} : vector<6x128xf32> to vector<6x56xf32>
    %c64_468 = arith.constant 64 : index
    %c64_469 = arith.constant 64 : index
    %503 = vector.load %arg4[%c64_468, %c64_469] : memref<120x128xf32, #tpu.memory_space<vmem>>, vector<6x56xf32>
    tpu.vector_store %arg4[%c64_468, %c64_469], %502 {strides = array<i32>} : memref<120x128xf32, #tpu.memory_space<vmem>>, vector<6x56xf32>,
    %504 = vector.extract_strided_slice %470 {offsets = [0, 16], sizes = [6, 48], strides = [1, 1]} : vector<6x128xf32> to vector<6x48xf32>
    %c72_470 = arith.constant 72 : index
    %c0_471 = arith.constant 0 : index
    %505 = vector.load %arg4[%c72_470, %c0_471] : memref<120x128xf32, #tpu.memory_space<vmem>>, vector<6x48xf32>
    tpu.vector_store %arg4[%c72_470, %c0_471], %504 {strides = array<i32>} : memref<120x128xf32, #tpu.memory_space<vmem>>, vector<6x48xf32>,
    %506 = vector.extract_strided_slice %470 {offsets = [0, 80], sizes = [6, 48], strides = [1, 1]} : vector<6x128xf32> to vector<6x48xf32>
    %c72_472 = arith.constant 72 : index
    %c64_473 = arith.constant 64 : index
    %507 = vector.load %arg4[%c72_472, %c64_473] : memref<120x128xf32, #tpu.memory_space<vmem>>, vector<6x48xf32>
    tpu.vector_store %arg4[%c72_472, %c64_473], %506 {strides = array<i32>} : memref<120x128xf32, #tpu.memory_space<vmem>>, vector<6x48xf32>,
    %508 = vector.extract_strided_slice %470 {offsets = [0, 24], sizes = [6, 40], strides = [1, 1]} : vector<6x128xf32> to vector<6x40xf32>
    %c80_474 = arith.constant 80 : index
    %c0_475 = arith.constant 0 : index
    %509 = vector.load %arg4[%c80_474, %c0_475] : memref<120x128xf32, #tpu.memory_space<vmem>>, vector<6x40xf32>
    tpu.vector_store %arg4[%c80_474, %c0_475], %508 {strides = array<i32>} : memref<120x128xf32, #tpu.memory_space<vmem>>, vector<6x40xf32>,
    %510 = vector.extract_strided_slice %470 {offsets = [0, 88], sizes = [6, 40], strides = [1, 1]} : vector<6x128xf32> to vector<6x40xf32>
    %c80_476 = arith.constant 80 : index
    %c64_477 = arith.constant 64 : index
    %511 = vector.load %arg4[%c80_476, %c64_477] : memref<120x128xf32, #tpu.memory_space<vmem>>, vector<6x40xf32>
    tpu.vector_store %arg4[%c80_476, %c64_477], %510 {strides = array<i32>} : memref<120x128xf32, #tpu.memory_space<vmem>>, vector<6x40xf32>,
    %512 = vector.extract_strided_slice %470 {offsets = [0, 32], sizes = [6, 32], strides = [1, 1]} : vector<6x128xf32> to vector<6x32xf32>
    %c88_478 = arith.constant 88 : index
    %c0_479 = arith.constant 0 : index
    %513 = vector.load %arg4[%c88_478, %c0_479] : memref<120x128xf32, #tpu.memory_space<vmem>>, vector<6x32xf32>
    tpu.vector_store %arg4[%c88_478, %c0_479], %512 {strides = array<i32>} : memref<120x128xf32, #tpu.memory_space<vmem>>, vector<6x32xf32>,
    %514 = vector.extract_strided_slice %470 {offsets = [0, 96], sizes = [6, 32], strides = [1, 1]} : vector<6x128xf32> to vector<6x32xf32>
    %c88_480 = arith.constant 88 : index
    %c64_481 = arith.constant 64 : index
    %515 = vector.load %arg4[%c88_480, %c64_481] : memref<120x128xf32, #tpu.memory_space<vmem>>, vector<6x32xf32>
    tpu.vector_store %arg4[%c88_480, %c64_481], %514 {strides = array<i32>} : memref<120x128xf32, #tpu.memory_space<vmem>>, vector<6x32xf32>,
    %516 = vector.extract_strided_slice %470 {offsets = [0, 40], sizes = [6, 24], strides = [1, 1]} : vector<6x128xf32> to vector<6x24xf32>
    %c96_482 = arith.constant 96 : index
    %c0_483 = arith.constant 0 : index
    %517 = vector.load %arg4[%c96_482, %c0_483] : memref<120x128xf32, #tpu.memory_space<vmem>>, vector<6x24xf32>
    tpu.vector_store %arg4[%c96_482, %c0_483], %516 {strides = array<i32>} : memref<120x128xf32, #tpu.memory_space<vmem>>, vector<6x24xf32>,
    %518 = vector.extract_strided_slice %470 {offsets = [0, 104], sizes = [6, 24], strides = [1, 1]} : vector<6x128xf32> to vector<6x24xf32>
    %c96_484 = arith.constant 96 : index
    %c64_485 = arith.constant 64 : index
    %519 = vector.load %arg4[%c96_484, %c64_485] : memref<120x128xf32, #tpu.memory_space<vmem>>, vector<6x24xf32>
    tpu.vector_store %arg4[%c96_484, %c64_485], %518 {strides = array<i32>} : memref<120x128xf32, #tpu.memory_space<vmem>>, vector<6x24xf32>,
    %520 = vector.extract_strided_slice %470 {offsets = [0, 48], sizes = [6, 16], strides = [1, 1]} : vector<6x128xf32> to vector<6x16xf32>
    %c104_486 = arith.constant 104 : index
    %c0_487 = arith.constant 0 : index
    %521 = vector.load %arg4[%c104_486, %c0_487] : memref<120x128xf32, #tpu.memory_space<vmem>>, vector<6x16xf32>
    tpu.vector_store %arg4[%c104_486, %c0_487], %520 {strides = array<i32>} : memref<120x128xf32, #tpu.memory_space<vmem>>, vector<6x16xf32>,
    %522 = vector.extract_strided_slice %470 {offsets = [0, 112], sizes = [6, 16], strides = [1, 1]} : vector<6x128xf32> to vector<6x16xf32>
    %c104_488 = arith.constant 104 : index
    %c64_489 = arith.constant 64 : index
    %523 = vector.load %arg4[%c104_488, %c64_489] : memref<120x128xf32, #tpu.memory_space<vmem>>, vector<6x16xf32>
    tpu.vector_store %arg4[%c104_488, %c64_489], %522 {strides = array<i32>} : memref<120x128xf32, #tpu.memory_space<vmem>>, vector<6x16xf32>,
    %524 = vector.extract_strided_slice %470 {offsets = [0, 56], sizes = [6, 8], strides = [1, 1]} : vector<6x128xf32> to vector<6x8xf32>
    %c112_490 = arith.constant 112 : index
    %c0_491 = arith.constant 0 : index
    %525 = vector.load %arg4[%c112_490, %c0_491] : memref<120x128xf32, #tpu.memory_space<vmem>>, vector<6x8xf32>
    tpu.vector_store %arg4[%c112_490, %c0_491], %524 {strides = array<i32>} : memref<120x128xf32, #tpu.memory_space<vmem>>, vector<6x8xf32>,
    %526 = vector.extract_strided_slice %470 {offsets = [0, 120], sizes = [6, 8], strides = [1, 1]} : vector<6x128xf32> to vector<6x8xf32>
    %c112_492 = arith.constant 112 : index
    %c64_493 = arith.constant 64 : index
    %527 = vector.load %arg4[%c112_492, %c64_493] : memref<120x128xf32, #tpu.memory_space<vmem>>, vector<6x8xf32>
    tpu.vector_store %arg4[%c112_492, %c64_493], %526 {strides = array<i32>} : memref<120x128xf32, #tpu.memory_space<vmem>>, vector<6x8xf32>,
    %c0_494 = arith.constant 0 : index
    %c896 = arith.constant 896 : index
    %528 = vector.load %arg2[%c0_494, %c896] : memref<8x2304xf32, #tpu.memory_space<vmem>>, vector<6x120xf32>
    %c0_495 = arith.constant 0 : index
    %c0_496 = arith.constant 0 : index
    %529 = vector.load %arg4[%c0_495, %c0_496] : memref<120x128xf32, #tpu.memory_space<vmem>>, vector<120x128xf32>
    %cst_497 = arith.constant dense<0.000000e+00> : vector<6x128xf32>
    %530 = tpu.matmul %528, %529, %cst_497 {dimension_numbers = #tpu.dot_dimension_numbers<[1], [0], [0], [1], [0, 0, 1, 1], [], []>} : vector<6x120xf32>, vector<120x128xf32>, vector<6x128xf32> -> vector<6x128xf32>
    %cst_498 = arith.constant 0.000000e+00 : f32
    %531 = vector.broadcast %cst_498 : f32 to vector<6x128xf32>
    %532 = arith.maximumf %530, %531 : vector<6x128xf32>
    %533 = arith.addf %532, %404 : vector<6x128xf32>
    %cst_499 = arith.constant 0.000000e+00 : f32
    %534 = vector.broadcast %cst_499 : f32 to vector<6x128xf32>
    %535 = arith.maximumf %533, %534 : vector<6x128xf32>
    %cst_500 = arith.constant 0.000000e+00 : f32
    %536 = vector.broadcast %cst_500 : f32 to vector<56x128xf32>
    %c0_501 = arith.constant 0 : index
    %c0_502 = arith.constant 0 : index
    %537 = vector.load %arg4[%c0_501, %c0_502] : memref<120x128xf32, #tpu.memory_space<vmem>>, vector<56x128xf32>
    tpu.vector_store %arg4[%c0_501, %c0_502], %536 {strides = array<i32>} : memref<120x128xf32, #tpu.memory_space<vmem>>, vector<56x128xf32>,
    %cst_503 = arith.constant 1.000000e+00 : f32
    %538 = vector.broadcast %cst_503 : f32 to vector<1x128xf32>
    %c31 = arith.constant 31 : index
    %c0_504 = arith.constant 0 : index
    %539 = vector.load %arg4[%c31, %c0_504] : memref<120x128xf32, #tpu.memory_space<vmem>>, vector<1x128xf32>
    tpu.vector_store %arg4[%c31, %c0_504], %538 {strides = array<i32>} : memref<120x128xf32, #tpu.memory_space<vmem>>, vector<1x128xf32>,
    %540 = vector.extract_strided_slice %535 {offsets = [0, 0], sizes = [6, 16], strides = [1, 1]} : vector<6x128xf32> to vector<6x16xf32>
    %c0_505 = arith.constant 0 : index
    %c48_506 = arith.constant 48 : index
    %541 = vector.load %arg4[%c0_505, %c48_506] : memref<120x128xf32, #tpu.memory_space<vmem>>, vector<6x16xf32>
    tpu.vector_store %arg4[%c0_505, %c48_506], %540 {strides = array<i32>} : memref<120x128xf32, #tpu.memory_space<vmem>>, vector<6x16xf32>,
    %542 = vector.extract_strided_slice %535 {offsets = [0, 64], sizes = [6, 16], strides = [1, 1]} : vector<6x128xf32> to vector<6x16xf32>
    %c0_507 = arith.constant 0 : index
    %c112_508 = arith.constant 112 : index
    %543 = vector.load %arg4[%c0_507, %c112_508] : memref<120x128xf32, #tpu.memory_space<vmem>>, vector<6x16xf32>
    tpu.vector_store %arg4[%c0_507, %c112_508], %542 {strides = array<i32>} : memref<120x128xf32, #tpu.memory_space<vmem>>, vector<6x16xf32>,
    %544 = vector.extract_strided_slice %535 {offsets = [0, 0], sizes = [6, 32], strides = [1, 1]} : vector<6x128xf32> to vector<6x32xf32>
    %c8_509 = arith.constant 8 : index
    %c32_510 = arith.constant 32 : index
    %545 = vector.load %arg4[%c8_509, %c32_510] : memref<120x128xf32, #tpu.memory_space<vmem>>, vector<6x32xf32>
    tpu.vector_store %arg4[%c8_509, %c32_510], %544 {strides = array<i32>} : memref<120x128xf32, #tpu.memory_space<vmem>>, vector<6x32xf32>,
    %546 = vector.extract_strided_slice %535 {offsets = [0, 64], sizes = [6, 32], strides = [1, 1]} : vector<6x128xf32> to vector<6x32xf32>
    %c8_511 = arith.constant 8 : index
    %c96_512 = arith.constant 96 : index
    %547 = vector.load %arg4[%c8_511, %c96_512] : memref<120x128xf32, #tpu.memory_space<vmem>>, vector<6x32xf32>
    tpu.vector_store %arg4[%c8_511, %c96_512], %546 {strides = array<i32>} : memref<120x128xf32, #tpu.memory_space<vmem>>, vector<6x32xf32>,
    %548 = vector.extract_strided_slice %535 {offsets = [0, 0], sizes = [6, 48], strides = [1, 1]} : vector<6x128xf32> to vector<6x48xf32>
    %c16_513 = arith.constant 16 : index
    %c16_514 = arith.constant 16 : index
    %549 = vector.load %arg4[%c16_513, %c16_514] : memref<120x128xf32, #tpu.memory_space<vmem>>, vector<6x48xf32>
    tpu.vector_store %arg4[%c16_513, %c16_514], %548 {strides = array<i32>} : memref<120x128xf32, #tpu.memory_space<vmem>>, vector<6x48xf32>,
    %550 = vector.extract_strided_slice %535 {offsets = [0, 64], sizes = [6, 48], strides = [1, 1]} : vector<6x128xf32> to vector<6x48xf32>
    %c16_515 = arith.constant 16 : index
    %c80_516 = arith.constant 80 : index
    %551 = vector.load %arg4[%c16_515, %c80_516] : memref<120x128xf32, #tpu.memory_space<vmem>>, vector<6x48xf32>
    tpu.vector_store %arg4[%c16_515, %c80_516], %550 {strides = array<i32>} : memref<120x128xf32, #tpu.memory_space<vmem>>, vector<6x48xf32>,
    %c24_517 = arith.constant 24 : index
    %c0_518 = arith.constant 0 : index
    %552 = vector.load %arg4[%c24_517, %c0_518] : memref<120x128xf32, #tpu.memory_space<vmem>>, vector<6x128xf32>
    tpu.vector_store %arg4[%c24_517, %c0_518], %535 {strides = array<i32>} : memref<120x128xf32, #tpu.memory_space<vmem>>, vector<6x128xf32>,
    %553 = vector.extract_strided_slice %535 {offsets = [0, 16], sizes = [6, 48], strides = [1, 1]} : vector<6x128xf32> to vector<6x48xf32>
    %c32_519 = arith.constant 32 : index
    %c0_520 = arith.constant 0 : index
    %554 = vector.load %arg4[%c32_519, %c0_520] : memref<120x128xf32, #tpu.memory_space<vmem>>, vector<6x48xf32>
    tpu.vector_store %arg4[%c32_519, %c0_520], %553 {strides = array<i32>} : memref<120x128xf32, #tpu.memory_space<vmem>>, vector<6x48xf32>,
    %555 = vector.extract_strided_slice %535 {offsets = [0, 80], sizes = [6, 48], strides = [1, 1]} : vector<6x128xf32> to vector<6x48xf32>
    %c32_521 = arith.constant 32 : index
    %c64_522 = arith.constant 64 : index
    %556 = vector.load %arg4[%c32_521, %c64_522] : memref<120x128xf32, #tpu.memory_space<vmem>>, vector<6x48xf32>
    tpu.vector_store %arg4[%c32_521, %c64_522], %555 {strides = array<i32>} : memref<120x128xf32, #tpu.memory_space<vmem>>, vector<6x48xf32>,
    %557 = vector.extract_strided_slice %535 {offsets = [0, 32], sizes = [6, 32], strides = [1, 1]} : vector<6x128xf32> to vector<6x32xf32>
    %c40_523 = arith.constant 40 : index
    %c0_524 = arith.constant 0 : index
    %558 = vector.load %arg4[%c40_523, %c0_524] : memref<120x128xf32, #tpu.memory_space<vmem>>, vector<6x32xf32>
    tpu.vector_store %arg4[%c40_523, %c0_524], %557 {strides = array<i32>} : memref<120x128xf32, #tpu.memory_space<vmem>>, vector<6x32xf32>,
    %559 = vector.extract_strided_slice %535 {offsets = [0, 96], sizes = [6, 32], strides = [1, 1]} : vector<6x128xf32> to vector<6x32xf32>
    %c40_525 = arith.constant 40 : index
    %c64_526 = arith.constant 64 : index
    %560 = vector.load %arg4[%c40_525, %c64_526] : memref<120x128xf32, #tpu.memory_space<vmem>>, vector<6x32xf32>
    tpu.vector_store %arg4[%c40_525, %c64_526], %559 {strides = array<i32>} : memref<120x128xf32, #tpu.memory_space<vmem>>, vector<6x32xf32>,
    %561 = vector.extract_strided_slice %535 {offsets = [0, 48], sizes = [6, 16], strides = [1, 1]} : vector<6x128xf32> to vector<6x16xf32>
    %c48_527 = arith.constant 48 : index
    %c0_528 = arith.constant 0 : index
    %562 = vector.load %arg4[%c48_527, %c0_528] : memref<120x128xf32, #tpu.memory_space<vmem>>, vector<6x16xf32>
    tpu.vector_store %arg4[%c48_527, %c0_528], %561 {strides = array<i32>} : memref<120x128xf32, #tpu.memory_space<vmem>>, vector<6x16xf32>,
    %563 = vector.extract_strided_slice %535 {offsets = [0, 112], sizes = [6, 16], strides = [1, 1]} : vector<6x128xf32> to vector<6x16xf32>
    %c48_529 = arith.constant 48 : index
    %c64_530 = arith.constant 64 : index
    %564 = vector.load %arg4[%c48_529, %c64_530] : memref<120x128xf32, #tpu.memory_space<vmem>>, vector<6x16xf32>
    tpu.vector_store %arg4[%c48_529, %c64_530], %563 {strides = array<i32>} : memref<120x128xf32, #tpu.memory_space<vmem>>, vector<6x16xf32>,
    %c0_531 = arith.constant 0 : index
    %c1024 = arith.constant 1024 : index
    %565 = vector.load %arg2[%c0_531, %c1024] : memref<8x2304xf32, #tpu.memory_space<vmem>>, vector<6x56xf32>
    %c0_532 = arith.constant 0 : index
    %c0_533 = arith.constant 0 : index
    %566 = vector.load %arg4[%c0_532, %c0_533] : memref<120x128xf32, #tpu.memory_space<vmem>>, vector<56x128xf32>
    %cst_534 = arith.constant dense<0.000000e+00> : vector<6x128xf32>
    %567 = tpu.matmul %565, %566, %cst_534 {dimension_numbers = #tpu.dot_dimension_numbers<[1], [0], [0], [1], [0, 0, 1, 1], [], []>} : vector<6x56xf32>, vector<56x128xf32>, vector<6x128xf32> -> vector<6x128xf32>
    %cst_535 = arith.constant 0.000000e+00 : f32
    %568 = vector.broadcast %cst_535 : f32 to vector<6x128xf32>
    %569 = arith.maximumf %567, %568 : vector<6x128xf32>
    %570 = vector.extract_strided_slice %569 {offsets = [0, 0], sizes = [6, 16], strides = [1, 1]} : vector<6x128xf32> to vector<6x16xf32>
    %c0_536 = arith.constant 0 : index
    %c48_537 = arith.constant 48 : index
    %571 = vector.load %arg4[%c0_536, %c48_537] : memref<120x128xf32, #tpu.memory_space<vmem>>, vector<6x16xf32>
    tpu.vector_store %arg4[%c0_536, %c48_537], %570 {strides = array<i32>} : memref<120x128xf32, #tpu.memory_space<vmem>>, vector<6x16xf32>,
    %572 = vector.extract_strided_slice %569 {offsets = [0, 64], sizes = [6, 16], strides = [1, 1]} : vector<6x128xf32> to vector<6x16xf32>
    %c0_538 = arith.constant 0 : index
    %c112_539 = arith.constant 112 : index
    %573 = vector.load %arg4[%c0_538, %c112_539] : memref<120x128xf32, #tpu.memory_space<vmem>>, vector<6x16xf32>
    tpu.vector_store %arg4[%c0_538, %c112_539], %572 {strides = array<i32>} : memref<120x128xf32, #tpu.memory_space<vmem>>, vector<6x16xf32>,
    %574 = vector.extract_strided_slice %569 {offsets = [0, 0], sizes = [6, 32], strides = [1, 1]} : vector<6x128xf32> to vector<6x32xf32>
    %c8_540 = arith.constant 8 : index
    %c32_541 = arith.constant 32 : index
    %575 = vector.load %arg4[%c8_540, %c32_541] : memref<120x128xf32, #tpu.memory_space<vmem>>, vector<6x32xf32>
    tpu.vector_store %arg4[%c8_540, %c32_541], %574 {strides = array<i32>} : memref<120x128xf32, #tpu.memory_space<vmem>>, vector<6x32xf32>,
    %576 = vector.extract_strided_slice %569 {offsets = [0, 64], sizes = [6, 32], strides = [1, 1]} : vector<6x128xf32> to vector<6x32xf32>
    %c8_542 = arith.constant 8 : index
    %c96_543 = arith.constant 96 : index
    %577 = vector.load %arg4[%c8_542, %c96_543] : memref<120x128xf32, #tpu.memory_space<vmem>>, vector<6x32xf32>
    tpu.vector_store %arg4[%c8_542, %c96_543], %576 {strides = array<i32>} : memref<120x128xf32, #tpu.memory_space<vmem>>, vector<6x32xf32>,
    %578 = vector.extract_strided_slice %569 {offsets = [0, 0], sizes = [6, 48], strides = [1, 1]} : vector<6x128xf32> to vector<6x48xf32>
    %c16_544 = arith.constant 16 : index
    %c16_545 = arith.constant 16 : index
    %579 = vector.load %arg4[%c16_544, %c16_545] : memref<120x128xf32, #tpu.memory_space<vmem>>, vector<6x48xf32>
    tpu.vector_store %arg4[%c16_544, %c16_545], %578 {strides = array<i32>} : memref<120x128xf32, #tpu.memory_space<vmem>>, vector<6x48xf32>,
    %580 = vector.extract_strided_slice %569 {offsets = [0, 64], sizes = [6, 48], strides = [1, 1]} : vector<6x128xf32> to vector<6x48xf32>
    %c16_546 = arith.constant 16 : index
    %c80_547 = arith.constant 80 : index
    %581 = vector.load %arg4[%c16_546, %c80_547] : memref<120x128xf32, #tpu.memory_space<vmem>>, vector<6x48xf32>
    tpu.vector_store %arg4[%c16_546, %c80_547], %580 {strides = array<i32>} : memref<120x128xf32, #tpu.memory_space<vmem>>, vector<6x48xf32>,
    %c24_548 = arith.constant 24 : index
    %c0_549 = arith.constant 0 : index
    %582 = vector.load %arg4[%c24_548, %c0_549] : memref<120x128xf32, #tpu.memory_space<vmem>>, vector<6x128xf32>
    tpu.vector_store %arg4[%c24_548, %c0_549], %569 {strides = array<i32>} : memref<120x128xf32, #tpu.memory_space<vmem>>, vector<6x128xf32>,
    %583 = vector.extract_strided_slice %569 {offsets = [0, 16], sizes = [6, 48], strides = [1, 1]} : vector<6x128xf32> to vector<6x48xf32>
    %c32_550 = arith.constant 32 : index
    %c0_551 = arith.constant 0 : index
    %584 = vector.load %arg4[%c32_550, %c0_551] : memref<120x128xf32, #tpu.memory_space<vmem>>, vector<6x48xf32>
    tpu.vector_store %arg4[%c32_550, %c0_551], %583 {strides = array<i32>} : memref<120x128xf32, #tpu.memory_space<vmem>>, vector<6x48xf32>,
    %585 = vector.extract_strided_slice %569 {offsets = [0, 80], sizes = [6, 48], strides = [1, 1]} : vector<6x128xf32> to vector<6x48xf32>
    %c32_552 = arith.constant 32 : index
    %c64_553 = arith.constant 64 : index
    %586 = vector.load %arg4[%c32_552, %c64_553] : memref<120x128xf32, #tpu.memory_space<vmem>>, vector<6x48xf32>
    tpu.vector_store %arg4[%c32_552, %c64_553], %585 {strides = array<i32>} : memref<120x128xf32, #tpu.memory_space<vmem>>, vector<6x48xf32>,
    %587 = vector.extract_strided_slice %569 {offsets = [0, 32], sizes = [6, 32], strides = [1, 1]} : vector<6x128xf32> to vector<6x32xf32>
    %c40_554 = arith.constant 40 : index
    %c0_555 = arith.constant 0 : index
    %588 = vector.load %arg4[%c40_554, %c0_555] : memref<120x128xf32, #tpu.memory_space<vmem>>, vector<6x32xf32>
    tpu.vector_store %arg4[%c40_554, %c0_555], %587 {strides = array<i32>} : memref<120x128xf32, #tpu.memory_space<vmem>>, vector<6x32xf32>,
    %589 = vector.extract_strided_slice %569 {offsets = [0, 96], sizes = [6, 32], strides = [1, 1]} : vector<6x128xf32> to vector<6x32xf32>
    %c40_556 = arith.constant 40 : index
    %c64_557 = arith.constant 64 : index
    %590 = vector.load %arg4[%c40_556, %c64_557] : memref<120x128xf32, #tpu.memory_space<vmem>>, vector<6x32xf32>
    tpu.vector_store %arg4[%c40_556, %c64_557], %589 {strides = array<i32>} : memref<120x128xf32, #tpu.memory_space<vmem>>, vector<6x32xf32>,
    %591 = vector.extract_strided_slice %569 {offsets = [0, 48], sizes = [6, 16], strides = [1, 1]} : vector<6x128xf32> to vector<6x16xf32>
    %c48_558 = arith.constant 48 : index
    %c0_559 = arith.constant 0 : index
    %592 = vector.load %arg4[%c48_558, %c0_559] : memref<120x128xf32, #tpu.memory_space<vmem>>, vector<6x16xf32>
    tpu.vector_store %arg4[%c48_558, %c0_559], %591 {strides = array<i32>} : memref<120x128xf32, #tpu.memory_space<vmem>>, vector<6x16xf32>,
    %593 = vector.extract_strided_slice %569 {offsets = [0, 112], sizes = [6, 16], strides = [1, 1]} : vector<6x128xf32> to vector<6x16xf32>
    %c48_560 = arith.constant 48 : index
    %c64_561 = arith.constant 64 : index
    %594 = vector.load %arg4[%c48_560, %c64_561] : memref<120x128xf32, #tpu.memory_space<vmem>>, vector<6x16xf32>
    tpu.vector_store %arg4[%c48_560, %c64_561], %593 {strides = array<i32>} : memref<120x128xf32, #tpu.memory_space<vmem>>, vector<6x16xf32>,
    %c0_562 = arith.constant 0 : index
    %c1152 = arith.constant 1152 : index
    %595 = vector.load %arg2[%c0_562, %c1152] : memref<8x2304xf32, #tpu.memory_space<vmem>>, vector<6x56xf32>
    %c0_563 = arith.constant 0 : index
    %c0_564 = arith.constant 0 : index
    %596 = vector.load %arg4[%c0_563, %c0_564] : memref<120x128xf32, #tpu.memory_space<vmem>>, vector<56x128xf32>
    %cst_565 = arith.constant dense<0.000000e+00> : vector<6x128xf32>
    %597 = tpu.matmul %595, %596, %cst_565 {dimension_numbers = #tpu.dot_dimension_numbers<[1], [0], [0], [1], [0, 0, 1, 1], [], []>} : vector<6x56xf32>, vector<56x128xf32>, vector<6x128xf32> -> vector<6x128xf32>
    %cst_566 = arith.constant 0.000000e+00 : f32
    %598 = vector.broadcast %cst_566 : f32 to vector<6x128xf32>
    %599 = arith.maximumf %597, %598 : vector<6x128xf32>
    %600 = arith.addf %599, %535 : vector<6x128xf32>
    %cst_567 = arith.constant 0.000000e+00 : f32
    %601 = vector.broadcast %cst_567 : f32 to vector<6x128xf32>
    %602 = arith.maximumf %600, %601 : vector<6x128xf32>
    %cst_568 = arith.constant 0.000000e+00 : f32
    %603 = vector.broadcast %cst_568 : f32 to vector<24x128xf32>
    %c0_569 = arith.constant 0 : index
    %c0_570 = arith.constant 0 : index
    %604 = vector.load %arg4[%c0_569, %c0_570] : memref<120x128xf32, #tpu.memory_space<vmem>>, vector<24x128xf32>
    tpu.vector_store %arg4[%c0_569, %c0_570], %603 {strides = array<i32>} : memref<120x128xf32, #tpu.memory_space<vmem>>, vector<24x128xf32>,
    %cst_571 = arith.constant 1.000000e+00 : f32
    %605 = vector.broadcast %cst_571 : f32 to vector<1x128xf32>
    %c15 = arith.constant 15 : index
    %c0_572 = arith.constant 0 : index
    %606 = vector.load %arg4[%c15, %c0_572] : memref<120x128xf32, #tpu.memory_space<vmem>>, vector<1x128xf32>
    tpu.vector_store %arg4[%c15, %c0_572], %605 {strides = array<i32>} : memref<120x128xf32, #tpu.memory_space<vmem>>, vector<1x128xf32>,
    %607 = vector.extract_strided_slice %602 {offsets = [0, 0], sizes = [6, 32], strides = [1, 1]} : vector<6x128xf32> to vector<6x32xf32>
    %c0_573 = arith.constant 0 : index
    %c32_574 = arith.constant 32 : index
    %608 = vector.load %arg4[%c0_573, %c32_574] : memref<120x128xf32, #tpu.memory_space<vmem>>, vector<6x32xf32>
    tpu.vector_store %arg4[%c0_573, %c32_574], %607 {strides = array<i32>} : memref<120x128xf32, #tpu.memory_space<vmem>>, vector<6x32xf32>,
    %609 = vector.extract_strided_slice %602 {offsets = [0, 64], sizes = [6, 32], strides = [1, 1]} : vector<6x128xf32> to vector<6x32xf32>
    %c0_575 = arith.constant 0 : index
    %c96_576 = arith.constant 96 : index
    %610 = vector.load %arg4[%c0_575, %c96_576] : memref<120x128xf32, #tpu.memory_space<vmem>>, vector<6x32xf32>
    tpu.vector_store %arg4[%c0_575, %c96_576], %609 {strides = array<i32>} : memref<120x128xf32, #tpu.memory_space<vmem>>, vector<6x32xf32>,
    %c8_577 = arith.constant 8 : index
    %c0_578 = arith.constant 0 : index
    %611 = vector.load %arg4[%c8_577, %c0_578] : memref<120x128xf32, #tpu.memory_space<vmem>>, vector<6x128xf32>
    tpu.vector_store %arg4[%c8_577, %c0_578], %602 {strides = array<i32>} : memref<120x128xf32, #tpu.memory_space<vmem>>, vector<6x128xf32>,
    %612 = vector.extract_strided_slice %602 {offsets = [0, 32], sizes = [6, 32], strides = [1, 1]} : vector<6x128xf32> to vector<6x32xf32>
    %c16_579 = arith.constant 16 : index
    %c0_580 = arith.constant 0 : index
    %613 = vector.load %arg4[%c16_579, %c0_580] : memref<120x128xf32, #tpu.memory_space<vmem>>, vector<6x32xf32>
    tpu.vector_store %arg4[%c16_579, %c0_580], %612 {strides = array<i32>} : memref<120x128xf32, #tpu.memory_space<vmem>>, vector<6x32xf32>,
    %614 = vector.extract_strided_slice %602 {offsets = [0, 96], sizes = [6, 32], strides = [1, 1]} : vector<6x128xf32> to vector<6x32xf32>
    %c16_581 = arith.constant 16 : index
    %c64_582 = arith.constant 64 : index
    %615 = vector.load %arg4[%c16_581, %c64_582] : memref<120x128xf32, #tpu.memory_space<vmem>>, vector<6x32xf32>
    tpu.vector_store %arg4[%c16_581, %c64_582], %614 {strides = array<i32>} : memref<120x128xf32, #tpu.memory_space<vmem>>, vector<6x32xf32>,
    %c0_583 = arith.constant 0 : index
    %c1280 = arith.constant 1280 : index
    %616 = vector.load %arg2[%c0_583, %c1280] : memref<8x2304xf32, #tpu.memory_space<vmem>>, vector<6x24xf32>
    %c0_584 = arith.constant 0 : index
    %c0_585 = arith.constant 0 : index
    %617 = vector.load %arg4[%c0_584, %c0_585] : memref<120x128xf32, #tpu.memory_space<vmem>>, vector<24x128xf32>
    %cst_586 = arith.constant dense<0.000000e+00> : vector<6x128xf32>
    %618 = tpu.matmul %616, %617, %cst_586 {dimension_numbers = #tpu.dot_dimension_numbers<[1], [0], [0], [1], [0, 0, 1, 1], [], []>} : vector<6x24xf32>, vector<24x128xf32>, vector<6x128xf32> -> vector<6x128xf32>
    %cst_587 = arith.constant 0.000000e+00 : f32
    %619 = vector.broadcast %cst_587 : f32 to vector<6x128xf32>
    %620 = arith.maximumf %618, %619 : vector<6x128xf32>
    %621 = vector.extract_strided_slice %620 {offsets = [0, 0], sizes = [6, 32], strides = [1, 1]} : vector<6x128xf32> to vector<6x32xf32>
    %c0_588 = arith.constant 0 : index
    %c32_589 = arith.constant 32 : index
    %622 = vector.load %arg4[%c0_588, %c32_589] : memref<120x128xf32, #tpu.memory_space<vmem>>, vector<6x32xf32>
    tpu.vector_store %arg4[%c0_588, %c32_589], %621 {strides = array<i32>} : memref<120x128xf32, #tpu.memory_space<vmem>>, vector<6x32xf32>,
    %623 = vector.extract_strided_slice %620 {offsets = [0, 64], sizes = [6, 32], strides = [1, 1]} : vector<6x128xf32> to vector<6x32xf32>
    %c0_590 = arith.constant 0 : index
    %c96_591 = arith.constant 96 : index
    %624 = vector.load %arg4[%c0_590, %c96_591] : memref<120x128xf32, #tpu.memory_space<vmem>>, vector<6x32xf32>
    tpu.vector_store %arg4[%c0_590, %c96_591], %623 {strides = array<i32>} : memref<120x128xf32, #tpu.memory_space<vmem>>, vector<6x32xf32>,
    %c8_592 = arith.constant 8 : index
    %c0_593 = arith.constant 0 : index
    %625 = vector.load %arg4[%c8_592, %c0_593] : memref<120x128xf32, #tpu.memory_space<vmem>>, vector<6x128xf32>
    tpu.vector_store %arg4[%c8_592, %c0_593], %620 {strides = array<i32>} : memref<120x128xf32, #tpu.memory_space<vmem>>, vector<6x128xf32>,
    %626 = vector.extract_strided_slice %620 {offsets = [0, 32], sizes = [6, 32], strides = [1, 1]} : vector<6x128xf32> to vector<6x32xf32>
    %c16_594 = arith.constant 16 : index
    %c0_595 = arith.constant 0 : index
    %627 = vector.load %arg4[%c16_594, %c0_595] : memref<120x128xf32, #tpu.memory_space<vmem>>, vector<6x32xf32>
    tpu.vector_store %arg4[%c16_594, %c0_595], %626 {strides = array<i32>} : memref<120x128xf32, #tpu.memory_space<vmem>>, vector<6x32xf32>,
    %628 = vector.extract_strided_slice %620 {offsets = [0, 96], sizes = [6, 32], strides = [1, 1]} : vector<6x128xf32> to vector<6x32xf32>
    %c16_596 = arith.constant 16 : index
    %c64_597 = arith.constant 64 : index
    %629 = vector.load %arg4[%c16_596, %c64_597] : memref<120x128xf32, #tpu.memory_space<vmem>>, vector<6x32xf32>
    tpu.vector_store %arg4[%c16_596, %c64_597], %628 {strides = array<i32>} : memref<120x128xf32, #tpu.memory_space<vmem>>, vector<6x32xf32>,
    %c0_598 = arith.constant 0 : index
    %c1408 = arith.constant 1408 : index
    %630 = vector.load %arg2[%c0_598, %c1408] : memref<8x2304xf32, #tpu.memory_space<vmem>>, vector<6x24xf32>
    %c0_599 = arith.constant 0 : index
    %c0_600 = arith.constant 0 : index
    %631 = vector.load %arg4[%c0_599, %c0_600] : memref<120x128xf32, #tpu.memory_space<vmem>>, vector<24x128xf32>
    %cst_601 = arith.constant dense<0.000000e+00> : vector<6x128xf32>
    %632 = tpu.matmul %630, %631, %cst_601 {dimension_numbers = #tpu.dot_dimension_numbers<[1], [0], [0], [1], [0, 0, 1, 1], [], []>} : vector<6x24xf32>, vector<24x128xf32>, vector<6x128xf32> -> vector<6x128xf32>
    %cst_602 = arith.constant 0.000000e+00 : f32
    %633 = vector.broadcast %cst_602 : f32 to vector<6x128xf32>
    %634 = arith.maximumf %632, %633 : vector<6x128xf32>
    %635 = arith.addf %634, %602 : vector<6x128xf32>
    %cst_603 = arith.constant 0.000000e+00 : f32
    %636 = vector.broadcast %cst_603 : f32 to vector<6x128xf32>
    %637 = arith.maximumf %635, %636 : vector<6x128xf32>
    %cst_604 = arith.constant 0.000000e+00 : f32
    %638 = vector.broadcast %cst_604 : f32 to vector<8x128xf32>
    %c0_605 = arith.constant 0 : index
    %c0_606 = arith.constant 0 : index
    %639 = vector.load %arg4[%c0_605, %c0_606] : memref<120x128xf32, #tpu.memory_space<vmem>>, vector<8x128xf32>
    tpu.vector_store %arg4[%c0_605, %c0_606], %638 {strides = array<i32>} : memref<120x128xf32, #tpu.memory_space<vmem>>, vector<8x128xf32>,
    %cst_607 = arith.constant 1.000000e+00 : f32
    %640 = vector.broadcast %cst_607 : f32 to vector<1x128xf32>
    %c7_608 = arith.constant 7 : index
    %c0_609 = arith.constant 0 : index
    %641 = vector.load %arg4[%c7_608, %c0_609] : memref<120x128xf32, #tpu.memory_space<vmem>>, vector<1x128xf32>
    tpu.vector_store %arg4[%c7_608, %c0_609], %640 {strides = array<i32>} : memref<120x128xf32, #tpu.memory_space<vmem>>, vector<1x128xf32>,
    %c0_610 = arith.constant 0 : index
    %c0_611 = arith.constant 0 : index
    %642 = vector.load %arg4[%c0_610, %c0_611] : memref<120x128xf32, #tpu.memory_space<vmem>>, vector<6x128xf32>
    tpu.vector_store %arg4[%c0_610, %c0_611], %637 {strides = array<i32>} : memref<120x128xf32, #tpu.memory_space<vmem>>, vector<6x128xf32>,
    %c0_612 = arith.constant 0 : index
    %c1536 = arith.constant 1536 : index
    %643 = vector.load %arg2[%c0_612, %c1536] : memref<8x2304xf32, #tpu.memory_space<vmem>>, vector<6x8xf32>
    %c0_613 = arith.constant 0 : index
    %c0_614 = arith.constant 0 : index
    %644 = vector.load %arg4[%c0_613, %c0_614] : memref<120x128xf32, #tpu.memory_space<vmem>>, vector<8x128xf32>
    %cst_615 = arith.constant dense<0.000000e+00> : vector<6x128xf32>
    %645 = tpu.matmul %643, %644, %cst_615 {dimension_numbers = #tpu.dot_dimension_numbers<[1], [0], [0], [1], [0, 0, 1, 1], [], []>} : vector<6x8xf32>, vector<8x128xf32>, vector<6x128xf32> -> vector<6x128xf32>
    %cst_616 = arith.constant 0.000000e+00 : f32
    %646 = vector.broadcast %cst_616 : f32 to vector<6x128xf32>
    %647 = arith.maximumf %645, %646 : vector<6x128xf32>
    %c0_617 = arith.constant 0 : index
    %c0_618 = arith.constant 0 : index
    %648 = vector.load %arg4[%c0_617, %c0_618] : memref<120x128xf32, #tpu.memory_space<vmem>>, vector<6x128xf32>
    tpu.vector_store %arg4[%c0_617, %c0_618], %647 {strides = array<i32>} : memref<120x128xf32, #tpu.memory_space<vmem>>, vector<6x128xf32>,
    %c0_619 = arith.constant 0 : index
    %c1664 = arith.constant 1664 : index
    %649 = vector.load %arg2[%c0_619, %c1664] : memref<8x2304xf32, #tpu.memory_space<vmem>>, vector<6x8xf32>
    %c0_620 = arith.constant 0 : index
    %c0_621 = arith.constant 0 : index
    %650 = vector.load %arg4[%c0_620, %c0_621] : memref<120x128xf32, #tpu.memory_space<vmem>>, vector<8x128xf32>
    %cst_622 = arith.constant dense<0.000000e+00> : vector<6x128xf32>
    %651 = tpu.matmul %649, %650, %cst_622 {dimension_numbers = #tpu.dot_dimension_numbers<[1], [0], [0], [1], [0, 0, 1, 1], [], []>} : vector<6x8xf32>, vector<8x128xf32>, vector<6x128xf32> -> vector<6x128xf32>
    %cst_623 = arith.constant 0.000000e+00 : f32
    %652 = vector.broadcast %cst_623 : f32 to vector<6x128xf32>
    %653 = arith.maximumf %651, %652 : vector<6x128xf32>
    %654 = arith.addf %653, %637 : vector<6x128xf32>
    %cst_624 = arith.constant 0.000000e+00 : f32
    %655 = vector.broadcast %cst_624 : f32 to vector<6x128xf32>
    %656 = arith.maximumf %654, %655 : vector<6x128xf32>
    %cst_625 = arith.constant 0.000000e+00 : f32
    %657 = vector.broadcast %cst_625 : f32 to vector<8x128xf32>
    %c0_626 = arith.constant 0 : index
    %c0_627 = arith.constant 0 : index
    %658 = vector.load %arg4[%c0_626, %c0_627] : memref<120x128xf32, #tpu.memory_space<vmem>>, vector<8x128xf32>
    tpu.vector_store %arg4[%c0_626, %c0_627], %657 {strides = array<i32>} : memref<120x128xf32, #tpu.memory_space<vmem>>, vector<8x128xf32>,
    %cst_628 = arith.constant 1.000000e+00 : f32
    %659 = vector.broadcast %cst_628 : f32 to vector<1x128xf32>
    %c7_629 = arith.constant 7 : index
    %c0_630 = arith.constant 0 : index
    %660 = vector.load %arg4[%c7_629, %c0_630] : memref<120x128xf32, #tpu.memory_space<vmem>>, vector<1x128xf32>
    tpu.vector_store %arg4[%c7_629, %c0_630], %659 {strides = array<i32>} : memref<120x128xf32, #tpu.memory_space<vmem>>, vector<1x128xf32>,
    %c0_631 = arith.constant 0 : index
    %c0_632 = arith.constant 0 : index
    %661 = vector.load %arg4[%c0_631, %c0_632] : memref<120x128xf32, #tpu.memory_space<vmem>>, vector<6x128xf32>
    tpu.vector_store %arg4[%c0_631, %c0_632], %656 {strides = array<i32>} : memref<120x128xf32, #tpu.memory_space<vmem>>, vector<6x128xf32>,
    %c0_633 = arith.constant 0 : index
    %c1792 = arith.constant 1792 : index
    %662 = vector.load %arg2[%c0_633, %c1792] : memref<8x2304xf32, #tpu.memory_space<vmem>>, vector<6x8xf32>
    %c0_634 = arith.constant 0 : index
    %c0_635 = arith.constant 0 : index
    %663 = vector.load %arg4[%c0_634, %c0_635] : memref<120x128xf32, #tpu.memory_space<vmem>>, vector<8x128xf32>
    %cst_636 = arith.constant dense<0.000000e+00> : vector<6x128xf32>
    %664 = tpu.matmul %662, %663, %cst_636 {dimension_numbers = #tpu.dot_dimension_numbers<[1], [0], [0], [1], [0, 0, 1, 1], [], []>} : vector<6x8xf32>, vector<8x128xf32>, vector<6x128xf32> -> vector<6x128xf32>
    %cst_637 = arith.constant 0.000000e+00 : f32
    %665 = vector.broadcast %cst_637 : f32 to vector<6x128xf32>
    %666 = arith.maximumf %664, %665 : vector<6x128xf32>
    %c0_638 = arith.constant 0 : index
    %c0_639 = arith.constant 0 : index
    %667 = vector.load %arg4[%c0_638, %c0_639] : memref<120x128xf32, #tpu.memory_space<vmem>>, vector<6x128xf32>
    tpu.vector_store %arg4[%c0_638, %c0_639], %666 {strides = array<i32>} : memref<120x128xf32, #tpu.memory_space<vmem>>, vector<6x128xf32>,
    %c0_640 = arith.constant 0 : index
    %c1920 = arith.constant 1920 : index
    %668 = vector.load %arg2[%c0_640, %c1920] : memref<8x2304xf32, #tpu.memory_space<vmem>>, vector<6x8xf32>
    %c0_641 = arith.constant 0 : index
    %c0_642 = arith.constant 0 : index
    %669 = vector.load %arg4[%c0_641, %c0_642] : memref<120x128xf32, #tpu.memory_space<vmem>>, vector<8x128xf32>
    %cst_643 = arith.constant dense<0.000000e+00> : vector<6x128xf32>
    %670 = tpu.matmul %668, %669, %cst_643 {dimension_numbers = #tpu.dot_dimension_numbers<[1], [0], [0], [1], [0, 0, 1, 1], [], []>} : vector<6x8xf32>, vector<8x128xf32>, vector<6x128xf32> -> vector<6x128xf32>
    %cst_644 = arith.constant 0.000000e+00 : f32
    %671 = vector.broadcast %cst_644 : f32 to vector<6x128xf32>
    %672 = arith.maximumf %670, %671 : vector<6x128xf32>
    %673 = arith.addf %672, %656 : vector<6x128xf32>
    %cst_645 = arith.constant 0.000000e+00 : f32
    %674 = vector.broadcast %cst_645 : f32 to vector<6x128xf32>
    %675 = arith.maximumf %673, %674 : vector<6x128xf32>
    %cst_646 = arith.constant 0.000000e+00 : f32
    %676 = vector.broadcast %cst_646 : f32 to vector<8x128xf32>
    %c0_647 = arith.constant 0 : index
    %c0_648 = arith.constant 0 : index
    %677 = vector.load %arg4[%c0_647, %c0_648] : memref<120x128xf32, #tpu.memory_space<vmem>>, vector<8x128xf32>
    tpu.vector_store %arg4[%c0_647, %c0_648], %676 {strides = array<i32>} : memref<120x128xf32, #tpu.memory_space<vmem>>, vector<8x128xf32>,
    %cst_649 = arith.constant 1.000000e+00 : f32
    %678 = vector.broadcast %cst_649 : f32 to vector<1x128xf32>
    %c7_650 = arith.constant 7 : index
    %c0_651 = arith.constant 0 : index
    %679 = vector.load %arg4[%c7_650, %c0_651] : memref<120x128xf32, #tpu.memory_space<vmem>>, vector<1x128xf32>
    tpu.vector_store %arg4[%c7_650, %c0_651], %678 {strides = array<i32>} : memref<120x128xf32, #tpu.memory_space<vmem>>, vector<1x128xf32>,
    %c0_652 = arith.constant 0 : index
    %c0_653 = arith.constant 0 : index
    %680 = vector.load %arg4[%c0_652, %c0_653] : memref<120x128xf32, #tpu.memory_space<vmem>>, vector<6x128xf32>
    tpu.vector_store %arg4[%c0_652, %c0_653], %675 {strides = array<i32>} : memref<120x128xf32, #tpu.memory_space<vmem>>, vector<6x128xf32>,
    %c0_654 = arith.constant 0 : index
    %c2048 = arith.constant 2048 : index
    %681 = vector.load %arg2[%c0_654, %c2048] : memref<8x2304xf32, #tpu.memory_space<vmem>>, vector<5x8xf32>
    %c0_655 = arith.constant 0 : index
    %c0_656 = arith.constant 0 : index
    %682 = vector.load %arg4[%c0_655, %c0_656] : memref<120x128xf32, #tpu.memory_space<vmem>>, vector<8x128xf32>
    %cst_657 = arith.constant dense<0.000000e+00> : vector<5x128xf32>
    %683 = tpu.matmul %681, %682, %cst_657 {dimension_numbers = #tpu.dot_dimension_numbers<[1], [0], [0], [1], [0, 0, 1, 1], [], []>} : vector<5x8xf32>, vector<8x128xf32>, vector<5x128xf32> -> vector<5x128xf32>
    %cst_658 = arith.constant 0.000000e+00 : f32
    %684 = vector.broadcast %cst_658 : f32 to vector<5x128xf32>
    %685 = arith.maximumf %683, %684 : vector<5x128xf32>
    %c0_659 = arith.constant 0 : index
    %c0_660 = arith.constant 0 : index
    %686 = vector.load %arg4[%c0_659, %c0_660] : memref<120x128xf32, #tpu.memory_space<vmem>>, vector<5x128xf32>
    tpu.vector_store %arg4[%c0_659, %c0_660], %685 {strides = array<i32>} : memref<120x128xf32, #tpu.memory_space<vmem>>, vector<5x128xf32>,
    %c0_661 = arith.constant 0 : index
    %c2176 = arith.constant 2176 : index
    %687 = vector.load %arg2[%c0_661, %c2176] : memref<8x2304xf32, #tpu.memory_space<vmem>>, vector<5x8xf32>
    %c0_662 = arith.constant 0 : index
    %c0_663 = arith.constant 0 : index
    %688 = vector.load %arg4[%c0_662, %c0_663] : memref<120x128xf32, #tpu.memory_space<vmem>>, vector<8x128xf32>
    %cst_664 = arith.constant dense<0.000000e+00> : vector<5x128xf32>
    %689 = tpu.matmul %687, %688, %cst_664 {dimension_numbers = #tpu.dot_dimension_numbers<[1], [0], [0], [1], [0, 0, 1, 1], [], []>} : vector<5x8xf32>, vector<8x128xf32>, vector<5x128xf32> -> vector<5x128xf32>
    %cst_665 = arith.constant 0.000000e+00 : f32
    %690 = vector.broadcast %cst_665 : f32 to vector<5x128xf32>
    %691 = arith.maximumf %689, %690 : vector<5x128xf32>
    %c0_666 = arith.constant 0 : index
    %c2184 = arith.constant 2184 : index
    %692 = vector.load %arg2[%c0_666, %c2184] : memref<8x2304xf32, #tpu.memory_space<vmem>>, vector<5x6xf32>
    %c0_667 = arith.constant 0 : index
    %c2191 = arith.constant 2191 : index
    %693 = vector.load %arg2[%c0_667, %c2191] : memref<8x2304xf32, #tpu.memory_space<vmem>>, vector<5x1xf32>
    %cst_668 = arith.constant dense<0.000000e+00> : vector<5x128xf32>
    %694 = tpu.matmul %692, %675, %cst_668 {dimension_numbers = #tpu.dot_dimension_numbers<[1], [0], [0], [1], [0, 0, 1, 1], [], []>} : vector<5x6xf32>, vector<6x128xf32>, vector<5x128xf32> -> vector<5x128xf32>
    %695 = vector.broadcast %693 : vector<5x1xf32> to vector<5x128xf32>
    %696 = arith.addf %694, %695 : vector<5x128xf32>
    %697 = arith.addf %691, %696 : vector<5x128xf32>
    %cst_669 = arith.constant 0.000000e+00 : f32
    %698 = vector.broadcast %cst_669 : f32 to vector<5x128xf32>
    %699 = arith.maximumf %697, %698 : vector<5x128xf32>
    %c0_670 = arith.constant 0 : index
    %c2192 = arith.constant 2192 : index
    %700 = vector.load %arg2[%c0_670, %c2192] : memref<8x2304xf32, #tpu.memory_space<vmem>>, vector<1x5xf32>
    %c0_671 = arith.constant 0 : index
    %c2199 = arith.constant 2199 : index
    %701 = vector.load %arg2[%c0_671, %c2199] : memref<8x2304xf32, #tpu.memory_space<vmem>>, vector<1x1xf32>
    %cst_672 = arith.constant dense<0.000000e+00> : vector<1x128xf32>
    %702 = tpu.matmul %700, %699, %cst_672 {dimension_numbers = #tpu.dot_dimension_numbers<[1], [0], [0], [1], [0, 0, 1, 1], [], []>} : vector<1x5xf32>, vector<5x128xf32>, vector<1x128xf32> -> vector<1x128xf32>
    %703 = vector.broadcast %701 : vector<1x1xf32> to vector<1x128xf32>
    %704 = arith.addf %702, %703 : vector<1x128xf32>
    %c0_673 = arith.constant 0 : index
    %c0_674 = arith.constant 0 : index
    %c0_675 = arith.constant 0 : index
    %705 = vector.load %arg3[%c0_673, %c0_674, %c0_675] : memref<1x1x128xf32, #tpu.memory_space<vmem>>, vector<1x1x128xf32>
    %706 = vector.shape_cast %705 : vector<1x1x128xf32> to vector<1x128xf32>
    %707 = vector.shape_cast %704 : vector<1x128xf32> to vector<1x1x128xf32>
    tpu.vector_store %arg3[%c0_673, %c0_674, %c0_675], %707 {strides = array<i32>} : memref<1x1x128xf32, #tpu.memory_space<vmem>>, vector<1x1x128xf32>,
    return
  }
  func.func @transform_0(%arg0: i32) -> (i32, i32, i32) {
    %c0_i32 = arith.constant 0 : i32
    %c0_i32_0 = arith.constant 0 : i32
    %c0_i32_1 = arith.constant 0 : i32
    return %arg0, %c0_i32, %c0_i32_0 : i32, i32, i32
  }
  func.func @transform_1(%arg0: i32) -> (i32, i32) {
    %c0_i32 = arith.constant 0 : i32
    %c0_i32_0 = arith.constant 0 : i32
    %c0_i32_1 = arith.constant 0 : i32
    return %c0_i32, %c0_i32_0 : i32, i32
  }
  func.func @transform_2(%arg0: i32) -> (i32, i32, i32) {
    %c0_i32 = arith.constant 0 : i32
    %c0_i32_0 = arith.constant 0 : i32
    %c0_i32_1 = arith.constant 0 : i32
    return %arg0, %c0_i32, %c0_i32_0 : i32, i32, i32
  }
}

</mosaic_0001>

<llo_original>
// kernel: tpu_custom_call.1
$region0: #{tpu_custom_call.1}
  #allocation0 [shape = 'u32[]', space=smem, size = 0x4, offset = 0x4, fixed_abs, tag = 'smem constant byte address 0x4 - core index']
  #allocation1 [shape = 'u32[144,128]{1,0:T(1,128)}', space=vmem, size = 0x12000, scoped, tag = 'internal scratch']
  #allocation2 [shape = 'f32[120,128]{1,0:T(8,128)}', space=vmem, size = 0xf000, scoped, tag = 'scratch operand']
  %s0 = inlined_call_operand.hbm [shape: f32[1,1,128], index: 0, kind: input, shape index: {}]
  %s1 = inlined_call_operand.hbm [shape: f32[8,2304], index: 1, kind: input, shape index: {}]
  %s2 = inlined_call_operand.hbm [shape: f32[1,1,128], index: 2, kind: output, shape index: {}]
  %s3 = sld [smem:[#allocation0]]
  $region26: #{tpu_custom_call.1} parent=0
    _
  %s5 = ssub.s32 1, %s3
  %s6 = scalar_select 0, %s5, %s3
  $region1: #{tpu_custom_call.1} parent=0
    #allocation3 [shape = 'u8[512]{0}', space=vmem, size = 0x400, scoped, tag = 'input window, operand 0, single buffered']
    #allocation4 [shape = 's32[1]{0}', space=sflag, size = 0x4, scoped, tag = 'scoped memory for tpu_custom_call.1']
    #allocation5 [shape = 's32[1]{0}', space=sflag, size = 0x4, scoped, tag = 'scoped memory for tpu_custom_call.1']
    #allocation6 [shape = 'u8[73728]{0}', space=vmem, size = 0x12000, scoped, tag = 'input window, operand 1, single buffered']
    #allocation7 [shape = 's32[1]{0}', space=sflag, size = 0x4, scoped, tag = 'scoped memory for tpu_custom_call.1']
    #allocation8 [shape = 'u8[512]{0}', space=vmem, size = 0x400, scoped, tag = 'output window, operand 0, single buffered']
    %7 = vsyncpa [#allocation4], 0
    %8 = vsyncpa [#allocation7], 0
    %9 = vsyncpa [#allocation5], 0
    // Predicated region
    $region2: #{tpu_custom_call.1} parent=1 // pred_check
      _
    $region3: #{tpu_custom_call.1} parent=1 // pred_check_branch
      %11 = sbr.rel (0) target = $region5
    $region4: #{tpu_custom_call.1} parent=1 // pred_region
      %s13 = ssub.s32 16, 16
      %14 = vsyncadd [#allocation4], %s13
      %s16 = sshll.u32 [#allocation3], 4
      %s17 = int_to_ptr.vmem [resolvable:$true] %s16
      %19 = dma.hbm_to_vmem [thread:$0]  %s0, 16, %s17, [#allocation4]
    $region5: #{tpu_custom_call.1} parent=1 // pred_fallthru
      _
    // Predicated region
    $region6: #{tpu_custom_call.1} parent=1 // pred_check
      _
    $region7: #{tpu_custom_call.1} parent=1 // pred_check_branch
      %21 = sbr.rel (0) target = $region9
    $region8: #{tpu_custom_call.1} parent=1 // pred_region
      %s23 = ssub.s32 2304, 2304
      %24 = vsyncadd [#allocation7], %s23
      %s26 = sshll.u32 [#allocation6], 4
      %s27 = int_to_ptr.vmem [resolvable:$true] %s26
      %29 = dma.hbm_to_vmem [thread:$0]  %s1, 2304, %s27, [#allocation7]
    $region9: #{tpu_custom_call.1} parent=1 // pred_fallthru
      _
    // Predicated region
    $region10: #{tpu_custom_call.1} parent=1 // pred_check
      _
    $region11: #{tpu_custom_call.1} parent=1 // pred_check_branch
      %31 = sbr.rel (0) target = $region13
    $region12: #{tpu_custom_call.1} parent=1 // pred_region
      %32 = dma.done [#allocation4], 16
    $region13: #{tpu_custom_call.1} parent=1 // pred_fallthru
      _
    // Predicated region
    $region14: #{tpu_custom_call.1} parent=1 // pred_check
      _
    $region15: #{tpu_custom_call.1} parent=1 // pred_check_branch
      %34 = sbr.rel (0) target = $region17
    $region16: #{tpu_custom_call.1} parent=1 // pred_region
      %35 = dma.done [#allocation7], 2304
    $region17: #{tpu_custom_call.1} parent=1 // pred_fallthru
      _
    %v36 = vld [vmem:[#allocation3] sm:$0x1]
    %37 = vst [vmem:[#allocation2] sm:$0xff] 0.0
    %38 = vst [vmem:[#allocation2 + $0x8] sm:$0xff] 0.0
    %39 = vst [vmem:[#allocation2 + $0x10] sm:$0xff] 0.0
    %40 = vst [vmem:[#allocation2 + $0x18] sm:$0xff] 0.0
    %41 = vst [vmem:[#allocation2 + $0x20] sm:$0xff] 0.0
    %42 = vst [vmem:[#allocation2 + $0x28] sm:$0xff] 0.0
    %43 = vst [vmem:[#allocation2 + $0x30] sm:$0xff] 0.0
    %44 = vst [vmem:[#allocation2 + $0x38] sm:$0xff] 0.0
    %45 = vst [vmem:[#allocation2 + $0x40] sm:$0xff] 0.0
    %46 = vst [vmem:[#allocation2 + $0x48] sm:$0xff] 0.0
    %47 = vst [vmem:[#allocation2 + $0x50] sm:$0xff] 0.0
    %48 = vst [vmem:[#allocation2 + $0x58] sm:$0xff] 0.0
    %49 = vst [vmem:[#allocation2 + $0x60] sm:$0xff] 0.0
    %50 = vst [vmem:[#allocation2 + $0x68] sm:$0xff] 0.0
    %51 = vst [vmem:[#allocation2 + $0x70] sm:$0xff] 0.0
    %52 = vst [vmem:[#allocation2 + $0x3f] sm:$0x1] 1.0
    %v54 = vlaneseq
    %v55 = vshrl.u32 %v54, 7
    %v56 = vsub.s32 0, %v55
    %v57 = vrot.slane %v36, %v56
    %58 = vrot.lane.b32.xlu0 %v57, 7
    %v59 = vpop.permute.xlu0 %58
    %vm61 = vcmask 516152
    %62 = vst.msk [vmem:[#allocation2] sm:$0x1] %vm61, %v59
    %vm63 = vcmask 1040952
    %64 = vst.msk [vmem:[#allocation2] sm:$0x1] %vm63, %v59
    %65 = vrot.lane.b32.xlu0 %v57, 6
    %v66 = vpop.permute.xlu0 %65
    %vm68 = vcmask 516144
    %69 = vst.msk [vmem:[#allocation2 + $0x8] sm:$0x1] %vm68, %v66
    %vm70 = vcmask 1040944
    %71 = vst.msk [vmem:[#allocation2 + $0x8] sm:$0x1] %vm70, %v66
    %72 = vrot.lane.b32.xlu0 %v57, 5
    %v73 = vpop.permute.xlu0 %72
    %vm75 = vcmask 516136
    %76 = vst.msk [vmem:[#allocation2 + $0x10] sm:$0x1] %vm75, %v73
    %vm77 = vcmask 1040936
    %78 = vst.msk [vmem:[#allocation2 + $0x10] sm:$0x1] %vm77, %v73
    %79 = vrot.lane.b32.xlu0 %v57, 4
    %v80 = vpop.permute.xlu0 %79
    %vm82 = vcmask 516128
    %83 = vst.msk [vmem:[#allocation2 + $0x18] sm:$0x1] %vm82, %v80
    %vm84 = vcmask 1040928
    %85 = vst.msk [vmem:[#allocation2 + $0x18] sm:$0x1] %vm84, %v80
    %86 = vrot.lane.b32.xlu0 %v57, 3
    %v87 = vpop.permute.xlu0 %86
    %vm89 = vcmask 516120
    %90 = vst.msk [vmem:[#allocation2 + $0x20] sm:$0x1] %vm89, %v87
    %vm91 = vcmask 1040920
    %92 = vst.msk [vmem:[#allocation2 + $0x20] sm:$0x1] %vm91, %v87
    %93 = vrot.lane.b32.xlu0 %v57, 2
    %v94 = vpop.permute.xlu0 %93
    %vm96 = vcmask 516112
    %97 = vst.msk [vmem:[#allocation2 + $0x28] sm:$0x1] %vm96, %v94
    %vm98 = vcmask 1040912
    %99 = vst.msk [vmem:[#allocation2 + $0x28] sm:$0x1] %vm98, %v94
    %100 = vrot.lane.b32.xlu0 %v57, 1
    %v101 = vpop.permute.xlu0 %100
    %vm103 = vcmask 516104
    %104 = vst.msk [vmem:[#allocation2 + $0x30] sm:$0x1] %vm103, %v101
    %vm105 = vcmask 1040904
    %106 = vst.msk [vmem:[#allocation2 + $0x30] sm:$0x1] %vm105, %v101
    %107 = vst [vmem:[#allocation2 + $0x38] sm:$0x1] %v36
    %108 = vrot.lane.b32.xlu0 %v57, 127
    %v109 = vpop.permute.xlu0 %108
    %vm111 = vcmask 507904
    %112 = vst.msk [vmem:[#allocation2 + $0x40] sm:$0x1] %vm111, %v109
    %vm113 = vcmask 1032704
    %114 = vst.msk [vmem:[#allocation2 + $0x40] sm:$0x1] %vm113, %v109
    %115 = vrot.lane.b32.xlu0 %v57, 126
    %v116 = vpop.permute.xlu0 %115
    %vm118 = vcmask 499712
    %119 = vst.msk [vmem:[#allocation2 + $0x48] sm:$0x1] %vm118, %v116
    %vm120 = vcmask 1024512
    %121 = vst.msk [vmem:[#allocation2 + $0x48] sm:$0x1] %vm120, %v116
    %122 = vrot.lane.b32.xlu0 %v57, 125
    %v123 = vpop.permute.xlu0 %122
    %vm125 = vcmask 491520
    %126 = vst.msk [vmem:[#allocation2 + $0x50] sm:$0x1] %vm125, %v123
    %vm127 = vcmask 1016320
    %128 = vst.msk [vmem:[#allocation2 + $0x50] sm:$0x1] %vm127, %v123
    %129 = vrot.lane.b32.xlu0 %v57, 124
    %v130 = vpop.permute.xlu0 %129
    %vm132 = vcmask 483328
    %133 = vst.msk [vmem:[#allocation2 + $0x58] sm:$0x1] %vm132, %v130
    %vm134 = vcmask 1008128
    %135 = vst.msk [vmem:[#allocation2 + $0x58] sm:$0x1] %vm134, %v130
    %136 = vrot.lane.b32.xlu0 %v57, 123
    %v137 = vpop.permute.xlu0 %136
    %vm139 = vcmask 475136
    %140 = vst.msk [vmem:[#allocation2 + $0x60] sm:$0x1] %vm139, %v137
    %vm141 = vcmask 999936
    %142 = vst.msk [vmem:[#allocation2 + $0x60] sm:$0x1] %vm141, %v137
    %143 = vrot.lane.b32.xlu0 %v57, 122
    %v144 = vpop.permute.xlu0 %143
    %vm146 = vcmask 466944
    %147 = vst.msk [vmem:[#allocation2 + $0x68] sm:$0x1] %vm146, %v144
    %vm148 = vcmask 991744
    %149 = vst.msk [vmem:[#allocation2 + $0x68] sm:$0x1] %vm148, %v144
    %150 = vrot.lane.b32.xlu0 %v57, 121
    %v151 = vpop.permute.xlu0 %150
    %vm153 = vcmask 458752
    %154 = vst.msk [vmem:[#allocation2 + $0x70] sm:$0x1] %vm153, %v151
    %vm155 = vcmask 983552
    %156 = vst.msk [vmem:[#allocation2 + $0x70] sm:$0x1] %vm155, %v151
    %v157 = vld [vmem:[#allocation6] sm:$0x7]
    %v158 = vld [vmem:[#allocation2] sm:$0xff]
    %v159 = vld [vmem:[#allocation2 + $0x8] sm:$0xff]
    %v160 = vld [vmem:[#allocation2 + $0x10] sm:$0xff]
    %v161 = vld [vmem:[#allocation2 + $0x18] sm:$0xff]
    %v162 = vld [vmem:[#allocation2 + $0x20] sm:$0xff]
    %v163 = vld [vmem:[#allocation2 + $0x28] sm:$0xff]
    %v164 = vld [vmem:[#allocation2 + $0x30] sm:$0xff]
    %v165 = vld [vmem:[#allocation2 + $0x38] sm:$0xff]
    %v166 = vld [vmem:[#allocation2 + $0x40] sm:$0xff]
    %v167 = vld [vmem:[#allocation2 + $0x48] sm:$0xff]
    %v168 = vld [vmem:[#allocation2 + $0x50] sm:$0xff]
    %v169 = vld [vmem:[#allocation2 + $0x58] sm:$0xff]
    %v170 = vld [vmem:[#allocation2 + $0x60] sm:$0xff]
    %v171 = vld [vmem:[#allocation2 + $0x68] sm:$0xff]
    %v172 = vld [vmem:[#allocation2 + $0x70] sm:$0xff]
    %vm173 = vcmask 982016
    %v175 = vsel %vm173, %v157, 0
    %177 = vmatprep.subr.mxu0 0.0
    %178 = vmatpush1.msra.mxu0 %v158
    %179 = vmatprep.subr.mxu0 0.0
    %180 = vmatpush1.msra.mxu0 %v159
    %181 = vmatprep.subr.mxu0 0.0
    %182 = vmatpush1.msra.mxu0 %v160
    %183 = vmatprep.subr.mxu0 0.0
    %184 = vmatpush1.msra.mxu0 %v161
    %185 = vmatprep.subr.mxu0 0.0
    %186 = vmatpush1.msra.mxu0 %v162
    %187 = vmatprep.subr.mxu0 0.0
    %188 = vmatpush1.msra.mxu0 %v163
    %189 = vmatprep.subr.mxu0 0.0
    %190 = vmatpush1.msra.mxu0 %v164
    %191 = vmatprep.subr.mxu0 0.0
    %192 = vmatpush1.msra.mxu0 %v165
    %193 = vmatprep.subr.mxu0 0.0
    %194 = vmatpush1.msra.mxu0 %v166
    %195 = vmatprep.subr.mxu0 0.0
    %196 = vmatpush1.msra.mxu0 %v167
    %197 = vmatprep.subr.mxu0 0.0
    %198 = vmatpush1.msra.mxu0 %v168
    %199 = vmatprep.subr.mxu0 0.0
    %200 = vmatpush1.msra.mxu0 %v169
    %201 = vmatprep.subr.mxu0 0.0
    %202 = vmatpush1.msra.mxu0 %v170
    %203 = vmatprep.subr.mxu0 0.0
    %204 = vmatpush1.msra.mxu0 %v171
    %205 = vmatprep.subr.mxu0 0.0
    %206 = vmatpush1.msra.mxu0 %v172
    %207 = vmatprep.subr.mxu0 0.0
    %208 = vmatpush1.msra.mxu0 0.0
    %209 = vmatprep.subr.mxu0 0.0
    %210 = vmatpush1.msra.mxu0 0.0
    %211 = vmatprep.subr.mxu0 0.0
    %212 = vmatpush1.msra.mxu0 0.0
    %213 = vmatprep.subr.mxu0 0.0
    %214 = vmatpush1.msra.mxu0 0.0
    %215 = vmatprep.subr.mxu0 0.0
    %216 = vmatpush1.msra.mxu0 0.0
    %217 = vmatprep.subr.mxu0 0.0
    %218 = vmatpush1.msra.mxu0 0.0
    %219 = vmatprep.subr.mxu0 0.0
    %220 = vmatpush1.msra.mxu0 0.0
    %221 = vmatprep.subr.mxu0 0.0
    %222 = vmatpush1.msra.mxu0 0.0
    %223 = vmatprep.subr.mxu0 0.0
    %224 = vmatpush1.msra.mxu0 0.0
    %225 = vmatprep.subr.mxu0 0.0
    %226 = vmatpush1.msra.mxu0 0.0
    %227 = vmatprep.subr.mxu0 0.0
    %228 = vmatpush1.msra.mxu0 0.0
    %229 = vmatprep.subr.mxu0 0.0
    %230 = vmatpush1.msra.mxu0 0.0
    %231 = vmatprep.subr.mxu0 0.0
    %232 = vmatpush1.msra.mxu0 0.0
    %233 = vmatprep.subr.mxu0 0.0
    %234 = vmatpush1.msra.mxu0 0.0
    %235 = vmatprep.subr.mxu0 0.0
    %236 = vmatpush1.msra.mxu0 0.0
    %237 = vmatprep.subr.mxu0 0.0
    %238 = vmatpush1.msra.mxu0 0.0
    %239 = vmatprep.subr.mxu0 0.0
    %240 = vmatpush1.msra.mxu0 0.0
    %241 = vmatprep.mubr.f32.mxu0 0.0
    %242 = vmatmul.mubr.f32.gmra.mrb[0].mxu0 %v175
    %v243 = vpop.f32.mrb[0].mxu0
    %v244 = vadd.f32 0.0, %v243
    %v245 = vpop.f32.mrb[0].mxu0
    %246 = vdwg.mxu0
    %v247 = vmax.f32 %v244, 0.0
    %249 = vrot.lane.b32.xlu0 %v247, 7
    %v250 = vpop.permute.xlu0 %249
    %vm252 = vcmask 518200
    %253 = vst.msk [vmem:[#allocation2] sm:$0x7] %vm252, %v250
    %vm254 = vcmask 1043000
    %255 = vst.msk [vmem:[#allocation2] sm:$0x7] %vm254, %v250
    %256 = vrot.lane.b32.xlu0 %v247, 6
    %v257 = vpop.permute.xlu0 %256
    %vm259 = vcmask 518192
    %260 = vst.msk [vmem:[#allocation2 + $0x8] sm:$0x7] %vm259, %v257
    %vm261 = vcmask 1042992
    %262 = vst.msk [vmem:[#allocation2 + $0x8] sm:$0x7] %vm261, %v257
    %263 = vrot.lane.b32.xlu0 %v247, 5
    %v264 = vpop.permute.xlu0 %263
    %vm266 = vcmask 518184
    %267 = vst.msk [vmem:[#allocation2 + $0x10] sm:$0x7] %vm266, %v264
    %vm268 = vcmask 1042984
    %269 = vst.msk [vmem:[#allocation2 + $0x10] sm:$0x7] %vm268, %v264
    %270 = vrot.lane.b32.xlu0 %v247, 4
    %v271 = vpop.permute.xlu0 %270
    %vm273 = vcmask 518176
    %274 = vst.msk [vmem:[#allocation2 + $0x18] sm:$0x7] %vm273, %v271
    %vm275 = vcmask 1042976
    %276 = vst.msk [vmem:[#allocation2 + $0x18] sm:$0x7] %vm275, %v271
    %277 = vrot.lane.b32.xlu0 %v247, 3
    %v278 = vpop.permute.xlu0 %277
    %vm280 = vcmask 518168
    %281 = vst.msk [vmem:[#allocation2 + $0x20] sm:$0x7] %vm280, %v278
    %vm282 = vcmask 1042968
    %283 = vst.msk [vmem:[#allocation2 + $0x20] sm:$0x7] %vm282, %v278
    %284 = vrot.lane.b32.xlu0 %v247, 2
    %v285 = vpop.permute.xlu0 %284
    %vm287 = vcmask 518160
    %288 = vst.msk [vmem:[#allocation2 + $0x28] sm:$0x7] %vm287, %v285
    %vm289 = vcmask 1042960
    %290 = vst.msk [vmem:[#allocation2 + $0x28] sm:$0x7] %vm289, %v285
    %291 = vrot.lane.b32.xlu0 %v247, 1
    %v292 = vpop.permute.xlu0 %291
    %vm294 = vcmask 518152
    %295 = vst.msk [vmem:[#allocation2 + $0x30] sm:$0x7] %vm294, %v292
    %vm296 = vcmask 1042952
    %297 = vst.msk [vmem:[#allocation2 + $0x30] sm:$0x7] %vm296, %v292
    %298 = vst [vmem:[#allocation2 + $0x38] sm:$0x7] %v247
    %299 = vrot.lane.b32.xlu0 %v247, 127
    %v300 = vpop.permute.xlu0 %299
    %vm302 = vcmask 509952
    %303 = vst.msk [vmem:[#allocation2 + $0x40] sm:$0x7] %vm302, %v300
    %vm304 = vcmask 1034752
    %305 = vst.msk [vmem:[#allocation2 + $0x40] sm:$0x7] %vm304, %v300
    %306 = vrot.lane.b32.xlu0 %v247, 126
    %v307 = vpop.permute.xlu0 %306
    %vm309 = vcmask 501760
    %310 = vst.msk [vmem:[#allocation2 + $0x48] sm:$0x7] %vm309, %v307
    %vm311 = vcmask 1026560
    %312 = vst.msk [vmem:[#allocation2 + $0x48] sm:$0x7] %vm311, %v307
    %313 = vrot.lane.b32.xlu0 %v247, 125
    %v314 = vpop.permute.xlu0 %313
    %vm316 = vcmask 493568
    %317 = vst.msk [vmem:[#allocation2 + $0x50] sm:$0x7] %vm316, %v314
    %vm318 = vcmask 1018368
    %319 = vst.msk [vmem:[#allocation2 + $0x50] sm:$0x7] %vm318, %v314
    %320 = vrot.lane.b32.xlu0 %v247, 124
    %v321 = vpop.permute.xlu0 %320
    %vm323 = vcmask 485376
    %324 = vst.msk [vmem:[#allocation2 + $0x58] sm:$0x7] %vm323, %v321
    %vm325 = vcmask 1010176
    %326 = vst.msk [vmem:[#allocation2 + $0x58] sm:$0x7] %vm325, %v321
    %327 = vrot.lane.b32.xlu0 %v247, 123
    %v328 = vpop.permute.xlu0 %327
    %vm330 = vcmask 477184
    %331 = vst.msk [vmem:[#allocation2 + $0x60] sm:$0x7] %vm330, %v328
    %vm332 = vcmask 1001984
    %333 = vst.msk [vmem:[#allocation2 + $0x60] sm:$0x7] %vm332, %v328
    %334 = vrot.lane.b32.xlu0 %v247, 122
    %v335 = vpop.permute.xlu0 %334
    %vm337 = vcmask 468992
    %338 = vst.msk [vmem:[#allocation2 + $0x68] sm:$0x7] %vm337, %v335
    %vm339 = vcmask 993792
    %340 = vst.msk [vmem:[#allocation2 + $0x68] sm:$0x7] %vm339, %v335
    %341 = vrot.lane.b32.xlu0 %v247, 121
    %v342 = vpop.permute.xlu0 %341
    %vm344 = vcmask 460800
    %345 = vst.msk [vmem:[#allocation2 + $0x70] sm:$0x7] %vm344, %v342
    %vm346 = vcmask 985600
    %347 = vst.msk [vmem:[#allocation2 + $0x70] sm:$0x7] %vm346, %v342
    %v348 = vld [vmem:[#allocation6 + $0x8] sm:$0x7]
    %v349 = vld [vmem:[#allocation2] sm:$0xff]
    %v350 = vld [vmem:[#allocation2 + $0x8] sm:$0xff]
    %v351 = vld [vmem:[#allocation2 + $0x10] sm:$0xff]
    %v352 = vld [vmem:[#allocation2 + $0x18] sm:$0xff]
    %v353 = vld [vmem:[#allocation2 + $0x20] sm:$0xff]
    %v354 = vld [vmem:[#allocation2 + $0x28] sm:$0xff]
    %v355 = vld [vmem:[#allocation2 + $0x30] sm:$0xff]
    %v356 = vld [vmem:[#allocation2 + $0x38] sm:$0xff]
    %v357 = vld [vmem:[#allocation2 + $0x40] sm:$0xff]
    %v358 = vld [vmem:[#allocation2 + $0x48] sm:$0xff]
    %v359 = vld [vmem:[#allocation2 + $0x50] sm:$0xff]
    %v360 = vld [vmem:[#allocation2 + $0x58] sm:$0xff]
    %v361 = vld [vmem:[#allocation2 + $0x60] sm:$0xff]
    %v362 = vld [vmem:[#allocation2 + $0x68] sm:$0xff]
    %v363 = vld [vmem:[#allocation2 + $0x70] sm:$0xff]
    %v365 = vsel %vm173, %v348, 0
    %367 = vmatprep.subr.mxu0 0.0
    %368 = vmatpush1.msra.mxu0 %v349
    %369 = vmatprep.subr.mxu0 0.0
    %370 = vmatpush1.msra.mxu0 %v350
    %371 = vmatprep.subr.mxu0 0.0
    %372 = vmatpush1.msra.mxu0 %v351
    %373 = vmatprep.subr.mxu0 0.0
    %374 = vmatpush1.msra.mxu0 %v352
    %375 = vmatprep.subr.mxu0 0.0
    %376 = vmatpush1.msra.mxu0 %v353
    %377 = vmatprep.subr.mxu0 0.0
    %378 = vmatpush1.msra.mxu0 %v354
    %379 = vmatprep.subr.mxu0 0.0
    %380 = vmatpush1.msra.mxu0 %v355
    %381 = vmatprep.subr.mxu0 0.0
    %382 = vmatpush1.msra.mxu0 %v356
    %383 = vmatprep.subr.mxu0 0.0
    %384 = vmatpush1.msra.mxu0 %v357
    %385 = vmatprep.subr.mxu0 0.0
    %386 = vmatpush1.msra.mxu0 %v358
    %387 = vmatprep.subr.mxu0 0.0
    %388 = vmatpush1.msra.mxu0 %v359
    %389 = vmatprep.subr.mxu0 0.0
    %390 = vmatpush1.msra.mxu0 %v360
    %391 = vmatprep.subr.mxu0 0.0
    %392 = vmatpush1.msra.mxu0 %v361
    %393 = vmatprep.subr.mxu0 0.0
    %394 = vmatpush1.msra.mxu0 %v362
    %395 = vmatprep.subr.mxu0 0.0
    %396 = vmatpush1.msra.mxu0 %v363
    %397 = vmatprep.subr.mxu0 0.0
    %398 = vmatpush1.msra.mxu0 0.0
    %399 = vmatprep.subr.mxu0 0.0
    %400 = vmatpush1.msra.mxu0 0.0
    %401 = vmatprep.subr.mxu0 0.0
    %402 = vmatpush1.msra.mxu0 0.0
    %403 = vmatprep.subr.mxu0 0.0
    %404 = vmatpush1.msra.mxu0 0.0
    %405 = vmatprep.subr.mxu0 0.0
    %406 = vmatpush1.msra.mxu0 0.0
    %407 = vmatprep.subr.mxu0 0.0
    %408 = vmatpush1.msra.mxu0 0.0
    %409 = vmatprep.subr.mxu0 0.0
    %410 = vmatpush1.msra.mxu0 0.0
    %411 = vmatprep.subr.mxu0 0.0
    %412 = vmatpush1.msra.mxu0 0.0
    %413 = vmatprep.subr.mxu0 0.0
    %414 = vmatpush1.msra.mxu0 0.0
    %415 = vmatprep.subr.mxu0 0.0
    %416 = vmatpush1.msra.mxu0 0.0
    %417 = vmatprep.subr.mxu0 0.0
    %418 = vmatpush1.msra.mxu0 0.0
    %419 = vmatprep.subr.mxu0 0.0
    %420 = vmatpush1.msra.mxu0 0.0
    %421 = vmatprep.subr.mxu0 0.0
    %422 = vmatpush1.msra.mxu0 0.0
    %423 = vmatprep.subr.mxu0 0.0
    %424 = vmatpush1.msra.mxu0 0.0
    %425 = vmatprep.subr.mxu0 0.0
    %426 = vmatpush1.msra.mxu0 0.0
    %427 = vmatprep.subr.mxu0 0.0
    %428 = vmatpush1.msra.mxu0 0.0
    %429 = vmatprep.subr.mxu0 0.0
    %430 = vmatpush1.msra.mxu0 0.0
    %431 = vmatprep.mubr.f32.mxu0 0.0
    %432 = vmatmul.mubr.f32.gmra.mrb[0].mxu0 %v365
    %v433 = vpop.f32.mrb[0].mxu0
    %v434 = vadd.f32 0.0, %v433
    %v435 = vpop.f32.mrb[0].mxu0
    %436 = vdwg.mxu0
    %v437 = vmax.f32 %v434, 0.0
    %438 = vset.pattern.permute.xlu0 127
    %439 = vperm.xlu0 %438, %v348
    %v440 = vpop.permute.xlu0 %439
    %442 = vrot.lane.b32.xlu0 %v348, 8
    %v443 = vpop.permute.xlu0 %442
    %vm444 = vcmask 7168
    %v445 = vsel %vm444, %v443, 0
    %vm447 = vcmask 1040384
    %v448 = vsel %vm447, %v36, 0
    %450 = vmatprep.subr.mxu0 0.0
    %451 = vmatpush1.msra.mxu0 %v448
    %452 = vmatprep.subr.mxu0 0.0
    %453 = vmatpush1.msra.mxu0 0.0
    %454 = vmatprep.subr.mxu0 0.0
    %455 = vmatpush1.msra.mxu0 0.0
    %456 = vmatprep.subr.mxu0 0.0
    %457 = vmatpush1.msra.mxu0 0.0
    %458 = vmatprep.subr.mxu0 0.0
    %459 = vmatpush1.msra.mxu0 0.0
    %460 = vmatprep.subr.mxu0 0.0
    %461 = vmatpush1.msra.mxu0 0.0
    %462 = vmatprep.subr.mxu0 0.0
    %463 = vmatpush1.msra.mxu0 0.0
    %464 = vmatprep.subr.mxu0 0.0
    %465 = vmatpush1.msra.mxu0 0.0
    %466 = vmatprep.subr.mxu0 0.0
    %467 = vmatpush1.msra.mxu0 0.0
    %468 = vmatprep.subr.mxu0 0.0
    %469 = vmatpush1.msra.mxu0 0.0
    %470 = vmatprep.subr.mxu0 0.0
    %471 = vmatpush1.msra.mxu0 0.0
    %472 = vmatprep.subr.mxu0 0.0
    %473 = vmatpush1.msra.mxu0 0.0
    %474 = vmatprep.subr.mxu0 0.0
    %475 = vmatpush1.msra.mxu0 0.0
    %476 = vmatprep.subr.mxu0 0.0
    %477 = vmatpush1.msra.mxu0 0.0
    %478 = vmatprep.subr.mxu0 0.0
    %479 = vmatpush1.msra.mxu0 0.0
    %480 = vmatprep.subr.mxu0 0.0
    %481 = vmatpush1.msra.mxu0 0.0
    %482 = vmatprep.subr.mxu0 0.0
    %483 = vmatpush1.msra.mxu0 0.0
    %484 = vmatprep.subr.mxu0 0.0
    %485 = vmatpush1.msra.mxu0 0.0
    %486 = vmatprep.subr.mxu0 0.0
    %487 = vmatpush1.msra.mxu0 0.0
    %488 = vmatprep.subr.mxu0 0.0
    %489 = vmatpush1.msra.mxu0 0.0
    %490 = vmatprep.subr.mxu0 0.0
    %491 = vmatpush1.msra.mxu0 0.0
    %492 = vmatprep.subr.mxu0 0.0
    %493 = vmatpush1.msra.mxu0 0.0
    %494 = vmatprep.subr.mxu0 0.0
    %495 = vmatpush1.msra.mxu0 0.0
    %496 = vmatprep.subr.mxu0 0.0
    %497 = vmatpush1.msra.mxu0 0.0
    %498 = vmatprep.subr.mxu0 0.0
    %499 = vmatpush1.msra.mxu0 0.0
    %500 = vmatprep.subr.mxu0 0.0
    %501 = vmatpush1.msra.mxu0 0.0
    %502 = vmatprep.subr.mxu0 0.0
    %503 = vmatpush1.msra.mxu0 0.0
    %504 = vmatprep.subr.mxu0 0.0
    %505 = vmatpush1.msra.mxu0 0.0
    %506 = vmatprep.subr.mxu0 0.0
    %507 = vmatpush1.msra.mxu0 0.0
    %508 = vmatprep.subr.mxu0 0.0
    %509 = vmatpush1.msra.mxu0 0.0
    %510 = vmatprep.subr.mxu0 0.0
    %511 = vmatpush1.msra.mxu0 0.0
    %512 = vmatprep.subr.mxu0 0.0
    %513 = vmatpush1.msra.mxu0 0.0
    %514 = vmatprep.mubr.f32.mxu0 0.0
    %515 = vmatmul.mubr.f32.gmra.mrb[0].mxu0 %v445
    %v516 = vpop.f32.mrb[0].mxu0
    %v517 = vadd.f32 %v440, %v516
    %v518 = vpop.f32.mrb[0].mxu0
    %519 = vdwg.mxu0
    %v520 = vadd.f32 %v437, %v517
    %v521 = vmax.f32 %v520, 0.0
    %522 = vst [vmem:[#allocation2] sm:$0xff] 0.0
    %523 = vst [vmem:[#allocation2 + $0x8] sm:$0xff] 0.0
    %524 = vst [vmem:[#allocation2 + $0x10] sm:$0xff] 0.0
    %525 = vst [vmem:[#allocation2 + $0x18] sm:$0xff] 0.0
    %526 = vst [vmem:[#allocation2 + $0x20] sm:$0xff] 0.0
    %527 = vst [vmem:[#allocation2 + $0x28] sm:$0xff] 0.0
    %528 = vst [vmem:[#allocation2 + $0x30] sm:$0xff] 0.0
    %529 = vst [vmem:[#allocation2 + $0x38] sm:$0xff] 0.0
    %530 = vst [vmem:[#allocation2 + $0x40] sm:$0xff] 0.0
    %531 = vst [vmem:[#allocation2 + $0x48] sm:$0xff] 0.0
    %532 = vst [vmem:[#allocation2 + $0x50] sm:$0xff] 0.0
    %533 = vst [vmem:[#allocation2 + $0x58] sm:$0xff] 0.0
    %534 = vst [vmem:[#allocation2 + $0x60] sm:$0xff] 0.0
    %535 = vst [vmem:[#allocation2 + $0x68] sm:$0xff] 0.0
    %536 = vst [vmem:[#allocation2 + $0x70] sm:$0xff] 0.0
    %537 = vst [vmem:[#allocation2 + $0x3f] sm:$0x1] 1.0
    %539 = vrot.lane.b32.xlu0 %v521, 14
    %v540 = vpop.permute.xlu0 %539
    %vm542 = vcmask 518256
    %543 = vst.msk [vmem:[#allocation2] sm:$0x7] %vm542, %v540
    %vm544 = vcmask 1043056
    %545 = vst.msk [vmem:[#allocation2] sm:$0x7] %vm544, %v540
    %546 = vrot.lane.b32.xlu0 %v521, 12
    %v547 = vpop.permute.xlu0 %546
    %vm549 = vcmask 518240
    %550 = vst.msk [vmem:[#allocation2 + $0x8] sm:$0x7] %vm549, %v547
    %vm551 = vcmask 1043040
    %552 = vst.msk [vmem:[#allocation2 + $0x8] sm:$0x7] %vm551, %v547
    %553 = vrot.lane.b32.xlu0 %v521, 10
    %v554 = vpop.permute.xlu0 %553
    %vm556 = vcmask 518224
    %557 = vst.msk [vmem:[#allocation2 + $0x10] sm:$0x7] %vm556, %v554
    %vm558 = vcmask 1043024
    %559 = vst.msk [vmem:[#allocation2 + $0x10] sm:$0x7] %vm558, %v554
    %560 = vrot.lane.b32.xlu0 %v521, 8
    %v561 = vpop.permute.xlu0 %560
    %vm563 = vcmask 518208
    %564 = vst.msk [vmem:[#allocation2 + $0x18] sm:$0x7] %vm563, %v561
    %vm565 = vcmask 1043008
    %566 = vst.msk [vmem:[#allocation2 + $0x18] sm:$0x7] %vm565, %v561
    %567 = vrot.lane.b32.xlu0 %v521, 6
    %v568 = vpop.permute.xlu0 %567
    %570 = vst.msk [vmem:[#allocation2 + $0x20] sm:$0x7] %vm259, %v568
    %571 = vst.msk [vmem:[#allocation2 + $0x20] sm:$0x7] %vm261, %v568
    %572 = vrot.lane.b32.xlu0 %v521, 4
    %v573 = vpop.permute.xlu0 %572
    %575 = vst.msk [vmem:[#allocation2 + $0x28] sm:$0x7] %vm273, %v573
    %576 = vst.msk [vmem:[#allocation2 + $0x28] sm:$0x7] %vm275, %v573
    %577 = vrot.lane.b32.xlu0 %v521, 2
    %v578 = vpop.permute.xlu0 %577
    %580 = vst.msk [vmem:[#allocation2 + $0x30] sm:$0x7] %vm287, %v578
    %581 = vst.msk [vmem:[#allocation2 + $0x30] sm:$0x7] %vm289, %v578
    %582 = vst [vmem:[#allocation2 + $0x38] sm:$0x7] %v521
    %583 = vrot.lane.b32.xlu0 %v521, 126
    %v584 = vpop.permute.xlu0 %583
    %586 = vst.msk [vmem:[#allocation2 + $0x40] sm:$0x7] %vm309, %v584
    %587 = vst.msk [vmem:[#allocation2 + $0x40] sm:$0x7] %vm311, %v584
    %588 = vrot.lane.b32.xlu0 %v521, 124
    %v589 = vpop.permute.xlu0 %588
    %591 = vst.msk [vmem:[#allocation2 + $0x48] sm:$0x7] %vm323, %v589
    %592 = vst.msk [vmem:[#allocation2 + $0x48] sm:$0x7] %vm325, %v589
    %593 = vrot.lane.b32.xlu0 %v521, 122
    %v594 = vpop.permute.xlu0 %593
    %596 = vst.msk [vmem:[#allocation2 + $0x50] sm:$0x7] %vm337, %v594
    %597 = vst.msk [vmem:[#allocation2 + $0x50] sm:$0x7] %vm339, %v594
    %598 = vrot.lane.b32.xlu0 %v521, 120
    %v599 = vpop.permute.xlu0 %598
    %vm601 = vcmask 452608
    %602 = vst.msk [vmem:[#allocation2 + $0x58] sm:$0x7] %vm601, %v599
    %vm603 = vcmask 977408
    %604 = vst.msk [vmem:[#allocation2 + $0x58] sm:$0x7] %vm603, %v599
    %605 = vrot.lane.b32.xlu0 %v521, 118
    %v606 = vpop.permute.xlu0 %605
    %vm608 = vcmask 436224
    %609 = vst.msk [vmem:[#allocation2 + $0x60] sm:$0x7] %vm608, %v606
    %vm610 = vcmask 961024
    %611 = vst.msk [vmem:[#allocation2 + $0x60] sm:$0x7] %vm610, %v606
    %612 = vrot.lane.b32.xlu0 %v521, 116
    %v613 = vpop.permute.xlu0 %612
    %vm615 = vcmask 419840
    %616 = vst.msk [vmem:[#allocation2 + $0x68] sm:$0x7] %vm615, %v613
    %vm617 = vcmask 944640
    %618 = vst.msk [vmem:[#allocation2 + $0x68] sm:$0x7] %vm617, %v613
    %619 = vrot.lane.b32.xlu0 %v521, 114
    %v620 = vpop.permute.xlu0 %619
    %vm622 = vcmask 403456
    %623 = vst.msk [vmem:[#allocation2 + $0x70] sm:$0x7] %vm622, %v620
    %vm624 = vcmask 928256
    %625 = vst.msk [vmem:[#allocation2 + $0x70] sm:$0x7] %vm624, %v620
    %v626 = vld [vmem:[#allocation6 + $0x10] sm:$0x3f]
    %v627 = vld [vmem:[#allocation2] sm:$0xff]
    %v628 = vld [vmem:[#allocation2 + $0x8] sm:$0xff]
    %v629 = vld [vmem:[#allocation2 + $0x10] sm:$0xff]
    %v630 = vld [vmem:[#allocation2 + $0x18] sm:$0xff]
    %v631 = vld [vmem:[#allocation2 + $0x20] sm:$0xff]
    %v632 = vld [vmem:[#allocation2 + $0x28] sm:$0xff]
    %v633 = vld [vmem:[#allocation2 + $0x30] sm:$0xff]
    %v634 = vld [vmem:[#allocation2 + $0x38] sm:$0xff]
    %v635 = vld [vmem:[#allocation2 + $0x40] sm:$0xff]
    %v636 = vld [vmem:[#allocation2 + $0x48] sm:$0xff]
    %v637 = vld [vmem:[#allocation2 + $0x50] sm:$0xff]
    %v638 = vld [vmem:[#allocation2 + $0x58] sm:$0xff]
    %v639 = vld [vmem:[#allocation2 + $0x60] sm:$0xff]
    %v640 = vld [vmem:[#allocation2 + $0x68] sm:$0xff]
    %v641 = vld [vmem:[#allocation2 + $0x70] sm:$0xff]
    %v643 = vsel %vm173, %v626, 0
    %645 = vmatprep.subr.mxu0 0.0
    %646 = vmatpush1.msra.mxu0 %v627
    %647 = vmatprep.subr.mxu0 0.0
    %648 = vmatpush1.msra.mxu0 %v628
    %649 = vmatprep.subr.mxu0 0.0
    %650 = vmatpush1.msra.mxu0 %v629
    %651 = vmatprep.subr.mxu0 0.0
    %652 = vmatpush1.msra.mxu0 %v630
    %653 = vmatprep.subr.mxu0 0.0
    %654 = vmatpush1.msra.mxu0 %v631
    %655 = vmatprep.subr.mxu0 0.0
    %656 = vmatpush1.msra.mxu0 %v632
    %657 = vmatprep.subr.mxu0 0.0
    %658 = vmatpush1.msra.mxu0 %v633
    %659 = vmatprep.subr.mxu0 0.0
    %660 = vmatpush1.msra.mxu0 %v634
    %661 = vmatprep.subr.mxu0 0.0
    %662 = vmatpush1.msra.mxu0 %v635
    %663 = vmatprep.subr.mxu0 0.0
    %664 = vmatpush1.msra.mxu0 %v636
    %665 = vmatprep.subr.mxu0 0.0
    %666 = vmatpush1.msra.mxu0 %v637
    %667 = vmatprep.subr.mxu0 0.0
    %668 = vmatpush1.msra.mxu0 %v638
    %669 = vmatprep.subr.mxu0 0.0
    %670 = vmatpush1.msra.mxu0 %v639
    %671 = vmatprep.subr.mxu0 0.0
    %672 = vmatpush1.msra.mxu0 %v640
    %673 = vmatprep.subr.mxu0 0.0
    %674 = vmatpush1.msra.mxu0 %v641
    %675 = vmatprep.subr.mxu0 0.0
    %676 = vmatpush1.msra.mxu0 0.0
    %677 = vmatprep.subr.mxu0 0.0
    %678 = vmatpush1.msra.mxu0 0.0
    %679 = vmatprep.subr.mxu0 0.0
    %680 = vmatpush1.msra.mxu0 0.0
    %681 = vmatprep.subr.mxu0 0.0
    %682 = vmatpush1.msra.mxu0 0.0
    %683 = vmatprep.subr.mxu0 0.0
    %684 = vmatpush1.msra.mxu0 0.0
    %685 = vmatprep.subr.mxu0 0.0
    %686 = vmatpush1.msra.mxu0 0.0
    %687 = vmatprep.subr.mxu0 0.0
    %688 = vmatpush1.msra.mxu0 0.0
    %689 = vmatprep.subr.mxu0 0.0
    %690 = vmatpush1.msra.mxu0 0.0
    %691 = vmatprep.subr.mxu0 0.0
    %692 = vmatpush1.msra.mxu0 0.0
    %693 = vmatprep.subr.mxu0 0.0
    %694 = vmatpush1.msra.mxu0 0.0
    %695 = vmatprep.subr.mxu0 0.0
    %696 = vmatpush1.msra.mxu0 0.0
    %697 = vmatprep.subr.mxu0 0.0
    %698 = vmatpush1.msra.mxu0 0.0
    %699 = vmatprep.subr.mxu0 0.0
    %700 = vmatpush1.msra.mxu0 0.0
    %701 = vmatprep.subr.mxu0 0.0
    %702 = vmatpush1.msra.mxu0 0.0
    %703 = vmatprep.subr.mxu0 0.0
    %704 = vmatpush1.msra.mxu0 0.0
    %705 = vmatprep.subr.mxu0 0.0
    %706 = vmatpush1.msra.mxu0 0.0
    %707 = vmatprep.subr.mxu0 0.0
    %708 = vmatpush1.msra.mxu0 0.0
    %709 = vmatprep.mubr.f32.mxu0 0.0
    %710 = vmatmul.mubr.f32.gmra.mrb[0].mxu0 %v643
    %v711 = vpop.f32.mrb[0].mxu0
    %v712 = vadd.f32 0.0, %v711
    %v713 = vpop.f32.mrb[0].mxu0
    %714 = vdwg.mxu0
    %v715 = vmax.f32 %v712, 0.0
    %717 = vrot.lane.b32.xlu0 %v715, 14
    %v718 = vpop.permute.xlu0 %717
    %vm720 = vcmask 521328
    %721 = vst.msk [vmem:[#allocation2] sm:$0x3f] %vm720, %v718
    %vm722 = vcmask 1046128
    %723 = vst.msk [vmem:[#allocation2] sm:$0x3f] %vm722, %v718
    %724 = vrot.lane.b32.xlu0 %v715, 12
    %v725 = vpop.permute.xlu0 %724
    %vm727 = vcmask 521312
    %728 = vst.msk [vmem:[#allocation2 + $0x8] sm:$0x3f] %vm727, %v725
    %vm729 = vcmask 1046112
    %730 = vst.msk [vmem:[#allocation2 + $0x8] sm:$0x3f] %vm729, %v725
    %731 = vrot.lane.b32.xlu0 %v715, 10
    %v732 = vpop.permute.xlu0 %731
    %vm734 = vcmask 521296
    %735 = vst.msk [vmem:[#allocation2 + $0x10] sm:$0x3f] %vm734, %v732
    %vm736 = vcmask 1046096
    %737 = vst.msk [vmem:[#allocation2 + $0x10] sm:$0x3f] %vm736, %v732
    %738 = vrot.lane.b32.xlu0 %v715, 8
    %v739 = vpop.permute.xlu0 %738
    %vm741 = vcmask 521280
    %742 = vst.msk [vmem:[#allocation2 + $0x18] sm:$0x3f] %vm741, %v739
    %vm743 = vcmask 1046080
    %744 = vst.msk [vmem:[#allocation2 + $0x18] sm:$0x3f] %vm743, %v739
    %745 = vrot.lane.b32.xlu0 %v715, 6
    %v746 = vpop.permute.xlu0 %745
    %vm748 = vcmask 521264
    %749 = vst.msk [vmem:[#allocation2 + $0x20] sm:$0x3f] %vm748, %v746
    %vm750 = vcmask 1046064
    %751 = vst.msk [vmem:[#allocation2 + $0x20] sm:$0x3f] %vm750, %v746
    %752 = vrot.lane.b32.xlu0 %v715, 4
    %v753 = vpop.permute.xlu0 %752
    %vm755 = vcmask 521248
    %756 = vst.msk [vmem:[#allocation2 + $0x28] sm:$0x3f] %vm755, %v753
    %vm757 = vcmask 1046048
    %758 = vst.msk [vmem:[#allocation2 + $0x28] sm:$0x3f] %vm757, %v753
    %759 = vrot.lane.b32.xlu0 %v715, 2
    %v760 = vpop.permute.xlu0 %759
    %vm762 = vcmask 521232
    %763 = vst.msk [vmem:[#allocation2 + $0x30] sm:$0x3f] %vm762, %v760
    %vm764 = vcmask 1046032
    %765 = vst.msk [vmem:[#allocation2 + $0x30] sm:$0x3f] %vm764, %v760
    %766 = vst [vmem:[#allocation2 + $0x38] sm:$0x3f] %v715
    %767 = vrot.lane.b32.xlu0 %v715, 126
    %v768 = vpop.permute.xlu0 %767
    %vm770 = vcmask 504832
    %771 = vst.msk [vmem:[#allocation2 + $0x40] sm:$0x3f] %vm770, %v768
    %vm772 = vcmask 1029632
    %773 = vst.msk [vmem:[#allocation2 + $0x40] sm:$0x3f] %vm772, %v768
    %774 = vrot.lane.b32.xlu0 %v715, 124
    %v775 = vpop.permute.xlu0 %774
    %vm777 = vcmask 488448
    %778 = vst.msk [vmem:[#allocation2 + $0x48] sm:$0x3f] %vm777, %v775
    %vm779 = vcmask 1013248
    %780 = vst.msk [vmem:[#allocation2 + $0x48] sm:$0x3f] %vm779, %v775
    %781 = vrot.lane.b32.xlu0 %v715, 122
    %v782 = vpop.permute.xlu0 %781
    %vm784 = vcmask 472064
    %785 = vst.msk [vmem:[#allocation2 + $0x50] sm:$0x3f] %vm784, %v782
    %vm786 = vcmask 996864
    %787 = vst.msk [vmem:[#allocation2 + $0x50] sm:$0x3f] %vm786, %v782
    %788 = vrot.lane.b32.xlu0 %v715, 120
    %v789 = vpop.permute.xlu0 %788
    %vm791 = vcmask 455680
    %792 = vst.msk [vmem:[#allocation2 + $0x58] sm:$0x3f] %vm791, %v789
    %vm793 = vcmask 980480
    %794 = vst.msk [vmem:[#allocation2 + $0x58] sm:$0x3f] %vm793, %v789
    %795 = vrot.lane.b32.xlu0 %v715, 118
    %v796 = vpop.permute.xlu0 %795
    %vm798 = vcmask 439296
    %799 = vst.msk [vmem:[#allocation2 + $0x60] sm:$0x3f] %vm798, %v796
    %vm800 = vcmask 964096
    %801 = vst.msk [vmem:[#allocation2 + $0x60] sm:$0x3f] %vm800, %v796
    %802 = vrot.lane.b32.xlu0 %v715, 116
    %v803 = vpop.permute.xlu0 %802
    %vm805 = vcmask 422912
    %806 = vst.msk [vmem:[#allocation2 + $0x68] sm:$0x3f] %vm805, %v803
    %vm807 = vcmask 947712
    %808 = vst.msk [vmem:[#allocation2 + $0x68] sm:$0x3f] %vm807, %v803
    %809 = vrot.lane.b32.xlu0 %v715, 114
    %v810 = vpop.permute.xlu0 %809
    %vm812 = vcmask 406528
    %813 = vst.msk [vmem:[#allocation2 + $0x70] sm:$0x3f] %vm812, %v810
    %vm814 = vcmask 931328
    %815 = vst.msk [vmem:[#allocation2 + $0x70] sm:$0x3f] %vm814, %v810
    %v816 = vld [vmem:[#allocation6 + $0x18] sm:$0x3f]
    %v817 = vld [vmem:[#allocation2] sm:$0xff]
    %v818 = vld [vmem:[#allocation2 + $0x8] sm:$0xff]
    %v819 = vld [vmem:[#allocation2 + $0x10] sm:$0xff]
    %v820 = vld [vmem:[#allocation2 + $0x18] sm:$0xff]
    %v821 = vld [vmem:[#allocation2 + $0x20] sm:$0xff]
    %v822 = vld [vmem:[#allocation2 + $0x28] sm:$0xff]
    %v823 = vld [vmem:[#allocation2 + $0x30] sm:$0xff]
    %v824 = vld [vmem:[#allocation2 + $0x38] sm:$0xff]
    %v825 = vld [vmem:[#allocation2 + $0x40] sm:$0xff]
    %v826 = vld [vmem:[#allocation2 + $0x48] sm:$0xff]
    %v827 = vld [vmem:[#allocation2 + $0x50] sm:$0xff]
    %v828 = vld [vmem:[#allocation2 + $0x58] sm:$0xff]
    %v829 = vld [vmem:[#allocation2 + $0x60] sm:$0xff]
    %v830 = vld [vmem:[#allocation2 + $0x68] sm:$0xff]
    %v831 = vld [vmem:[#allocation2 + $0x70] sm:$0xff]
    %v833 = vsel %vm173, %v816, 0
    %835 = vmatprep.subr.mxu0 0.0
    %836 = vmatpush1.msra.mxu0 %v817
    %837 = vmatprep.subr.mxu0 0.0
    %838 = vmatpush1.msra.mxu0 %v818
    %839 = vmatprep.subr.mxu0 0.0
    %840 = vmatpush1.msra.mxu0 %v819
    %841 = vmatprep.subr.mxu0 0.0
    %842 = vmatpush1.msra.mxu0 %v820
    %843 = vmatprep.subr.mxu0 0.0
    %844 = vmatpush1.msra.mxu0 %v821
    %845 = vmatprep.subr.mxu0 0.0
    %846 = vmatpush1.msra.mxu0 %v822
    %847 = vmatprep.subr.mxu0 0.0
    %848 = vmatpush1.msra.mxu0 %v823
    %849 = vmatprep.subr.mxu0 0.0
    %850 = vmatpush1.msra.mxu0 %v824
    %851 = vmatprep.subr.mxu0 0.0
    %852 = vmatpush1.msra.mxu0 %v825
    %853 = vmatprep.subr.mxu0 0.0
    %854 = vmatpush1.msra.mxu0 %v826
    %855 = vmatprep.subr.mxu0 0.0
    %856 = vmatpush1.msra.mxu0 %v827
    %857 = vmatprep.subr.mxu0 0.0
    %858 = vmatpush1.msra.mxu0 %v828
    %859 = vmatprep.subr.mxu0 0.0
    %860 = vmatpush1.msra.mxu0 %v829
    %861 = vmatprep.subr.mxu0 0.0
    %862 = vmatpush1.msra.mxu0 %v830
    %863 = vmatprep.subr.mxu0 0.0
    %864 = vmatpush1.msra.mxu0 %v831
    %865 = vmatprep.subr.mxu0 0.0
    %866 = vmatpush1.msra.mxu0 0.0
    %867 = vmatprep.subr.mxu0 0.0
    %868 = vmatpush1.msra.mxu0 0.0
    %869 = vmatprep.subr.mxu0 0.0
    %870 = vmatpush1.msra.mxu0 0.0
    %871 = vmatprep.subr.mxu0 0.0
    %872 = vmatpush1.msra.mxu0 0.0
    %873 = vmatprep.subr.mxu0 0.0
    %874 = vmatpush1.msra.mxu0 0.0
    %875 = vmatprep.subr.mxu0 0.0
    %876 = vmatpush1.msra.mxu0 0.0
    %877 = vmatprep.subr.mxu0 0.0
    %878 = vmatpush1.msra.mxu0 0.0
    %879 = vmatprep.subr.mxu0 0.0
    %880 = vmatpush1.msra.mxu0 0.0
    %881 = vmatprep.subr.mxu0 0.0
    %882 = vmatpush1.msra.mxu0 0.0
    %883 = vmatprep.subr.mxu0 0.0
    %884 = vmatpush1.msra.mxu0 0.0
    %885 = vmatprep.subr.mxu0 0.0
    %886 = vmatpush1.msra.mxu0 0.0
    %887 = vmatprep.subr.mxu0 0.0
    %888 = vmatpush1.msra.mxu0 0.0
    %889 = vmatprep.subr.mxu0 0.0
    %890 = vmatpush1.msra.mxu0 0.0
    %891 = vmatprep.subr.mxu0 0.0
    %892 = vmatpush1.msra.mxu0 0.0
    %893 = vmatprep.subr.mxu0 0.0
    %894 = vmatpush1.msra.mxu0 0.0
    %895 = vmatprep.subr.mxu0 0.0
    %896 = vmatpush1.msra.mxu0 0.0
    %897 = vmatprep.subr.mxu0 0.0
    %898 = vmatpush1.msra.mxu0 0.0
    %899 = vmatprep.mubr.f32.mxu0 0.0
    %900 = vmatmul.mubr.f32.gmra.mrb[0].mxu0 %v833
    %v901 = vpop.f32.mrb[0].mxu0
    %v902 = vadd.f32 0.0, %v901
    %v903 = vpop.f32.mrb[0].mxu0
    %904 = vdwg.mxu0
    %v905 = vmax.f32 %v902, 0.0
    %906 = vset.pattern.permute.xlu0 127
    %907 = vperm.xlu0 %906, %v816
    %v908 = vpop.permute.xlu0 %907
    %910 = vrot.lane.b32.xlu0 %v816, 8
    %v911 = vpop.permute.xlu0 %910
    %vm912 = vcmask 23552
    %v913 = vsel %vm912, %v911, 0
    %vm915 = vcmask 1042432
    %v916 = vsel %vm915, %v521, 0
    %918 = vmatprep.subr.mxu0 0.0
    %919 = vmatpush1.msra.mxu0 %v916
    %920 = vmatprep.subr.mxu0 0.0
    %921 = vmatpush1.msra.mxu0 0.0
    %922 = vmatprep.subr.mxu0 0.0
    %923 = vmatpush1.msra.mxu0 0.0
    %924 = vmatprep.subr.mxu0 0.0
    %925 = vmatpush1.msra.mxu0 0.0
    %926 = vmatprep.subr.mxu0 0.0
    %927 = vmatpush1.msra.mxu0 0.0
    %928 = vmatprep.subr.mxu0 0.0
    %929 = vmatpush1.msra.mxu0 0.0
    %930 = vmatprep.subr.mxu0 0.0
    %931 = vmatpush1.msra.mxu0 0.0
    %932 = vmatprep.subr.mxu0 0.0
    %933 = vmatpush1.msra.mxu0 0.0
    %934 = vmatprep.subr.mxu0 0.0
    %935 = vmatpush1.msra.mxu0 0.0
    %936 = vmatprep.subr.mxu0 0.0
    %937 = vmatpush1.msra.mxu0 0.0
    %938 = vmatprep.subr.mxu0 0.0
    %939 = vmatpush1.msra.mxu0 0.0
    %940 = vmatprep.subr.mxu0 0.0
    %941 = vmatpush1.msra.mxu0 0.0
    %942 = vmatprep.subr.mxu0 0.0
    %943 = vmatpush1.msra.mxu0 0.0
    %944 = vmatprep.subr.mxu0 0.0
    %945 = vmatpush1.msra.mxu0 0.0
    %946 = vmatprep.subr.mxu0 0.0
    %947 = vmatpush1.msra.mxu0 0.0
    %948 = vmatprep.subr.mxu0 0.0
    %949 = vmatpush1.msra.mxu0 0.0
    %950 = vmatprep.subr.mxu0 0.0
    %951 = vmatpush1.msra.mxu0 0.0
    %952 = vmatprep.subr.mxu0 0.0
    %953 = vmatpush1.msra.mxu0 0.0
    %954 = vmatprep.subr.mxu0 0.0
    %955 = vmatpush1.msra.mxu0 0.0
    %956 = vmatprep.subr.mxu0 0.0
    %957 = vmatpush1.msra.mxu0 0.0
    %958 = vmatprep.subr.mxu0 0.0
    %959 = vmatpush1.msra.mxu0 0.0
    %960 = vmatprep.subr.mxu0 0.0
    %961 = vmatpush1.msra.mxu0 0.0
    %962 = vmatprep.subr.mxu0 0.0
    %963 = vmatpush1.msra.mxu0 0.0
    %964 = vmatprep.subr.mxu0 0.0
    %965 = vmatpush1.msra.mxu0 0.0
    %966 = vmatprep.subr.mxu0 0.0
    %967 = vmatpush1.msra.mxu0 0.0
    %968 = vmatprep.subr.mxu0 0.0
    %969 = vmatpush1.msra.mxu0 0.0
    %970 = vmatprep.subr.mxu0 0.0
    %971 = vmatpush1.msra.mxu0 0.0
    %972 = vmatprep.subr.mxu0 0.0
    %973 = vmatpush1.msra.mxu0 0.0
    %974 = vmatprep.subr.mxu0 0.0
    %975 = vmatpush1.msra.mxu0 0.0
    %976 = vmatprep.subr.mxu0 0.0
    %977 = vmatpush1.msra.mxu0 0.0
    %978 = vmatprep.subr.mxu0 0.0
    %979 = vmatpush1.msra.mxu0 0.0
    %980 = vmatprep.subr.mxu0 0.0
    %981 = vmatpush1.msra.mxu0 0.0
    %982 = vmatprep.mubr.f32.mxu0 0.0
    %983 = vmatmul.mubr.f32.gmra.mrb[0].mxu0 %v913
    %v984 = vpop.f32.mrb[0].mxu0
    %v985 = vadd.f32 %v908, %v984
    %v986 = vpop.f32.mrb[0].mxu0
    %987 = vdwg.mxu0
    %v988 = vadd.f32 %v905, %v985
    %v989 = vmax.f32 %v988, 0.0
    %990 = vst [vmem:[#allocation2] sm:$0xff] 0.0
    %991 = vst [vmem:[#allocation2 + $0x8] sm:$0xff] 0.0
    %992 = vst [vmem:[#allocation2 + $0x10] sm:$0xff] 0.0
    %993 = vst [vmem:[#allocation2 + $0x18] sm:$0xff] 0.0
    %994 = vst [vmem:[#allocation2 + $0x20] sm:$0xff] 0.0
    %995 = vst [vmem:[#allocation2 + $0x28] sm:$0xff] 0.0
    %996 = vst [vmem:[#allocation2 + $0x30] sm:$0xff] 0.0
    %997 = vst [vmem:[#allocation2 + $0x38] sm:$0xff] 0.0
    %998 = vst [vmem:[#allocation2 + $0x40] sm:$0xff] 0.0
    %999 = vst [vmem:[#allocation2 + $0x48] sm:$0xff] 0.0
    %1000 = vst [vmem:[#allocation2 + $0x50] sm:$0xff] 0.0
    %1001 = vst [vmem:[#allocation2 + $0x58] sm:$0xff] 0.0
    %1002 = vst [vmem:[#allocation2 + $0x60] sm:$0xff] 0.0
    %1003 = vst [vmem:[#allocation2 + $0x68] sm:$0xff] 0.0
    %1004 = vst [vmem:[#allocation2 + $0x70] sm:$0xff] 0.0
    %1005 = vst [vmem:[#allocation2 + $0x3f] sm:$0x1] 1.0
    %1007 = vrot.lane.b32.xlu0 %v989, 28
    %v1008 = vpop.permute.xlu0 %1007
    %vm1010 = vcmask 521440
    %1011 = vst.msk [vmem:[#allocation2] sm:$0x3f] %vm1010, %v1008
    %vm1012 = vcmask 1046240
    %1013 = vst.msk [vmem:[#allocation2] sm:$0x3f] %vm1012, %v1008
    %1014 = vrot.lane.b32.xlu0 %v989, 24
    %v1015 = vpop.permute.xlu0 %1014
    %vm1017 = vcmask 521408
    %1018 = vst.msk [vmem:[#allocation2 + $0x8] sm:$0x3f] %vm1017, %v1015
    %vm1019 = vcmask 1046208
    %1020 = vst.msk [vmem:[#allocation2 + $0x8] sm:$0x3f] %vm1019, %v1015
    %1021 = vrot.lane.b32.xlu0 %v989, 20
    %v1022 = vpop.permute.xlu0 %1021
    %vm1024 = vcmask 521376
    %1025 = vst.msk [vmem:[#allocation2 + $0x10] sm:$0x3f] %vm1024, %v1022
    %vm1026 = vcmask 1046176
    %1027 = vst.msk [vmem:[#allocation2 + $0x10] sm:$0x3f] %vm1026, %v1022
    %1028 = vrot.lane.b32.xlu0 %v989, 16
    %v1029 = vpop.permute.xlu0 %1028
    %vm1031 = vcmask 521344
    %1032 = vst.msk [vmem:[#allocation2 + $0x18] sm:$0x3f] %vm1031, %v1029
    %vm1033 = vcmask 1046144
    %1034 = vst.msk [vmem:[#allocation2 + $0x18] sm:$0x3f] %vm1033, %v1029
    %1035 = vrot.lane.b32.xlu0 %v989, 12
    %v1036 = vpop.permute.xlu0 %1035
    %1038 = vst.msk [vmem:[#allocation2 + $0x20] sm:$0x3f] %vm727, %v1036
    %1039 = vst.msk [vmem:[#allocation2 + $0x20] sm:$0x3f] %vm729, %v1036
    %1040 = vrot.lane.b32.xlu0 %v989, 8
    %v1041 = vpop.permute.xlu0 %1040
    %1043 = vst.msk [vmem:[#allocation2 + $0x28] sm:$0x3f] %vm741, %v1041
    %1044 = vst.msk [vmem:[#allocation2 + $0x28] sm:$0x3f] %vm743, %v1041
    %1045 = vrot.lane.b32.xlu0 %v989, 4
    %v1046 = vpop.permute.xlu0 %1045
    %1048 = vst.msk [vmem:[#allocation2 + $0x30] sm:$0x3f] %vm755, %v1046
    %1049 = vst.msk [vmem:[#allocation2 + $0x30] sm:$0x3f] %vm757, %v1046
    %1050 = vst [vmem:[#allocation2 + $0x38] sm:$0x3f] %v989
    %1051 = vrot.lane.b32.xlu0 %v989, 124
    %v1052 = vpop.permute.xlu0 %1051
    %1054 = vst.msk [vmem:[#allocation2 + $0x40] sm:$0x3f] %vm777, %v1052
    %1055 = vst.msk [vmem:[#allocation2 + $0x40] sm:$0x3f] %vm779, %v1052
    %1056 = vrot.lane.b32.xlu0 %v989, 120
    %v1057 = vpop.permute.xlu0 %1056
    %1059 = vst.msk [vmem:[#allocation2 + $0x48] sm:$0x3f] %vm791, %v1057
    %1060 = vst.msk [vmem:[#allocation2 + $0x48] sm:$0x3f] %vm793, %v1057
    %1061 = vrot.lane.b32.xlu0 %v989, 116
    %v1062 = vpop.permute.xlu0 %1061
    %1064 = vst.msk [vmem:[#allocation2 + $0x50] sm:$0x3f] %vm805, %v1062
    %1065 = vst.msk [vmem:[#allocation2 + $0x50] sm:$0x3f] %vm807, %v1062
    %1066 = vrot.lane.b32.xlu0 %v989, 112
    %v1067 = vpop.permute.xlu0 %1066
    %vm1069 = vcmask 390144
    %1070 = vst.msk [vmem:[#allocation2 + $0x58] sm:$0x3f] %vm1069, %v1067
    %vm1071 = vcmask 914944
    %1072 = vst.msk [vmem:[#allocation2 + $0x58] sm:$0x3f] %vm1071, %v1067
    %1073 = vrot.lane.b32.xlu0 %v989, 108
    %v1074 = vpop.permute.xlu0 %1073
    %vm1076 = vcmask 357376
    %1077 = vst.msk [vmem:[#allocation2 + $0x60] sm:$0x3f] %vm1076, %v1074
    %vm1078 = vcmask 882176
    %1079 = vst.msk [vmem:[#allocation2 + $0x60] sm:$0x3f] %vm1078, %v1074
    %1080 = vrot.lane.b32.xlu0 %v989, 104
    %v1081 = vpop.permute.xlu0 %1080
    %vm1083 = vcmask 324608
    %1084 = vst.msk [vmem:[#allocation2 + $0x68] sm:$0x3f] %vm1083, %v1081
    %vm1085 = vcmask 849408
    %1086 = vst.msk [vmem:[#allocation2 + $0x68] sm:$0x3f] %vm1085, %v1081
    %1087 = vrot.lane.b32.xlu0 %v989, 100
    %v1088 = vpop.permute.xlu0 %1087
    %vm1090 = vcmask 291840
    %1091 = vst.msk [vmem:[#allocation2 + $0x70] sm:$0x3f] %vm1090, %v1088
    %vm1092 = vcmask 816640
    %1093 = vst.msk [vmem:[#allocation2 + $0x70] sm:$0x3f] %vm1092, %v1088
    %v1094 = vld [vmem:[#allocation6 + $0x20] sm:$0x3f]
    %v1095 = vld [vmem:[#allocation2] sm:$0xff]
    %v1096 = vld [vmem:[#allocation2 + $0x8] sm:$0xff]
    %v1097 = vld [vmem:[#allocation2 + $0x10] sm:$0xff]
    %v1098 = vld [vmem:[#allocation2 + $0x18] sm:$0xff]
    %v1099 = vld [vmem:[#allocation2 + $0x20] sm:$0xff]
    %v1100 = vld [vmem:[#allocation2 + $0x28] sm:$0xff]
    %v1101 = vld [vmem:[#allocation2 + $0x30] sm:$0xff]
    %v1102 = vld [vmem:[#allocation2 + $0x38] sm:$0xff]
    %v1103 = vld [vmem:[#allocation2 + $0x40] sm:$0xff]
    %v1104 = vld [vmem:[#allocation2 + $0x48] sm:$0xff]
    %v1105 = vld [vmem:[#allocation2 + $0x50] sm:$0xff]
    %v1106 = vld [vmem:[#allocation2 + $0x58] sm:$0xff]
    %v1107 = vld [vmem:[#allocation2 + $0x60] sm:$0xff]
    %v1108 = vld [vmem:[#allocation2 + $0x68] sm:$0xff]
    %v1109 = vld [vmem:[#allocation2 + $0x70] sm:$0xff]
    %v1111 = vsel %vm173, %v1094, 0
    %1113 = vmatprep.subr.mxu0 0.0
    %1114 = vmatpush1.msra.mxu0 %v1095
    %1115 = vmatprep.subr.mxu0 0.0
    %1116 = vmatpush1.msra.mxu0 %v1096
    %1117 = vmatprep.subr.mxu0 0.0
    %1118 = vmatpush1.msra.mxu0 %v1097
    %1119 = vmatprep.subr.mxu0 0.0
    %1120 = vmatpush1.msra.mxu0 %v1098
    %1121 = vmatprep.subr.mxu0 0.0
    %1122 = vmatpush1.msra.mxu0 %v1099
    %1123 = vmatprep.subr.mxu0 0.0
    %1124 = vmatpush1.msra.mxu0 %v1100
    %1125 = vmatprep.subr.mxu0 0.0
    %1126 = vmatpush1.msra.mxu0 %v1101
    %1127 = vmatprep.subr.mxu0 0.0
    %1128 = vmatpush1.msra.mxu0 %v1102
    %1129 = vmatprep.subr.mxu0 0.0
    %1130 = vmatpush1.msra.mxu0 %v1103
    %1131 = vmatprep.subr.mxu0 0.0
    %1132 = vmatpush1.msra.mxu0 %v1104
    %1133 = vmatprep.subr.mxu0 0.0
    %1134 = vmatpush1.msra.mxu0 %v1105
    %1135 = vmatprep.subr.mxu0 0.0
    %1136 = vmatpush1.msra.mxu0 %v1106
    %1137 = vmatprep.subr.mxu0 0.0
    %1138 = vmatpush1.msra.mxu0 %v1107
    %1139 = vmatprep.subr.mxu0 0.0
    %1140 = vmatpush1.msra.mxu0 %v1108
    %1141 = vmatprep.subr.mxu0 0.0
    %1142 = vmatpush1.msra.mxu0 %v1109
    %1143 = vmatprep.subr.mxu0 0.0
    %1144 = vmatpush1.msra.mxu0 0.0
    %1145 = vmatprep.subr.mxu0 0.0
    %1146 = vmatpush1.msra.mxu0 0.0
    %1147 = vmatprep.subr.mxu0 0.0
    %1148 = vmatpush1.msra.mxu0 0.0
    %1149 = vmatprep.subr.mxu0 0.0
    %1150 = vmatpush1.msra.mxu0 0.0
    %1151 = vmatprep.subr.mxu0 0.0
    %1152 = vmatpush1.msra.mxu0 0.0
    %1153 = vmatprep.subr.mxu0 0.0
    %1154 = vmatpush1.msra.mxu0 0.0
    %1155 = vmatprep.subr.mxu0 0.0
    %1156 = vmatpush1.msra.mxu0 0.0
    %1157 = vmatprep.subr.mxu0 0.0
    %1158 = vmatpush1.msra.mxu0 0.0
    %1159 = vmatprep.subr.mxu0 0.0
    %1160 = vmatpush1.msra.mxu0 0.0
    %1161 = vmatprep.subr.mxu0 0.0
    %1162 = vmatpush1.msra.mxu0 0.0
    %1163 = vmatprep.subr.mxu0 0.0
    %1164 = vmatpush1.msra.mxu0 0.0
    %1165 = vmatprep.subr.mxu0 0.0
    %1166 = vmatpush1.msra.mxu0 0.0
    %1167 = vmatprep.subr.mxu0 0.0
    %1168 = vmatpush1.msra.mxu0 0.0
    %1169 = vmatprep.subr.mxu0 0.0
    %1170 = vmatpush1.msra.mxu0 0.0
    %1171 = vmatprep.subr.mxu0 0.0
    %1172 = vmatpush1.msra.mxu0 0.0
    %1173 = vmatprep.subr.mxu0 0.0
    %1174 = vmatpush1.msra.mxu0 0.0
    %1175 = vmatprep.subr.mxu0 0.0
    %1176 = vmatpush1.msra.mxu0 0.0
    %1177 = vmatprep.mubr.f32.mxu0 0.0
    %1178 = vmatmul.mubr.f32.gmra.mrb[0].mxu0 %v1111
    %v1179 = vpop.f32.mrb[0].mxu0
    %v1180 = vadd.f32 0.0, %v1179
    %v1181 = vpop.f32.mrb[0].mxu0
    %1182 = vdwg.mxu0
    %v1183 = vmax.f32 %v1180, 0.0
    %1185 = vrot.lane.b32.xlu0 %v1183, 28
    %v1186 = vpop.permute.xlu0 %1185
    %1188 = vst.msk [vmem:[#allocation2] sm:$0x3f] %vm1010, %v1186
    %1189 = vst.msk [vmem:[#allocation2] sm:$0x3f] %vm1012, %v1186
    %1190 = vrot.lane.b32.xlu0 %v1183, 24
    %v1191 = vpop.permute.xlu0 %1190
    %1193 = vst.msk [vmem:[#allocation2 + $0x8] sm:$0x3f] %vm1017, %v1191
    %1194 = vst.msk [vmem:[#allocation2 + $0x8] sm:$0x3f] %vm1019, %v1191
    %1195 = vrot.lane.b32.xlu0 %v1183, 20
    %v1196 = vpop.permute.xlu0 %1195
    %1198 = vst.msk [vmem:[#allocation2 + $0x10] sm:$0x3f] %vm1024, %v1196
    %1199 = vst.msk [vmem:[#allocation2 + $0x10] sm:$0x3f] %vm1026, %v1196
    %1200 = vrot.lane.b32.xlu0 %v1183, 16
    %v1201 = vpop.permute.xlu0 %1200
    %1203 = vst.msk [vmem:[#allocation2 + $0x18] sm:$0x3f] %vm1031, %v1201
    %1204 = vst.msk [vmem:[#allocation2 + $0x18] sm:$0x3f] %vm1033, %v1201
    %1205 = vrot.lane.b32.xlu0 %v1183, 12
    %v1206 = vpop.permute.xlu0 %1205
    %1208 = vst.msk [vmem:[#allocation2 + $0x20] sm:$0x3f] %vm727, %v1206
    %1209 = vst.msk [vmem:[#allocation2 + $0x20] sm:$0x3f] %vm729, %v1206
    %1210 = vrot.lane.b32.xlu0 %v1183, 8
    %v1211 = vpop.permute.xlu0 %1210
    %1213 = vst.msk [vmem:[#allocation2 + $0x28] sm:$0x3f] %vm741, %v1211
    %1214 = vst.msk [vmem:[#allocation2 + $0x28] sm:$0x3f] %vm743, %v1211
    %1215 = vrot.lane.b32.xlu0 %v1183, 4
    %v1216 = vpop.permute.xlu0 %1215
    %1218 = vst.msk [vmem:[#allocation2 + $0x30] sm:$0x3f] %vm755, %v1216
    %1219 = vst.msk [vmem:[#allocation2 + $0x30] sm:$0x3f] %vm757, %v1216
    %1220 = vst [vmem:[#allocation2 + $0x38] sm:$0x3f] %v1183
    %1221 = vrot.lane.b32.xlu0 %v1183, 124
    %v1222 = vpop.permute.xlu0 %1221
    %1224 = vst.msk [vmem:[#allocation2 + $0x40] sm:$0x3f] %vm777, %v1222
    %1225 = vst.msk [vmem:[#allocation2 + $0x40] sm:$0x3f] %vm779, %v1222
    %1226 = vrot.lane.b32.xlu0 %v1183, 120
    %v1227 = vpop.permute.xlu0 %1226
    %1229 = vst.msk [vmem:[#allocation2 + $0x48] sm:$0x3f] %vm791, %v1227
    %1230 = vst.msk [vmem:[#allocation2 + $0x48] sm:$0x3f] %vm793, %v1227
    %1231 = vrot.lane.b32.xlu0 %v1183, 116
    %v1232 = vpop.permute.xlu0 %1231
    %1234 = vst.msk [vmem:[#allocation2 + $0x50] sm:$0x3f] %vm805, %v1232
    %1235 = vst.msk [vmem:[#allocation2 + $0x50] sm:$0x3f] %vm807, %v1232
    %1236 = vrot.lane.b32.xlu0 %v1183, 112
    %v1237 = vpop.permute.xlu0 %1236
    %1239 = vst.msk [vmem:[#allocation2 + $0x58] sm:$0x3f] %vm1069, %v1237
    %1240 = vst.msk [vmem:[#allocation2 + $0x58] sm:$0x3f] %vm1071, %v1237
    %1241 = vrot.lane.b32.xlu0 %v1183, 108
    %v1242 = vpop.permute.xlu0 %1241
    %1244 = vst.msk [vmem:[#allocation2 + $0x60] sm:$0x3f] %vm1076, %v1242
    %1245 = vst.msk [vmem:[#allocation2 + $0x60] sm:$0x3f] %vm1078, %v1242
    %1246 = vrot.lane.b32.xlu0 %v1183, 104
    %v1247 = vpop.permute.xlu0 %1246
    %1249 = vst.msk [vmem:[#allocation2 + $0x68] sm:$0x3f] %vm1083, %v1247
    %1250 = vst.msk [vmem:[#allocation2 + $0x68] sm:$0x3f] %vm1085, %v1247
    %1251 = vrot.lane.b32.xlu0 %v1183, 100
    %v1252 = vpop.permute.xlu0 %1251
    %1254 = vst.msk [vmem:[#allocation2 + $0x70] sm:$0x3f] %vm1090, %v1252
    %1255 = vst.msk [vmem:[#allocation2 + $0x70] sm:$0x3f] %vm1092, %v1252
    %v1256 = vld [vmem:[#allocation6 + $0x28] sm:$0x3f]
    %v1257 = vld [vmem:[#allocation2] sm:$0xff]
    %v1258 = vld [vmem:[#allocation2 + $0x8] sm:$0xff]
    %v1259 = vld [vmem:[#allocation2 + $0x10] sm:$0xff]
    %v1260 = vld [vmem:[#allocation2 + $0x18] sm:$0xff]
    %v1261 = vld [vmem:[#allocation2 + $0x20] sm:$0xff]
    %v1262 = vld [vmem:[#allocation2 + $0x28] sm:$0xff]
    %v1263 = vld [vmem:[#allocation2 + $0x30] sm:$0xff]
    %v1264 = vld [vmem:[#allocation2 + $0x38] sm:$0xff]
    %v1265 = vld [vmem:[#allocation2 + $0x40] sm:$0xff]
    %v1266 = vld [vmem:[#allocation2 + $0x48] sm:$0xff]
    %v1267 = vld [vmem:[#allocation2 + $0x50] sm:$0xff]
    %v1268 = vld [vmem:[#allocation2 + $0x58] sm:$0xff]
    %v1269 = vld [vmem:[#allocation2 + $0x60] sm:$0xff]
    %v1270 = vld [vmem:[#allocation2 + $0x68] sm:$0xff]
    %v1271 = vld [vmem:[#allocation2 + $0x70] sm:$0xff]
    %v1273 = vsel %vm173, %v1256, 0
    %1275 = vmatprep.subr.mxu0 0.0
    %1276 = vmatpush1.msra.mxu0 %v1257
    %1277 = vmatprep.subr.mxu0 0.0
    %1278 = vmatpush1.msra.mxu0 %v1258
    %1279 = vmatprep.subr.mxu0 0.0
    %1280 = vmatpush1.msra.mxu0 %v1259
    %1281 = vmatprep.subr.mxu0 0.0
    %1282 = vmatpush1.msra.mxu0 %v1260
    %1283 = vmatprep.subr.mxu0 0.0
    %1284 = vmatpush1.msra.mxu0 %v1261
    %1285 = vmatprep.subr.mxu0 0.0
    %1286 = vmatpush1.msra.mxu0 %v1262
    %1287 = vmatprep.subr.mxu0 0.0
    %1288 = vmatpush1.msra.mxu0 %v1263
    %1289 = vmatprep.subr.mxu0 0.0
    %1290 = vmatpush1.msra.mxu0 %v1264
    %1291 = vmatprep.subr.mxu0 0.0
    %1292 = vmatpush1.msra.mxu0 %v1265
    %1293 = vmatprep.subr.mxu0 0.0
    %1294 = vmatpush1.msra.mxu0 %v1266
    %1295 = vmatprep.subr.mxu0 0.0
    %1296 = vmatpush1.msra.mxu0 %v1267
    %1297 = vmatprep.subr.mxu0 0.0
    %1298 = vmatpush1.msra.mxu0 %v1268
    %1299 = vmatprep.subr.mxu0 0.0
    %1300 = vmatpush1.msra.mxu0 %v1269
    %1301 = vmatprep.subr.mxu0 0.0
    %1302 = vmatpush1.msra.mxu0 %v1270
    %1303 = vmatprep.subr.mxu0 0.0
    %1304 = vmatpush1.msra.mxu0 %v1271
    %1305 = vmatprep.subr.mxu0 0.0
    %1306 = vmatpush1.msra.mxu0 0.0
    %1307 = vmatprep.subr.mxu0 0.0
    %1308 = vmatpush1.msra.mxu0 0.0
    %1309 = vmatprep.subr.mxu0 0.0
    %1310 = vmatpush1.msra.mxu0 0.0
    %1311 = vmatprep.subr.mxu0 0.0
    %1312 = vmatpush1.msra.mxu0 0.0
    %1313 = vmatprep.subr.mxu0 0.0
    %1314 = vmatpush1.msra.mxu0 0.0
    %1315 = vmatprep.subr.mxu0 0.0
    %1316 = vmatpush1.msra.mxu0 0.0
    %1317 = vmatprep.subr.mxu0 0.0
    %1318 = vmatpush1.msra.mxu0 0.0
    %1319 = vmatprep.subr.mxu0 0.0
    %1320 = vmatpush1.msra.mxu0 0.0
    %1321 = vmatprep.subr.mxu0 0.0
    %1322 = vmatpush1.msra.mxu0 0.0
    %1323 = vmatprep.subr.mxu0 0.0
    %1324 = vmatpush1.msra.mxu0 0.0
    %1325 = vmatprep.subr.mxu0 0.0
    %1326 = vmatpush1.msra.mxu0 0.0
    %1327 = vmatprep.subr.mxu0 0.0
    %1328 = vmatpush1.msra.mxu0 0.0
    %1329 = vmatprep.subr.mxu0 0.0
    %1330 = vmatpush1.msra.mxu0 0.0
    %1331 = vmatprep.subr.mxu0 0.0
    %1332 = vmatpush1.msra.mxu0 0.0
    %1333 = vmatprep.subr.mxu0 0.0
    %1334 = vmatpush1.msra.mxu0 0.0
    %1335 = vmatprep.subr.mxu0 0.0
    %1336 = vmatpush1.msra.mxu0 0.0
    %1337 = vmatprep.subr.mxu0 0.0
    %1338 = vmatpush1.msra.mxu0 0.0
    %1339 = vmatprep.mubr.f32.mxu0 0.0
    %1340 = vmatmul.mubr.f32.gmra.mrb[0].mxu0 %v1273
    %v1341 = vpop.f32.mrb[0].mxu0
    %v1342 = vadd.f32 0.0, %v1341
    %v1343 = vpop.f32.mrb[0].mxu0
    %1344 = vdwg.mxu0
    %v1345 = vmax.f32 %v1342, 0.0
    %v1346 = vadd.f32 %v1345, %v989
    %v1347 = vmax.f32 %v1346, 0.0
    %1348 = vst [vmem:[#allocation2] sm:$0xff] 0.0
    %1349 = vst [vmem:[#allocation2 + $0x8] sm:$0xff] 0.0
    %1350 = vst [vmem:[#allocation2 + $0x10] sm:$0xff] 0.0
    %1351 = vst [vmem:[#allocation2 + $0x18] sm:$0xff] 0.0
    %1352 = vst [vmem:[#allocation2 + $0x20] sm:$0xff] 0.0
    %1353 = vst [vmem:[#allocation2 + $0x28] sm:$0xff] 0.0
    %1354 = vst [vmem:[#allocation2 + $0x30] sm:$0xff] 0.0
    %1355 = vst [vmem:[#allocation2 + $0x38] sm:$0xff] 0.0
    %1356 = vst [vmem:[#allocation2 + $0x40] sm:$0xff] 0.0
    %1357 = vst [vmem:[#allocation2 + $0x48] sm:$0xff] 0.0
    %1358 = vst [vmem:[#allocation2 + $0x50] sm:$0xff] 0.0
    %1359 = vst [vmem:[#allocation2 + $0x58] sm:$0xff] 0.0
    %1360 = vst [vmem:[#allocation2 + $0x60] sm:$0xff] 0.0
    %1361 = vst [vmem:[#allocation2 + $0x68] sm:$0xff] 0.0
    %1362 = vst [vmem:[#allocation2 + $0x70] sm:$0xff] 0.0
    %1363 = vst [vmem:[#allocation2 + $0x3f] sm:$0x1] 1.0
    %1365 = vrot.lane.b32.xlu0 %v1347, 56
    %v1366 = vpop.permute.xlu0 %1365
    %vm1368 = vcmask 521664
    %1369 = vst.msk [vmem:[#allocation2] sm:$0x3f] %vm1368, %v1366
    %vm1370 = vcmask 1046464
    %1371 = vst.msk [vmem:[#allocation2] sm:$0x3f] %vm1370, %v1366
    %1372 = vrot.lane.b32.xlu0 %v1347, 48
    %v1373 = vpop.permute.xlu0 %1372
    %vm1375 = vcmask 521600
    %1376 = vst.msk [vmem:[#allocation2 + $0x8] sm:$0x3f] %vm1375, %v1373
    %vm1377 = vcmask 1046400
    %1378 = vst.msk [vmem:[#allocation2 + $0x8] sm:$0x3f] %vm1377, %v1373
    %1379 = vrot.lane.b32.xlu0 %v1347, 40
    %v1380 = vpop.permute.xlu0 %1379
    %vm1382 = vcmask 521536
    %1383 = vst.msk [vmem:[#allocation2 + $0x10] sm:$0x3f] %vm1382, %v1380
    %vm1384 = vcmask 1046336
    %1385 = vst.msk [vmem:[#allocation2 + $0x10] sm:$0x3f] %vm1384, %v1380
    %1386 = vrot.lane.b32.xlu0 %v1347, 32
    %v1387 = vpop.permute.xlu0 %1386
    %vm1389 = vcmask 521472
    %1390 = vst.msk [vmem:[#allocation2 + $0x18] sm:$0x3f] %vm1389, %v1387
    %vm1391 = vcmask 1046272
    %1392 = vst.msk [vmem:[#allocation2 + $0x18] sm:$0x3f] %vm1391, %v1387
    %1393 = vrot.lane.b32.xlu0 %v1347, 24
    %v1394 = vpop.permute.xlu0 %1393
    %1396 = vst.msk [vmem:[#allocation2 + $0x20] sm:$0x3f] %vm1017, %v1394
    %1397 = vst.msk [vmem:[#allocation2 + $0x20] sm:$0x3f] %vm1019, %v1394
    %1398 = vrot.lane.b32.xlu0 %v1347, 16
    %v1399 = vpop.permute.xlu0 %1398
    %1401 = vst.msk [vmem:[#allocation2 + $0x28] sm:$0x3f] %vm1031, %v1399
    %1402 = vst.msk [vmem:[#allocation2 + $0x28] sm:$0x3f] %vm1033, %v1399
    %1403 = vrot.lane.b32.xlu0 %v1347, 8
    %v1404 = vpop.permute.xlu0 %1403
    %1406 = vst.msk [vmem:[#allocation2 + $0x30] sm:$0x3f] %vm741, %v1404
    %1407 = vst.msk [vmem:[#allocation2 + $0x30] sm:$0x3f] %vm743, %v1404
    %1408 = vst [vmem:[#allocation2 + $0x38] sm:$0x3f] %v1347
    %1409 = vrot.lane.b32.xlu0 %v1347, 120
    %v1410 = vpop.permute.xlu0 %1409
    %1412 = vst.msk [vmem:[#allocation2 + $0x40] sm:$0x3f] %vm791, %v1410
    %1413 = vst.msk [vmem:[#allocation2 + $0x40] sm:$0x3f] %vm793, %v1410
    %1414 = vrot.lane.b32.xlu0 %v1347, 112
    %v1415 = vpop.permute.xlu0 %1414
    %1417 = vst.msk [vmem:[#allocation2 + $0x48] sm:$0x3f] %vm1069, %v1415
    %1418 = vst.msk [vmem:[#allocation2 + $0x48] sm:$0x3f] %vm1071, %v1415
    %1419 = vrot.lane.b32.xlu0 %v1347, 104
    %v1420 = vpop.permute.xlu0 %1419
    %1422 = vst.msk [vmem:[#allocation2 + $0x50] sm:$0x3f] %vm1083, %v1420
    %1423 = vst.msk [vmem:[#allocation2 + $0x50] sm:$0x3f] %vm1085, %v1420
    %1424 = vrot.lane.b32.xlu0 %v1347, 96
    %v1425 = vpop.permute.xlu0 %1424
    %vm1427 = vcmask 259072
    %1428 = vst.msk [vmem:[#allocation2 + $0x58] sm:$0x3f] %vm1427, %v1425
    %vm1429 = vcmask 783872
    %1430 = vst.msk [vmem:[#allocation2 + $0x58] sm:$0x3f] %vm1429, %v1425
    %1431 = vrot.lane.b32.xlu0 %v1347, 88
    %v1432 = vpop.permute.xlu0 %1431
    %vm1434 = vcmask 193536
    %1435 = vst.msk [vmem:[#allocation2 + $0x60] sm:$0x3f] %vm1434, %v1432
    %vm1436 = vcmask 718336
    %1437 = vst.msk [vmem:[#allocation2 + $0x60] sm:$0x3f] %vm1436, %v1432
    %1438 = vrot.lane.b32.xlu0 %v1347, 80
    %v1439 = vpop.permute.xlu0 %1438
    %vm1441 = vcmask 128000
    %1442 = vst.msk [vmem:[#allocation2 + $0x68] sm:$0x3f] %vm1441, %v1439
    %vm1443 = vcmask 652800
    %1444 = vst.msk [vmem:[#allocation2 + $0x68] sm:$0x3f] %vm1443, %v1439
    %1445 = vrot.lane.b32.xlu0 %v1347, 72
    %v1446 = vpop.permute.xlu0 %1445
    %vm1448 = vcmask 62464
    %1449 = vst.msk [vmem:[#allocation2 + $0x70] sm:$0x3f] %vm1448, %v1446
    %vm1450 = vcmask 587264
    %1451 = vst.msk [vmem:[#allocation2 + $0x70] sm:$0x3f] %vm1450, %v1446
    %v1452 = vld [vmem:[#allocation6 + $0x30] sm:$0x3f]
    %v1453 = vld [vmem:[#allocation2] sm:$0xff]
    %v1454 = vld [vmem:[#allocation2 + $0x8] sm:$0xff]
    %v1455 = vld [vmem:[#allocation2 + $0x10] sm:$0xff]
    %v1456 = vld [vmem:[#allocation2 + $0x18] sm:$0xff]
    %v1457 = vld [vmem:[#allocation2 + $0x20] sm:$0xff]
    %v1458 = vld [vmem:[#allocation2 + $0x28] sm:$0xff]
    %v1459 = vld [vmem:[#allocation2 + $0x30] sm:$0xff]
    %v1460 = vld [vmem:[#allocation2 + $0x38] sm:$0xff]
    %v1461 = vld [vmem:[#allocation2 + $0x40] sm:$0xff]
    %v1462 = vld [vmem:[#allocation2 + $0x48] sm:$0xff]
    %v1463 = vld [vmem:[#allocation2 + $0x50] sm:$0xff]
    %v1464 = vld [vmem:[#allocation2 + $0x58] sm:$0xff]
    %v1465 = vld [vmem:[#allocation2 + $0x60] sm:$0xff]
    %v1466 = vld [vmem:[#allocation2 + $0x68] sm:$0xff]
    %v1467 = vld [vmem:[#allocation2 + $0x70] sm:$0xff]
    %v1469 = vsel %vm173, %v1452, 0
    %1471 = vmatprep.subr.mxu0 0.0
    %1472 = vmatpush1.msra.mxu0 %v1453
    %1473 = vmatprep.subr.mxu0 0.0
    %1474 = vmatpush1.msra.mxu0 %v1454
    %1475 = vmatprep.subr.mxu0 0.0
    %1476 = vmatpush1.msra.mxu0 %v1455
    %1477 = vmatprep.subr.mxu0 0.0
    %1478 = vmatpush1.msra.mxu0 %v1456
    %1479 = vmatprep.subr.mxu0 0.0
    %1480 = vmatpush1.msra.mxu0 %v1457
    %1481 = vmatprep.subr.mxu0 0.0
    %1482 = vmatpush1.msra.mxu0 %v1458
    %1483 = vmatprep.subr.mxu0 0.0
    %1484 = vmatpush1.msra.mxu0 %v1459
    %1485 = vmatprep.subr.mxu0 0.0
    %1486 = vmatpush1.msra.mxu0 %v1460
    %1487 = vmatprep.subr.mxu0 0.0
    %1488 = vmatpush1.msra.mxu0 %v1461
    %1489 = vmatprep.subr.mxu0 0.0
    %1490 = vmatpush1.msra.mxu0 %v1462
    %1491 = vmatprep.subr.mxu0 0.0
    %1492 = vmatpush1.msra.mxu0 %v1463
    %1493 = vmatprep.subr.mxu0 0.0
    %1494 = vmatpush1.msra.mxu0 %v1464
    %1495 = vmatprep.subr.mxu0 0.0
    %1496 = vmatpush1.msra.mxu0 %v1465
    %1497 = vmatprep.subr.mxu0 0.0
    %1498 = vmatpush1.msra.mxu0 %v1466
    %1499 = vmatprep.subr.mxu0 0.0
    %1500 = vmatpush1.msra.mxu0 %v1467
    %1501 = vmatprep.subr.mxu0 0.0
    %1502 = vmatpush1.msra.mxu0 0.0
    %1503 = vmatprep.subr.mxu0 0.0
    %1504 = vmatpush1.msra.mxu0 0.0
    %1505 = vmatprep.subr.mxu0 0.0
    %1506 = vmatpush1.msra.mxu0 0.0
    %1507 = vmatprep.subr.mxu0 0.0
    %1508 = vmatpush1.msra.mxu0 0.0
    %1509 = vmatprep.subr.mxu0 0.0
    %1510 = vmatpush1.msra.mxu0 0.0
    %1511 = vmatprep.subr.mxu0 0.0
    %1512 = vmatpush1.msra.mxu0 0.0
    %1513 = vmatprep.subr.mxu0 0.0
    %1514 = vmatpush1.msra.mxu0 0.0
    %1515 = vmatprep.subr.mxu0 0.0
    %1516 = vmatpush1.msra.mxu0 0.0
    %1517 = vmatprep.subr.mxu0 0.0
    %1518 = vmatpush1.msra.mxu0 0.0
    %1519 = vmatprep.subr.mxu0 0.0
    %1520 = vmatpush1.msra.mxu0 0.0
    %1521 = vmatprep.subr.mxu0 0.0
    %1522 = vmatpush1.msra.mxu0 0.0
    %1523 = vmatprep.subr.mxu0 0.0
    %1524 = vmatpush1.msra.mxu0 0.0
    %1525 = vmatprep.subr.mxu0 0.0
    %1526 = vmatpush1.msra.mxu0 0.0
    %1527 = vmatprep.subr.mxu0 0.0
    %1528 = vmatpush1.msra.mxu0 0.0
    %1529 = vmatprep.subr.mxu0 0.0
    %1530 = vmatpush1.msra.mxu0 0.0
    %1531 = vmatprep.subr.mxu0 0.0
    %1532 = vmatpush1.msra.mxu0 0.0
    %1533 = vmatprep.subr.mxu0 0.0
    %1534 = vmatpush1.msra.mxu0 0.0
    %1535 = vmatprep.mubr.f32.mxu0 0.0
    %1536 = vmatmul.mubr.f32.gmra.mrb[0].mxu0 %v1469
    %v1537 = vpop.f32.mrb[0].mxu0
    %v1538 = vadd.f32 0.0, %v1537
    %v1539 = vpop.f32.mrb[0].mxu0
    %1540 = vdwg.mxu0
    %v1541 = vmax.f32 %v1538, 0.0
    %1543 = vrot.lane.b32.xlu0 %v1541, 56
    %v1544 = vpop.permute.xlu0 %1543
    %1546 = vst.msk [vmem:[#allocation2] sm:$0x3f] %vm1368, %v1544
    %1547 = vst.msk [vmem:[#allocation2] sm:$0x3f] %vm1370, %v1544
    %1548 = vrot.lane.b32.xlu0 %v1541, 48
    %v1549 = vpop.permute.xlu0 %1548
    %1551 = vst.msk [vmem:[#allocation2 + $0x8] sm:$0x3f] %vm1375, %v1549
    %1552 = vst.msk [vmem:[#allocation2 + $0x8] sm:$0x3f] %vm1377, %v1549
    %1553 = vrot.lane.b32.xlu0 %v1541, 40
    %v1554 = vpop.permute.xlu0 %1553
    %1556 = vst.msk [vmem:[#allocation2 + $0x10] sm:$0x3f] %vm1382, %v1554
    %1557 = vst.msk [vmem:[#allocation2 + $0x10] sm:$0x3f] %vm1384, %v1554
    %1558 = vrot.lane.b32.xlu0 %v1541, 32
    %v1559 = vpop.permute.xlu0 %1558
    %1561 = vst.msk [vmem:[#allocation2 + $0x18] sm:$0x3f] %vm1389, %v1559
    %1562 = vst.msk [vmem:[#allocation2 + $0x18] sm:$0x3f] %vm1391, %v1559
    %1563 = vrot.lane.b32.xlu0 %v1541, 24
    %v1564 = vpop.permute.xlu0 %1563
    %1566 = vst.msk [vmem:[#allocation2 + $0x20] sm:$0x3f] %vm1017, %v1564
    %1567 = vst.msk [vmem:[#allocation2 + $0x20] sm:$0x3f] %vm1019, %v1564
    %1568 = vrot.lane.b32.xlu0 %v1541, 16
    %v1569 = vpop.permute.xlu0 %1568
    %1571 = vst.msk [vmem:[#allocation2 + $0x28] sm:$0x3f] %vm1031, %v1569
    %1572 = vst.msk [vmem:[#allocation2 + $0x28] sm:$0x3f] %vm1033, %v1569
    %1573 = vrot.lane.b32.xlu0 %v1541, 8
    %v1574 = vpop.permute.xlu0 %1573
    %1576 = vst.msk [vmem:[#allocation2 + $0x30] sm:$0x3f] %vm741, %v1574
    %1577 = vst.msk [vmem:[#allocation2 + $0x30] sm:$0x3f] %vm743, %v1574
    %1578 = vst [vmem:[#allocation2 + $0x38] sm:$0x3f] %v1541
    %1579 = vrot.lane.b32.xlu0 %v1541, 120
    %v1580 = vpop.permute.xlu0 %1579
    %1582 = vst.msk [vmem:[#allocation2 + $0x40] sm:$0x3f] %vm791, %v1580
    %1583 = vst.msk [vmem:[#allocation2 + $0x40] sm:$0x3f] %vm793, %v1580
    %1584 = vrot.lane.b32.xlu0 %v1541, 112
    %v1585 = vpop.permute.xlu0 %1584
    %1587 = vst.msk [vmem:[#allocation2 + $0x48] sm:$0x3f] %vm1069, %v1585
    %1588 = vst.msk [vmem:[#allocation2 + $0x48] sm:$0x3f] %vm1071, %v1585
    %1589 = vrot.lane.b32.xlu0 %v1541, 104
    %v1590 = vpop.permute.xlu0 %1589
    %1592 = vst.msk [vmem:[#allocation2 + $0x50] sm:$0x3f] %vm1083, %v1590
    %1593 = vst.msk [vmem:[#allocation2 + $0x50] sm:$0x3f] %vm1085, %v1590
    %1594 = vrot.lane.b32.xlu0 %v1541, 96
    %v1595 = vpop.permute.xlu0 %1594
    %1597 = vst.msk [vmem:[#allocation2 + $0x58] sm:$0x3f] %vm1427, %v1595
    %1598 = vst.msk [vmem:[#allocation2 + $0x58] sm:$0x3f] %vm1429, %v1595
    %1599 = vrot.lane.b32.xlu0 %v1541, 88
    %v1600 = vpop.permute.xlu0 %1599
    %1602 = vst.msk [vmem:[#allocation2 + $0x60] sm:$0x3f] %vm1434, %v1600
    %1603 = vst.msk [vmem:[#allocation2 + $0x60] sm:$0x3f] %vm1436, %v1600
    %1604 = vrot.lane.b32.xlu0 %v1541, 80
    %v1605 = vpop.permute.xlu0 %1604
    %1607 = vst.msk [vmem:[#allocation2 + $0x68] sm:$0x3f] %vm1441, %v1605
    %1608 = vst.msk [vmem:[#allocation2 + $0x68] sm:$0x3f] %vm1443, %v1605
    %1609 = vrot.lane.b32.xlu0 %v1541, 72
    %v1610 = vpop.permute.xlu0 %1609
    %1612 = vst.msk [vmem:[#allocation2 + $0x70] sm:$0x3f] %vm1448, %v1610
    %1613 = vst.msk [vmem:[#allocation2 + $0x70] sm:$0x3f] %vm1450, %v1610
    %v1614 = vld [vmem:[#allocation6 + $0x38] sm:$0x3f]
    %v1615 = vld [vmem:[#allocation2] sm:$0xff]
    %v1616 = vld [vmem:[#allocation2 + $0x8] sm:$0xff]
    %v1617 = vld [vmem:[#allocation2 + $0x10] sm:$0xff]
    %v1618 = vld [vmem:[#allocation2 + $0x18] sm:$0xff]
    %v1619 = vld [vmem:[#allocation2 + $0x20] sm:$0xff]
    %v1620 = vld [vmem:[#allocation2 + $0x28] sm:$0xff]
    %v1621 = vld [vmem:[#allocation2 + $0x30] sm:$0xff]
    %v1622 = vld [vmem:[#allocation2 + $0x38] sm:$0xff]
    %v1623 = vld [vmem:[#allocation2 + $0x40] sm:$0xff]
    %v1624 = vld [vmem:[#allocation2 + $0x48] sm:$0xff]
    %v1625 = vld [vmem:[#allocation2 + $0x50] sm:$0xff]
    %v1626 = vld [vmem:[#allocation2 + $0x58] sm:$0xff]
    %v1627 = vld [vmem:[#allocation2 + $0x60] sm:$0xff]
    %v1628 = vld [vmem:[#allocation2 + $0x68] sm:$0xff]
    %v1629 = vld [vmem:[#allocation2 + $0x70] sm:$0xff]
    %v1631 = vsel %vm173, %v1614, 0
    %1633 = vmatprep.subr.mxu0 0.0
    %1634 = vmatpush1.msra.mxu0 %v1615
    %1635 = vmatprep.subr.mxu0 0.0
    %1636 = vmatpush1.msra.mxu0 %v1616
    %1637 = vmatprep.subr.mxu0 0.0
    %1638 = vmatpush1.msra.mxu0 %v1617
    %1639 = vmatprep.subr.mxu0 0.0
    %1640 = vmatpush1.msra.mxu0 %v1618
    %1641 = vmatprep.subr.mxu0 0.0
    %1642 = vmatpush1.msra.mxu0 %v1619
    %1643 = vmatprep.subr.mxu0 0.0
    %1644 = vmatpush1.msra.mxu0 %v1620
    %1645 = vmatprep.subr.mxu0 0.0
    %1646 = vmatpush1.msra.mxu0 %v1621
    %1647 = vmatprep.subr.mxu0 0.0
    %1648 = vmatpush1.msra.mxu0 %v1622
    %1649 = vmatprep.subr.mxu0 0.0
    %1650 = vmatpush1.msra.mxu0 %v1623
    %1651 = vmatprep.subr.mxu0 0.0
    %1652 = vmatpush1.msra.mxu0 %v1624
    %1653 = vmatprep.subr.mxu0 0.0
    %1654 = vmatpush1.msra.mxu0 %v1625
    %1655 = vmatprep.subr.mxu0 0.0
    %1656 = vmatpush1.msra.mxu0 %v1626
    %1657 = vmatprep.subr.mxu0 0.0
    %1658 = vmatpush1.msra.mxu0 %v1627
    %1659 = vmatprep.subr.mxu0 0.0
    %1660 = vmatpush1.msra.mxu0 %v1628
    %1661 = vmatprep.subr.mxu0 0.0
    %1662 = vmatpush1.msra.mxu0 %v1629
    %1663 = vmatprep.subr.mxu0 0.0
    %1664 = vmatpush1.msra.mxu0 0.0
    %1665 = vmatprep.subr.mxu0 0.0
    %1666 = vmatpush1.msra.mxu0 0.0
    %1667 = vmatprep.subr.mxu0 0.0
    %1668 = vmatpush1.msra.mxu0 0.0
    %1669 = vmatprep.subr.mxu0 0.0
    %1670 = vmatpush1.msra.mxu0 0.0
    %1671 = vmatprep.subr.mxu0 0.0
    %1672 = vmatpush1.msra.mxu0 0.0
    %1673 = vmatprep.subr.mxu0 0.0
    %1674 = vmatpush1.msra.mxu0 0.0
    %1675 = vmatprep.subr.mxu0 0.0
    %1676 = vmatpush1.msra.mxu0 0.0
    %1677 = vmatprep.subr.mxu0 0.0
    %1678 = vmatpush1.msra.mxu0 0.0
    %1679 = vmatprep.subr.mxu0 0.0
    %1680 = vmatpush1.msra.mxu0 0.0
    %1681 = vmatprep.subr.mxu0 0.0
    %1682 = vmatpush1.msra.mxu0 0.0
    %1683 = vmatprep.subr.mxu0 0.0
    %1684 = vmatpush1.msra.mxu0 0.0
    %1685 = vmatprep.subr.mxu0 0.0
    %1686 = vmatpush1.msra.mxu0 0.0
    %1687 = vmatprep.subr.mxu0 0.0
    %1688 = vmatpush1.msra.mxu0 0.0
    %1689 = vmatprep.subr.mxu0 0.0
    %1690 = vmatpush1.msra.mxu0 0.0
    %1691 = vmatprep.subr.mxu0 0.0
    %1692 = vmatpush1.msra.mxu0 0.0
    %1693 = vmatprep.subr.mxu0 0.0
    %1694 = vmatpush1.msra.mxu0 0.0
    %1695 = vmatprep.subr.mxu0 0.0
    %1696 = vmatpush1.msra.mxu0 0.0
    %1697 = vmatprep.mubr.f32.mxu0 0.0
    %1698 = vmatmul.mubr.f32.gmra.mrb[0].mxu0 %v1631
    %v1699 = vpop.f32.mrb[0].mxu0
    %v1700 = vadd.f32 0.0, %v1699
    %v1701 = vpop.f32.mrb[0].mxu0
    %1702 = vdwg.mxu0
    %v1703 = vmax.f32 %v1700, 0.0
    %v1704 = vadd.f32 %v1703, %v1347
    %v1705 = vmax.f32 %v1704, 0.0
    %1706 = vst [vmem:[#allocation2] sm:$0xff] 0.0
    %1707 = vst [vmem:[#allocation2 + $0x8] sm:$0xff] 0.0
    %1708 = vst [vmem:[#allocation2 + $0x10] sm:$0xff] 0.0
    %1709 = vst [vmem:[#allocation2 + $0x18] sm:$0xff] 0.0
    %1710 = vst [vmem:[#allocation2 + $0x20] sm:$0xff] 0.0
    %1711 = vst [vmem:[#allocation2 + $0x28] sm:$0xff] 0.0
    %1712 = vst [vmem:[#allocation2 + $0x30] sm:$0xff] 0.0
    %1713 = vst [vmem:[#allocation2 + $0x1f] sm:$0x1] 1.0
    %1715 = vrot.lane.b32.xlu0 %v1705, 48
    %v1716 = vpop.permute.xlu0 %1715
    %1718 = vst.msk [vmem:[#allocation2] sm:$0x3f] %vm1375, %v1716
    %1719 = vst.msk [vmem:[#allocation2] sm:$0x3f] %vm1377, %v1716
    %1720 = vrot.lane.b32.xlu0 %v1705, 32
    %v1721 = vpop.permute.xlu0 %1720
    %1723 = vst.msk [vmem:[#allocation2 + $0x8] sm:$0x3f] %vm1389, %v1721
    %1724 = vst.msk [vmem:[#allocation2 + $0x8] sm:$0x3f] %vm1391, %v1721
    %1725 = vrot.lane.b32.xlu0 %v1705, 16
    %v1726 = vpop.permute.xlu0 %1725
    %1728 = vst.msk [vmem:[#allocation2 + $0x10] sm:$0x3f] %vm1031, %v1726
    %1729 = vst.msk [vmem:[#allocation2 + $0x10] sm:$0x3f] %vm1033, %v1726
    %1730 = vst [vmem:[#allocation2 + $0x18] sm:$0x3f] %v1705
    %1731 = vrot.lane.b32.xlu0 %v1705, 112
    %v1732 = vpop.permute.xlu0 %1731
    %1734 = vst.msk [vmem:[#allocation2 + $0x20] sm:$0x3f] %vm1069, %v1732
    %1735 = vst.msk [vmem:[#allocation2 + $0x20] sm:$0x3f] %vm1071, %v1732
    %1736 = vrot.lane.b32.xlu0 %v1705, 96
    %v1737 = vpop.permute.xlu0 %1736
    %1739 = vst.msk [vmem:[#allocation2 + $0x28] sm:$0x3f] %vm1427, %v1737
    %1740 = vst.msk [vmem:[#allocation2 + $0x28] sm:$0x3f] %vm1429, %v1737
    %1741 = vrot.lane.b32.xlu0 %v1705, 80
    %v1742 = vpop.permute.xlu0 %1741
    %1744 = vst.msk [vmem:[#allocation2 + $0x30] sm:$0x3f] %vm1441, %v1742
    %1745 = vst.msk [vmem:[#allocation2 + $0x30] sm:$0x3f] %vm1443, %v1742
    %v1746 = vld [vmem:[#allocation6 + $0x40] sm:$0x3f]
    %v1747 = vld [vmem:[#allocation2] sm:$0xff]
    %v1748 = vld [vmem:[#allocation2 + $0x8] sm:$0xff]
    %v1749 = vld [vmem:[#allocation2 + $0x10] sm:$0xff]
    %v1750 = vld [vmem:[#allocation2 + $0x18] sm:$0xff]
    %v1751 = vld [vmem:[#allocation2 + $0x20] sm:$0xff]
    %v1752 = vld [vmem:[#allocation2 + $0x28] sm:$0xff]
    %v1753 = vld [vmem:[#allocation2 + $0x30] sm:$0xff]
    %vm1754 = vcmask 457728
    %v1756 = vsel %vm1754, %v1746, 0
    %1758 = vmatprep.subr.mxu0 0.0
    %1759 = vmatpush1.msra.mxu0 %v1747
    %1760 = vmatprep.subr.mxu0 0.0
    %1761 = vmatpush1.msra.mxu0 %v1748
    %1762 = vmatprep.subr.mxu0 0.0
    %1763 = vmatpush1.msra.mxu0 %v1749
    %1764 = vmatprep.subr.mxu0 0.0
    %1765 = vmatpush1.msra.mxu0 %v1750
    %1766 = vmatprep.subr.mxu0 0.0
    %1767 = vmatpush1.msra.mxu0 %v1751
    %1768 = vmatprep.subr.mxu0 0.0
    %1769 = vmatpush1.msra.mxu0 %v1752
    %1770 = vmatprep.subr.mxu0 0.0
    %1771 = vmatpush1.msra.mxu0 %v1753
    %1772 = vmatprep.subr.mxu0 0.0
    %1773 = vmatpush1.msra.mxu0 0.0
    %1774 = vmatprep.subr.mxu0 0.0
    %1775 = vmatpush1.msra.mxu0 0.0
    %1776 = vmatprep.subr.mxu0 0.0
    %1777 = vmatpush1.msra.mxu0 0.0
    %1778 = vmatprep.subr.mxu0 0.0
    %1779 = vmatpush1.msra.mxu0 0.0
    %1780 = vmatprep.subr.mxu0 0.0
    %1781 = vmatpush1.msra.mxu0 0.0
    %1782 = vmatprep.subr.mxu0 0.0
    %1783 = vmatpush1.msra.mxu0 0.0
    %1784 = vmatprep.subr.mxu0 0.0
    %1785 = vmatpush1.msra.mxu0 0.0
    %1786 = vmatprep.subr.mxu0 0.0
    %1787 = vmatpush1.msra.mxu0 0.0
    %1788 = vmatprep.subr.mxu0 0.0
    %1789 = vmatpush1.msra.mxu0 0.0
    %1790 = vmatprep.subr.mxu0 0.0
    %1791 = vmatpush1.msra.mxu0 0.0
    %1792 = vmatprep.subr.mxu0 0.0
    %1793 = vmatpush1.msra.mxu0 0.0
    %1794 = vmatprep.subr.mxu0 0.0
    %1795 = vmatpush1.msra.mxu0 0.0
    %1796 = vmatprep.subr.mxu0 0.0
    %1797 = vmatpush1.msra.mxu0 0.0
    %1798 = vmatprep.subr.mxu0 0.0
    %1799 = vmatpush1.msra.mxu0 0.0
    %1800 = vmatprep.subr.mxu0 0.0
    %1801 = vmatpush1.msra.mxu0 0.0
    %1802 = vmatprep.subr.mxu0 0.0
    %1803 = vmatpush1.msra.mxu0 0.0
    %1804 = vmatprep.subr.mxu0 0.0
    %1805 = vmatpush1.msra.mxu0 0.0
    %1806 = vmatprep.subr.mxu0 0.0
    %1807 = vmatpush1.msra.mxu0 0.0
    %1808 = vmatprep.subr.mxu0 0.0
    %1809 = vmatpush1.msra.mxu0 0.0
    %1810 = vmatprep.subr.mxu0 0.0
    %1811 = vmatpush1.msra.mxu0 0.0
    %1812 = vmatprep.subr.mxu0 0.0
    %1813 = vmatpush1.msra.mxu0 0.0
    %1814 = vmatprep.subr.mxu0 0.0
    %1815 = vmatpush1.msra.mxu0 0.0
    %1816 = vmatprep.subr.mxu0 0.0
    %1817 = vmatpush1.msra.mxu0 0.0
    %1818 = vmatprep.subr.mxu0 0.0
    %1819 = vmatpush1.msra.mxu0 0.0
    %1820 = vmatprep.subr.mxu0 0.0
    %1821 = vmatpush1.msra.mxu0 0.0
    %1822 = vmatprep.mubr.f32.mxu0 0.0
    %1823 = vmatmul.mubr.f32.gmra.mrb[0].mxu0 %v1756
    %v1824 = vpop.f32.mrb[0].mxu0
    %v1825 = vadd.f32 0.0, %v1824
    %v1826 = vpop.f32.mrb[0].mxu0
    %1827 = vdwg.mxu0
    %v1828 = vmax.f32 %v1825, 0.0
    %1830 = vrot.lane.b32.xlu0 %v1828, 48
    %v1831 = vpop.permute.xlu0 %1830
    %1833 = vst.msk [vmem:[#allocation2] sm:$0x3f] %vm1375, %v1831
    %1834 = vst.msk [vmem:[#allocation2] sm:$0x3f] %vm1377, %v1831
    %1835 = vrot.lane.b32.xlu0 %v1828, 32
    %v1836 = vpop.permute.xlu0 %1835
    %1838 = vst.msk [vmem:[#allocation2 + $0x8] sm:$0x3f] %vm1389, %v1836
    %1839 = vst.msk [vmem:[#allocation2 + $0x8] sm:$0x3f] %vm1391, %v1836
    %1840 = vrot.lane.b32.xlu0 %v1828, 16
    %v1841 = vpop.permute.xlu0 %1840
    %1843 = vst.msk [vmem:[#allocation2 + $0x10] sm:$0x3f] %vm1031, %v1841
    %1844 = vst.msk [vmem:[#allocation2 + $0x10] sm:$0x3f] %vm1033, %v1841
    %1845 = vst [vmem:[#allocation2 + $0x18] sm:$0x3f] %v1828
    %1846 = vrot.lane.b32.xlu0 %v1828, 112
    %v1847 = vpop.permute.xlu0 %1846
    %1849 = vst.msk [vmem:[#allocation2 + $0x20] sm:$0x3f] %vm1069, %v1847
    %1850 = vst.msk [vmem:[#allocation2 + $0x20] sm:$0x3f] %vm1071, %v1847
    %1851 = vrot.lane.b32.xlu0 %v1828, 96
    %v1852 = vpop.permute.xlu0 %1851
    %1854 = vst.msk [vmem:[#allocation2 + $0x28] sm:$0x3f] %vm1427, %v1852
    %1855 = vst.msk [vmem:[#allocation2 + $0x28] sm:$0x3f] %vm1429, %v1852
    %1856 = vrot.lane.b32.xlu0 %v1828, 80
    %v1857 = vpop.permute.xlu0 %1856
    %1859 = vst.msk [vmem:[#allocation2 + $0x30] sm:$0x3f] %vm1441, %v1857
    %1860 = vst.msk [vmem:[#allocation2 + $0x30] sm:$0x3f] %vm1443, %v1857
    %v1861 = vld [vmem:[#allocation6 + $0x48] sm:$0x3f]
    %v1862 = vld [vmem:[#allocation2] sm:$0xff]
    %v1863 = vld [vmem:[#allocation2 + $0x8] sm:$0xff]
    %v1864 = vld [vmem:[#allocation2 + $0x10] sm:$0xff]
    %v1865 = vld [vmem:[#allocation2 + $0x18] sm:$0xff]
    %v1866 = vld [vmem:[#allocation2 + $0x20] sm:$0xff]
    %v1867 = vld [vmem:[#allocation2 + $0x28] sm:$0xff]
    %v1868 = vld [vmem:[#allocation2 + $0x30] sm:$0xff]
    %v1870 = vsel %vm1754, %v1861, 0
    %1872 = vmatprep.subr.mxu0 0.0
    %1873 = vmatpush1.msra.mxu0 %v1862
    %1874 = vmatprep.subr.mxu0 0.0
    %1875 = vmatpush1.msra.mxu0 %v1863
    %1876 = vmatprep.subr.mxu0 0.0
    %1877 = vmatpush1.msra.mxu0 %v1864
    %1878 = vmatprep.subr.mxu0 0.0
    %1879 = vmatpush1.msra.mxu0 %v1865
    %1880 = vmatprep.subr.mxu0 0.0
    %1881 = vmatpush1.msra.mxu0 %v1866
    %1882 = vmatprep.subr.mxu0 0.0
    %1883 = vmatpush1.msra.mxu0 %v1867
    %1884 = vmatprep.subr.mxu0 0.0
    %1885 = vmatpush1.msra.mxu0 %v1868
    %1886 = vmatprep.subr.mxu0 0.0
    %1887 = vmatpush1.msra.mxu0 0.0
    %1888 = vmatprep.subr.mxu0 0.0
    %1889 = vmatpush1.msra.mxu0 0.0
    %1890 = vmatprep.subr.mxu0 0.0
    %1891 = vmatpush1.msra.mxu0 0.0
    %1892 = vmatprep.subr.mxu0 0.0
    %1893 = vmatpush1.msra.mxu0 0.0
    %1894 = vmatprep.subr.mxu0 0.0
    %1895 = vmatpush1.msra.mxu0 0.0
    %1896 = vmatprep.subr.mxu0 0.0
    %1897 = vmatpush1.msra.mxu0 0.0
    %1898 = vmatprep.subr.mxu0 0.0
    %1899 = vmatpush1.msra.mxu0 0.0
    %1900 = vmatprep.subr.mxu0 0.0
    %1901 = vmatpush1.msra.mxu0 0.0
    %1902 = vmatprep.subr.mxu0 0.0
    %1903 = vmatpush1.msra.mxu0 0.0
    %1904 = vmatprep.subr.mxu0 0.0
    %1905 = vmatpush1.msra.mxu0 0.0
    %1906 = vmatprep.subr.mxu0 0.0
    %1907 = vmatpush1.msra.mxu0 0.0
    %1908 = vmatprep.subr.mxu0 0.0
    %1909 = vmatpush1.msra.mxu0 0.0
    %1910 = vmatprep.subr.mxu0 0.0
    %1911 = vmatpush1.msra.mxu0 0.0
    %1912 = vmatprep.subr.mxu0 0.0
    %1913 = vmatpush1.msra.mxu0 0.0
    %1914 = vmatprep.subr.mxu0 0.0
    %1915 = vmatpush1.msra.mxu0 0.0
    %1916 = vmatprep.subr.mxu0 0.0
    %1917 = vmatpush1.msra.mxu0 0.0
    %1918 = vmatprep.subr.mxu0 0.0
    %1919 = vmatpush1.msra.mxu0 0.0
    %1920 = vmatprep.subr.mxu0 0.0
    %1921 = vmatpush1.msra.mxu0 0.0
    %1922 = vmatprep.subr.mxu0 0.0
    %1923 = vmatpush1.msra.mxu0 0.0
    %1924 = vmatprep.subr.mxu0 0.0
    %1925 = vmatpush1.msra.mxu0 0.0
    %1926 = vmatprep.subr.mxu0 0.0
    %1927 = vmatpush1.msra.mxu0 0.0
    %1928 = vmatprep.subr.mxu0 0.0
    %1929 = vmatpush1.msra.mxu0 0.0
    %1930 = vmatprep.subr.mxu0 0.0
    %1931 = vmatpush1.msra.mxu0 0.0
    %1932 = vmatprep.subr.mxu0 0.0
    %1933 = vmatpush1.msra.mxu0 0.0
    %1934 = vmatprep.subr.mxu0 0.0
    %1935 = vmatpush1.msra.mxu0 0.0
    %1936 = vmatprep.mubr.f32.mxu0 0.0
    %1937 = vmatmul.mubr.f32.gmra.mrb[0].mxu0 %v1870
    %v1938 = vpop.f32.mrb[0].mxu0
    %v1939 = vadd.f32 0.0, %v1938
    %v1940 = vpop.f32.mrb[0].mxu0
    %1941 = vdwg.mxu0
    %v1942 = vmax.f32 %v1939, 0.0
    %v1943 = vadd.f32 %v1942, %v1705
    %v1944 = vmax.f32 %v1943, 0.0
    %1945 = vst [vmem:[#allocation2] sm:$0xff] 0.0
    %1946 = vst [vmem:[#allocation2 + $0x8] sm:$0xff] 0.0
    %1947 = vst [vmem:[#allocation2 + $0x10] sm:$0xff] 0.0
    %1948 = vst [vmem:[#allocation2 + $0xf] sm:$0x1] 1.0
    %1950 = vrot.lane.b32.xlu0 %v1944, 32
    %v1951 = vpop.permute.xlu0 %1950
    %1953 = vst.msk [vmem:[#allocation2] sm:$0x3f] %vm1389, %v1951
    %1954 = vst.msk [vmem:[#allocation2] sm:$0x3f] %vm1391, %v1951
    %1955 = vst [vmem:[#allocation2 + $0x8] sm:$0x3f] %v1944
    %1956 = vrot.lane.b32.xlu0 %v1944, 96
    %v1957 = vpop.permute.xlu0 %1956
    %1959 = vst.msk [vmem:[#allocation2 + $0x10] sm:$0x3f] %vm1427, %v1957
    %1960 = vst.msk [vmem:[#allocation2 + $0x10] sm:$0x3f] %vm1429, %v1957
    %v1961 = vld [vmem:[#allocation6 + $0x50] sm:$0x3f]
    %v1962 = vld [vmem:[#allocation2] sm:$0xff]
    %v1963 = vld [vmem:[#allocation2 + $0x8] sm:$0xff]
    %v1964 = vld [vmem:[#allocation2 + $0x10] sm:$0xff]
    %vm1965 = vcmask 195584
    %v1967 = vsel %vm1965, %v1961, 0
    %1969 = vmatprep.subr.mxu0 0.0
    %1970 = vmatpush1.msra.mxu0 %v1962
    %1971 = vmatprep.subr.mxu0 0.0
    %1972 = vmatpush1.msra.mxu0 %v1963
    %1973 = vmatprep.subr.mxu0 0.0
    %1974 = vmatpush1.msra.mxu0 %v1964
    %1975 = vmatprep.subr.mxu0 0.0
    %1976 = vmatpush1.msra.mxu0 0.0
    %1977 = vmatprep.subr.mxu0 0.0
    %1978 = vmatpush1.msra.mxu0 0.0
    %1979 = vmatprep.subr.mxu0 0.0
    %1980 = vmatpush1.msra.mxu0 0.0
    %1981 = vmatprep.subr.mxu0 0.0
    %1982 = vmatpush1.msra.mxu0 0.0
    %1983 = vmatprep.subr.mxu0 0.0
    %1984 = vmatpush1.msra.mxu0 0.0
    %1985 = vmatprep.subr.mxu0 0.0
    %1986 = vmatpush1.msra.mxu0 0.0
    %1987 = vmatprep.subr.mxu0 0.0
    %1988 = vmatpush1.msra.mxu0 0.0
    %1989 = vmatprep.subr.mxu0 0.0
    %1990 = vmatpush1.msra.mxu0 0.0
    %1991 = vmatprep.subr.mxu0 0.0
    %1992 = vmatpush1.msra.mxu0 0.0
    %1993 = vmatprep.subr.mxu0 0.0
    %1994 = vmatpush1.msra.mxu0 0.0
    %1995 = vmatprep.subr.mxu0 0.0
    %1996 = vmatpush1.msra.mxu0 0.0
    %1997 = vmatprep.subr.mxu0 0.0
    %1998 = vmatpush1.msra.mxu0 0.0
    %1999 = vmatprep.subr.mxu0 0.0
    %2000 = vmatpush1.msra.mxu0 0.0
    %2001 = vmatprep.subr.mxu0 0.0
    %2002 = vmatpush1.msra.mxu0 0.0
    %2003 = vmatprep.subr.mxu0 0.0
    %2004 = vmatpush1.msra.mxu0 0.0
    %2005 = vmatprep.subr.mxu0 0.0
    %2006 = vmatpush1.msra.mxu0 0.0
    %2007 = vmatprep.subr.mxu0 0.0
    %2008 = vmatpush1.msra.mxu0 0.0
    %2009 = vmatprep.subr.mxu0 0.0
    %2010 = vmatpush1.msra.mxu0 0.0
    %2011 = vmatprep.subr.mxu0 0.0
    %2012 = vmatpush1.msra.mxu0 0.0
    %2013 = vmatprep.subr.mxu0 0.0
    %2014 = vmatpush1.msra.mxu0 0.0
    %2015 = vmatprep.subr.mxu0 0.0
    %2016 = vmatpush1.msra.mxu0 0.0
    %2017 = vmatprep.subr.mxu0 0.0
    %2018 = vmatpush1.msra.mxu0 0.0
    %2019 = vmatprep.subr.mxu0 0.0
    %2020 = vmatpush1.msra.mxu0 0.0
    %2021 = vmatprep.subr.mxu0 0.0
    %2022 = vmatpush1.msra.mxu0 0.0
    %2023 = vmatprep.subr.mxu0 0.0
    %2024 = vmatpush1.msra.mxu0 0.0
    %2025 = vmatprep.subr.mxu0 0.0
    %2026 = vmatpush1.msra.mxu0 0.0
    %2027 = vmatprep.subr.mxu0 0.0
    %2028 = vmatpush1.msra.mxu0 0.0
    %2029 = vmatprep.subr.mxu0 0.0
    %2030 = vmatpush1.msra.mxu0 0.0
    %2031 = vmatprep.subr.mxu0 0.0
    %2032 = vmatpush1.msra.mxu0 0.0
    %2033 = vmatprep.mubr.f32.mxu0 0.0
    %2034 = vmatmul.mubr.f32.gmra.mrb[0].mxu0 %v1967
    %v2035 = vpop.f32.mrb[0].mxu0
    %v2036 = vadd.f32 0.0, %v2035
    %v2037 = vpop.f32.mrb[0].mxu0
    %2038 = vdwg.mxu0
    %v2039 = vmax.f32 %v2036, 0.0
    %2041 = vrot.lane.b32.xlu0 %v2039, 32
    %v2042 = vpop.permute.xlu0 %2041
    %2044 = vst.msk [vmem:[#allocation2] sm:$0x3f] %vm1389, %v2042
    %2045 = vst.msk [vmem:[#allocation2] sm:$0x3f] %vm1391, %v2042
    %2046 = vst [vmem:[#allocation2 + $0x8] sm:$0x3f] %v2039
    %2047 = vrot.lane.b32.xlu0 %v2039, 96
    %v2048 = vpop.permute.xlu0 %2047
    %2050 = vst.msk [vmem:[#allocation2 + $0x10] sm:$0x3f] %vm1427, %v2048
    %2051 = vst.msk [vmem:[#allocation2 + $0x10] sm:$0x3f] %vm1429, %v2048
    %v2052 = vld [vmem:[#allocation6 + $0x58] sm:$0x3f]
    %v2053 = vld [vmem:[#allocation2] sm:$0xff]
    %v2054 = vld [vmem:[#allocation2 + $0x8] sm:$0xff]
    %v2055 = vld [vmem:[#allocation2 + $0x10] sm:$0xff]
    %v2057 = vsel %vm1965, %v2052, 0
    %2059 = vmatprep.subr.mxu0 0.0
    %2060 = vmatpush1.msra.mxu0 %v2053
    %2061 = vmatprep.subr.mxu0 0.0
    %2062 = vmatpush1.msra.mxu0 %v2054
    %2063 = vmatprep.subr.mxu0 0.0
    %2064 = vmatpush1.msra.mxu0 %v2055
    %2065 = vmatprep.subr.mxu0 0.0
    %2066 = vmatpush1.msra.mxu0 0.0
    %2067 = vmatprep.subr.mxu0 0.0
    %2068 = vmatpush1.msra.mxu0 0.0
    %2069 = vmatprep.subr.mxu0 0.0
    %2070 = vmatpush1.msra.mxu0 0.0
    %2071 = vmatprep.subr.mxu0 0.0
    %2072 = vmatpush1.msra.mxu0 0.0
    %2073 = vmatprep.subr.mxu0 0.0
    %2074 = vmatpush1.msra.mxu0 0.0
    %2075 = vmatprep.subr.mxu0 0.0
    %2076 = vmatpush1.msra.mxu0 0.0
    %2077 = vmatprep.subr.mxu0 0.0
    %2078 = vmatpush1.msra.mxu0 0.0
    %2079 = vmatprep.subr.mxu0 0.0
    %2080 = vmatpush1.msra.mxu0 0.0
    %2081 = vmatprep.subr.mxu0 0.0
    %2082 = vmatpush1.msra.mxu0 0.0
    %2083 = vmatprep.subr.mxu0 0.0
    %2084 = vmatpush1.msra.mxu0 0.0
    %2085 = vmatprep.subr.mxu0 0.0
    %2086 = vmatpush1.msra.mxu0 0.0
    %2087 = vmatprep.subr.mxu0 0.0
    %2088 = vmatpush1.msra.mxu0 0.0
    %2089 = vmatprep.subr.mxu0 0.0
    %2090 = vmatpush1.msra.mxu0 0.0
    %2091 = vmatprep.subr.mxu0 0.0
    %2092 = vmatpush1.msra.mxu0 0.0
    %2093 = vmatprep.subr.mxu0 0.0
    %2094 = vmatpush1.msra.mxu0 0.0
    %2095 = vmatprep.subr.mxu0 0.0
    %2096 = vmatpush1.msra.mxu0 0.0
    %2097 = vmatprep.subr.mxu0 0.0
    %2098 = vmatpush1.msra.mxu0 0.0
    %2099 = vmatprep.subr.mxu0 0.0
    %2100 = vmatpush1.msra.mxu0 0.0
    %2101 = vmatprep.subr.mxu0 0.0
    %2102 = vmatpush1.msra.mxu0 0.0
    %2103 = vmatprep.subr.mxu0 0.0
    %2104 = vmatpush1.msra.mxu0 0.0
    %2105 = vmatprep.subr.mxu0 0.0
    %2106 = vmatpush1.msra.mxu0 0.0
    %2107 = vmatprep.subr.mxu0 0.0
    %2108 = vmatpush1.msra.mxu0 0.0
    %2109 = vmatprep.subr.mxu0 0.0
    %2110 = vmatpush1.msra.mxu0 0.0
    %2111 = vmatprep.subr.mxu0 0.0
    %2112 = vmatpush1.msra.mxu0 0.0
    %2113 = vmatprep.subr.mxu0 0.0
    %2114 = vmatpush1.msra.mxu0 0.0
    %2115 = vmatprep.subr.mxu0 0.0
    %2116 = vmatpush1.msra.mxu0 0.0
    %2117 = vmatprep.subr.mxu0 0.0
    %2118 = vmatpush1.msra.mxu0 0.0
    %2119 = vmatprep.subr.mxu0 0.0
    %2120 = vmatpush1.msra.mxu0 0.0
    %2121 = vmatprep.subr.mxu0 0.0
    %2122 = vmatpush1.msra.mxu0 0.0
    %2123 = vmatprep.mubr.f32.mxu0 0.0
    %2124 = vmatmul.mubr.f32.gmra.mrb[0].mxu0 %v2057
    %v2125 = vpop.f32.mrb[0].mxu0
    %v2126 = vadd.f32 0.0, %v2125
    %v2127 = vpop.f32.mrb[0].mxu0
    %2128 = vdwg.mxu0
    %v2129 = vmax.f32 %v2126, 0.0
    %v2130 = vadd.f32 %v2129, %v1944
    %v2131 = vmax.f32 %v2130, 0.0
    %2132 = vst [vmem:[#allocation2] sm:$0xff] 0.0
    %2133 = vst [vmem:[#allocation2 + $0x7] sm:$0x1] 1.0
    %2134 = vst [vmem:[#allocation2] sm:$0x3f] %v2131
    %v2135 = vld [vmem:[#allocation6 + $0x60] sm:$0x3f]
    %v2136 = vld [vmem:[#allocation2] sm:$0xff]
    %vm2137 = vcmask 64512
    %v2139 = vsel %vm2137, %v2135, 0
    %2141 = vmatprep.subr.mxu0 0.0
    %2142 = vmatpush1.msra.mxu0 %v2136
    %2143 = vmatprep.subr.mxu0 0.0
    %2144 = vmatpush1.msra.mxu0 0.0
    %2145 = vmatprep.subr.mxu0 0.0
    %2146 = vmatpush1.msra.mxu0 0.0
    %2147 = vmatprep.subr.mxu0 0.0
    %2148 = vmatpush1.msra.mxu0 0.0
    %2149 = vmatprep.subr.mxu0 0.0
    %2150 = vmatpush1.msra.mxu0 0.0
    %2151 = vmatprep.subr.mxu0 0.0
    %2152 = vmatpush1.msra.mxu0 0.0
    %2153 = vmatprep.subr.mxu0 0.0
    %2154 = vmatpush1.msra.mxu0 0.0
    %2155 = vmatprep.subr.mxu0 0.0
    %2156 = vmatpush1.msra.mxu0 0.0
    %2157 = vmatprep.subr.mxu0 0.0
    %2158 = vmatpush1.msra.mxu0 0.0
    %2159 = vmatprep.subr.mxu0 0.0
    %2160 = vmatpush1.msra.mxu0 0.0
    %2161 = vmatprep.subr.mxu0 0.0
    %2162 = vmatpush1.msra.mxu0 0.0
    %2163 = vmatprep.subr.mxu0 0.0
    %2164 = vmatpush1.msra.mxu0 0.0
    %2165 = vmatprep.subr.mxu0 0.0
    %2166 = vmatpush1.msra.mxu0 0.0
    %2167 = vmatprep.subr.mxu0 0.0
    %2168 = vmatpush1.msra.mxu0 0.0
    %2169 = vmatprep.subr.mxu0 0.0
    %2170 = vmatpush1.msra.mxu0 0.0
    %2171 = vmatprep.subr.mxu0 0.0
    %2172 = vmatpush1.msra.mxu0 0.0
    %2173 = vmatprep.subr.mxu0 0.0
    %2174 = vmatpush1.msra.mxu0 0.0
    %2175 = vmatprep.subr.mxu0 0.0
    %2176 = vmatpush1.msra.mxu0 0.0
    %2177 = vmatprep.subr.mxu0 0.0
    %2178 = vmatpush1.msra.mxu0 0.0
    %2179 = vmatprep.subr.mxu0 0.0
    %2180 = vmatpush1.msra.mxu0 0.0
    %2181 = vmatprep.subr.mxu0 0.0
    %2182 = vmatpush1.msra.mxu0 0.0
    %2183 = vmatprep.subr.mxu0 0.0
    %2184 = vmatpush1.msra.mxu0 0.0
    %2185 = vmatprep.subr.mxu0 0.0
    %2186 = vmatpush1.msra.mxu0 0.0
    %2187 = vmatprep.subr.mxu0 0.0
    %2188 = vmatpush1.msra.mxu0 0.0
    %2189 = vmatprep.subr.mxu0 0.0
    %2190 = vmatpush1.msra.mxu0 0.0
    %2191 = vmatprep.subr.mxu0 0.0
    %2192 = vmatpush1.msra.mxu0 0.0
    %2193 = vmatprep.subr.mxu0 0.0
    %2194 = vmatpush1.msra.mxu0 0.0
    %2195 = vmatprep.subr.mxu0 0.0
    %2196 = vmatpush1.msra.mxu0 0.0
    %2197 = vmatprep.subr.mxu0 0.0
    %2198 = vmatpush1.msra.mxu0 0.0
    %2199 = vmatprep.subr.mxu0 0.0
    %2200 = vmatpush1.msra.mxu0 0.0
    %2201 = vmatprep.subr.mxu0 0.0
    %2202 = vmatpush1.msra.mxu0 0.0
    %2203 = vmatprep.subr.mxu0 0.0
    %2204 = vmatpush1.msra.mxu0 0.0
    %2205 = vmatprep.mubr.f32.mxu0 0.0
    %2206 = vmatmul.mubr.f32.gmra.mrb[0].mxu0 %v2139
    %v2207 = vpop.f32.mrb[0].mxu0
    %v2208 = vadd.f32 0.0, %v2207
    %v2209 = vpop.f32.mrb[0].mxu0
    %2210 = vdwg.mxu0
    %v2211 = vmax.f32 %v2208, 0.0
    %2212 = vst [vmem:[#allocation2] sm:$0x3f] %v2211
    %v2213 = vld [vmem:[#allocation6 + $0x68] sm:$0x3f]
    %v2214 = vld [vmem:[#allocation2] sm:$0xff]
    %v2216 = vsel %vm2137, %v2213, 0
    %2218 = vmatprep.subr.mxu0 0.0
    %2219 = vmatpush1.msra.mxu0 %v2214
    %2220 = vmatprep.subr.mxu0 0.0
    %2221 = vmatpush1.msra.mxu0 0.0
    %2222 = vmatprep.subr.mxu0 0.0
    %2223 = vmatpush1.msra.mxu0 0.0
    %2224 = vmatprep.subr.mxu0 0.0
    %2225 = vmatpush1.msra.mxu0 0.0
    %2226 = vmatprep.subr.mxu0 0.0
    %2227 = vmatpush1.msra.mxu0 0.0
    %2228 = vmatprep.subr.mxu0 0.0
    %2229 = vmatpush1.msra.mxu0 0.0
    %2230 = vmatprep.subr.mxu0 0.0
    %2231 = vmatpush1.msra.mxu0 0.0
    %2232 = vmatprep.subr.mxu0 0.0
    %2233 = vmatpush1.msra.mxu0 0.0
    %2234 = vmatprep.subr.mxu0 0.0
    %2235 = vmatpush1.msra.mxu0 0.0
    %2236 = vmatprep.subr.mxu0 0.0
    %2237 = vmatpush1.msra.mxu0 0.0
    %2238 = vmatprep.subr.mxu0 0.0
    %2239 = vmatpush1.msra.mxu0 0.0
    %2240 = vmatprep.subr.mxu0 0.0
    %2241 = vmatpush1.msra.mxu0 0.0
    %2242 = vmatprep.subr.mxu0 0.0
    %2243 = vmatpush1.msra.mxu0 0.0
    %2244 = vmatprep.subr.mxu0 0.0
    %2245 = vmatpush1.msra.mxu0 0.0
    %2246 = vmatprep.subr.mxu0 0.0
    %2247 = vmatpush1.msra.mxu0 0.0
    %2248 = vmatprep.subr.mxu0 0.0
    %2249 = vmatpush1.msra.mxu0 0.0
    %2250 = vmatprep.subr.mxu0 0.0
    %2251 = vmatpush1.msra.mxu0 0.0
    %2252 = vmatprep.subr.mxu0 0.0
    %2253 = vmatpush1.msra.mxu0 0.0
    %2254 = vmatprep.subr.mxu0 0.0
    %2255 = vmatpush1.msra.mxu0 0.0
    %2256 = vmatprep.subr.mxu0 0.0
    %2257 = vmatpush1.msra.mxu0 0.0
    %2258 = vmatprep.subr.mxu0 0.0
    %2259 = vmatpush1.msra.mxu0 0.0
    %2260 = vmatprep.subr.mxu0 0.0
    %2261 = vmatpush1.msra.mxu0 0.0
    %2262 = vmatprep.subr.mxu0 0.0
    %2263 = vmatpush1.msra.mxu0 0.0
    %2264 = vmatprep.subr.mxu0 0.0
    %2265 = vmatpush1.msra.mxu0 0.0
    %2266 = vmatprep.subr.mxu0 0.0
    %2267 = vmatpush1.msra.mxu0 0.0
    %2268 = vmatprep.subr.mxu0 0.0
    %2269 = vmatpush1.msra.mxu0 0.0
    %2270 = vmatprep.subr.mxu0 0.0
    %2271 = vmatpush1.msra.mxu0 0.0
    %2272 = vmatprep.subr.mxu0 0.0
    %2273 = vmatpush1.msra.mxu0 0.0
    %2274 = vmatprep.subr.mxu0 0.0
    %2275 = vmatpush1.msra.mxu0 0.0
    %2276 = vmatprep.subr.mxu0 0.0
    %2277 = vmatpush1.msra.mxu0 0.0
    %2278 = vmatprep.subr.mxu0 0.0
    %2279 = vmatpush1.msra.mxu0 0.0
    %2280 = vmatprep.subr.mxu0 0.0
    %2281 = vmatpush1.msra.mxu0 0.0
    %2282 = vmatprep.mubr.f32.mxu0 0.0
    %2283 = vmatmul.mubr.f32.gmra.mrb[0].mxu0 %v2216
    %v2284 = vpop.f32.mrb[0].mxu0
    %v2285 = vadd.f32 0.0, %v2284
    %v2286 = vpop.f32.mrb[0].mxu0
    %2287 = vdwg.mxu0
    %v2288 = vmax.f32 %v2285, 0.0
    %v2289 = vadd.f32 %v2288, %v2131
    %v2290 = vmax.f32 %v2289, 0.0
    %2291 = vst [vmem:[#allocation2] sm:$0xff] 0.0
    %2292 = vst [vmem:[#allocation2 + $0x7] sm:$0x1] 1.0
    %2293 = vst [vmem:[#allocation2] sm:$0x3f] %v2290
    %v2294 = vld [vmem:[#allocation6 + $0x70] sm:$0x3f]
    %v2295 = vld [vmem:[#allocation2] sm:$0xff]
    %v2297 = vsel %vm2137, %v2294, 0
    %2299 = vmatprep.subr.mxu0 0.0
    %2300 = vmatpush1.msra.mxu0 %v2295
    %2301 = vmatprep.subr.mxu0 0.0
    %2302 = vmatpush1.msra.mxu0 0.0
    %2303 = vmatprep.subr.mxu0 0.0
    %2304 = vmatpush1.msra.mxu0 0.0
    %2305 = vmatprep.subr.mxu0 0.0
    %2306 = vmatpush1.msra.mxu0 0.0
    %2307 = vmatprep.subr.mxu0 0.0
    %2308 = vmatpush1.msra.mxu0 0.0
    %2309 = vmatprep.subr.mxu0 0.0
    %2310 = vmatpush1.msra.mxu0 0.0
    %2311 = vmatprep.subr.mxu0 0.0
    %2312 = vmatpush1.msra.mxu0 0.0
    %2313 = vmatprep.subr.mxu0 0.0
    %2314 = vmatpush1.msra.mxu0 0.0
    %2315 = vmatprep.subr.mxu0 0.0
    %2316 = vmatpush1.msra.mxu0 0.0
    %2317 = vmatprep.subr.mxu0 0.0
    %2318 = vmatpush1.msra.mxu0 0.0
    %2319 = vmatprep.subr.mxu0 0.0
    %2320 = vmatpush1.msra.mxu0 0.0
    %2321 = vmatprep.subr.mxu0 0.0
    %2322 = vmatpush1.msra.mxu0 0.0
    %2323 = vmatprep.subr.mxu0 0.0
    %2324 = vmatpush1.msra.mxu0 0.0
    %2325 = vmatprep.subr.mxu0 0.0
    %2326 = vmatpush1.msra.mxu0 0.0
    %2327 = vmatprep.subr.mxu0 0.0
    %2328 = vmatpush1.msra.mxu0 0.0
    %2329 = vmatprep.subr.mxu0 0.0
    %2330 = vmatpush1.msra.mxu0 0.0
    %2331 = vmatprep.subr.mxu0 0.0
    %2332 = vmatpush1.msra.mxu0 0.0
    %2333 = vmatprep.subr.mxu0 0.0
    %2334 = vmatpush1.msra.mxu0 0.0
    %2335 = vmatprep.subr.mxu0 0.0
    %2336 = vmatpush1.msra.mxu0 0.0
    %2337 = vmatprep.subr.mxu0 0.0
    %2338 = vmatpush1.msra.mxu0 0.0
    %2339 = vmatprep.subr.mxu0 0.0
    %2340 = vmatpush1.msra.mxu0 0.0
    %2341 = vmatprep.subr.mxu0 0.0
    %2342 = vmatpush1.msra.mxu0 0.0
    %2343 = vmatprep.subr.mxu0 0.0
    %2344 = vmatpush1.msra.mxu0 0.0
    %2345 = vmatprep.subr.mxu0 0.0
    %2346 = vmatpush1.msra.mxu0 0.0
    %2347 = vmatprep.subr.mxu0 0.0
    %2348 = vmatpush1.msra.mxu0 0.0
    %2349 = vmatprep.subr.mxu0 0.0
    %2350 = vmatpush1.msra.mxu0 0.0
    %2351 = vmatprep.subr.mxu0 0.0
    %2352 = vmatpush1.msra.mxu0 0.0
    %2353 = vmatprep.subr.mxu0 0.0
    %2354 = vmatpush1.msra.mxu0 0.0
    %2355 = vmatprep.subr.mxu0 0.0
    %2356 = vmatpush1.msra.mxu0 0.0
    %2357 = vmatprep.subr.mxu0 0.0
    %2358 = vmatpush1.msra.mxu0 0.0
    %2359 = vmatprep.subr.mxu0 0.0
    %2360 = vmatpush1.msra.mxu0 0.0
    %2361 = vmatprep.subr.mxu0 0.0
    %2362 = vmatpush1.msra.mxu0 0.0
    %2363 = vmatprep.mubr.f32.mxu0 0.0
    %2364 = vmatmul.mubr.f32.gmra.mrb[0].mxu0 %v2297
    %v2365 = vpop.f32.mrb[0].mxu0
    %v2366 = vadd.f32 0.0, %v2365
    %v2367 = vpop.f32.mrb[0].mxu0
    %2368 = vdwg.mxu0
    %v2369 = vmax.f32 %v2366, 0.0
    %2370 = vst [vmem:[#allocation2] sm:$0x3f] %v2369
    %v2371 = vld [vmem:[#allocation6 + $0x78] sm:$0x3f]
    %v2372 = vld [vmem:[#allocation2] sm:$0xff]
    %v2374 = vsel %vm2137, %v2371, 0
    %2376 = vmatprep.subr.mxu0 0.0
    %2377 = vmatpush1.msra.mxu0 %v2372
    %2378 = vmatprep.subr.mxu0 0.0
    %2379 = vmatpush1.msra.mxu0 0.0
    %2380 = vmatprep.subr.mxu0 0.0
    %2381 = vmatpush1.msra.mxu0 0.0
    %2382 = vmatprep.subr.mxu0 0.0
    %2383 = vmatpush1.msra.mxu0 0.0
    %2384 = vmatprep.subr.mxu0 0.0
    %2385 = vmatpush1.msra.mxu0 0.0
    %2386 = vmatprep.subr.mxu0 0.0
    %2387 = vmatpush1.msra.mxu0 0.0
    %2388 = vmatprep.subr.mxu0 0.0
    %2389 = vmatpush1.msra.mxu0 0.0
    %2390 = vmatprep.subr.mxu0 0.0
    %2391 = vmatpush1.msra.mxu0 0.0
    %2392 = vmatprep.subr.mxu0 0.0
    %2393 = vmatpush1.msra.mxu0 0.0
    %2394 = vmatprep.subr.mxu0 0.0
    %2395 = vmatpush1.msra.mxu0 0.0
    %2396 = vmatprep.subr.mxu0 0.0
    %2397 = vmatpush1.msra.mxu0 0.0
    %2398 = vmatprep.subr.mxu0 0.0
    %2399 = vmatpush1.msra.mxu0 0.0
    %2400 = vmatprep.subr.mxu0 0.0
    %2401 = vmatpush1.msra.mxu0 0.0
    %2402 = vmatprep.subr.mxu0 0.0
    %2403 = vmatpush1.msra.mxu0 0.0
    %2404 = vmatprep.subr.mxu0 0.0
    %2405 = vmatpush1.msra.mxu0 0.0
    %2406 = vmatprep.subr.mxu0 0.0
    %2407 = vmatpush1.msra.mxu0 0.0
    %2408 = vmatprep.subr.mxu0 0.0
    %2409 = vmatpush1.msra.mxu0 0.0
    %2410 = vmatprep.subr.mxu0 0.0
    %2411 = vmatpush1.msra.mxu0 0.0
    %2412 = vmatprep.subr.mxu0 0.0
    %2413 = vmatpush1.msra.mxu0 0.0
    %2414 = vmatprep.subr.mxu0 0.0
    %2415 = vmatpush1.msra.mxu0 0.0
    %2416 = vmatprep.subr.mxu0 0.0
    %2417 = vmatpush1.msra.mxu0 0.0
    %2418 = vmatprep.subr.mxu0 0.0
    %2419 = vmatpush1.msra.mxu0 0.0
    %2420 = vmatprep.subr.mxu0 0.0
    %2421 = vmatpush1.msra.mxu0 0.0
    %2422 = vmatprep.subr.mxu0 0.0
    %2423 = vmatpush1.msra.mxu0 0.0
    %2424 = vmatprep.subr.mxu0 0.0
    %2425 = vmatpush1.msra.mxu0 0.0
    %2426 = vmatprep.subr.mxu0 0.0
    %2427 = vmatpush1.msra.mxu0 0.0
    %2428 = vmatprep.subr.mxu0 0.0
    %2429 = vmatpush1.msra.mxu0 0.0
    %2430 = vmatprep.subr.mxu0 0.0
    %2431 = vmatpush1.msra.mxu0 0.0
    %2432 = vmatprep.subr.mxu0 0.0
    %2433 = vmatpush1.msra.mxu0 0.0
    %2434 = vmatprep.subr.mxu0 0.0
    %2435 = vmatpush1.msra.mxu0 0.0
    %2436 = vmatprep.subr.mxu0 0.0
    %2437 = vmatpush1.msra.mxu0 0.0
    %2438 = vmatprep.subr.mxu0 0.0
    %2439 = vmatpush1.msra.mxu0 0.0
    %2440 = vmatprep.mubr.f32.mxu0 0.0
    %2441 = vmatmul.mubr.f32.gmra.mrb[0].mxu0 %v2374
    %v2442 = vpop.f32.mrb[0].mxu0
    %v2443 = vadd.f32 0.0, %v2442
    %v2444 = vpop.f32.mrb[0].mxu0
    %2445 = vdwg.mxu0
    %v2446 = vmax.f32 %v2443, 0.0
    %v2447 = vadd.f32 %v2446, %v2290
    %v2448 = vmax.f32 %v2447, 0.0
    %2449 = vst [vmem:[#allocation2] sm:$0xff] 0.0
    %2450 = vst [vmem:[#allocation2 + $0x7] sm:$0x1] 1.0
    %2451 = vst [vmem:[#allocation2] sm:$0x3f] %v2448
    %v2452 = vld [vmem:[#allocation6 + $0x80] sm:$0x1f]
    %v2453 = vld [vmem:[#allocation2] sm:$0xff]
    %v2455 = vsel %vm2137, %v2452, 0
    %2457 = vmatprep.subr.mxu0 0.0
    %2458 = vmatpush1.msra.mxu0 %v2453
    %2459 = vmatprep.subr.mxu0 0.0
    %2460 = vmatpush1.msra.mxu0 0.0
    %2461 = vmatprep.subr.mxu0 0.0
    %2462 = vmatpush1.msra.mxu0 0.0
    %2463 = vmatprep.subr.mxu0 0.0
    %2464 = vmatpush1.msra.mxu0 0.0
    %2465 = vmatprep.subr.mxu0 0.0
    %2466 = vmatpush1.msra.mxu0 0.0
    %2467 = vmatprep.subr.mxu0 0.0
    %2468 = vmatpush1.msra.mxu0 0.0
    %2469 = vmatprep.subr.mxu0 0.0
    %2470 = vmatpush1.msra.mxu0 0.0
    %2471 = vmatprep.subr.mxu0 0.0
    %2472 = vmatpush1.msra.mxu0 0.0
    %2473 = vmatprep.subr.mxu0 0.0
    %2474 = vmatpush1.msra.mxu0 0.0
    %2475 = vmatprep.subr.mxu0 0.0
    %2476 = vmatpush1.msra.mxu0 0.0
    %2477 = vmatprep.subr.mxu0 0.0
    %2478 = vmatpush1.msra.mxu0 0.0
    %2479 = vmatprep.subr.mxu0 0.0
    %2480 = vmatpush1.msra.mxu0 0.0
    %2481 = vmatprep.subr.mxu0 0.0
    %2482 = vmatpush1.msra.mxu0 0.0
    %2483 = vmatprep.subr.mxu0 0.0
    %2484 = vmatpush1.msra.mxu0 0.0
    %2485 = vmatprep.subr.mxu0 0.0
    %2486 = vmatpush1.msra.mxu0 0.0
    %2487 = vmatprep.subr.mxu0 0.0
    %2488 = vmatpush1.msra.mxu0 0.0
    %2489 = vmatprep.subr.mxu0 0.0
    %2490 = vmatpush1.msra.mxu0 0.0
    %2491 = vmatprep.subr.mxu0 0.0
    %2492 = vmatpush1.msra.mxu0 0.0
    %2493 = vmatprep.subr.mxu0 0.0
    %2494 = vmatpush1.msra.mxu0 0.0
    %2495 = vmatprep.subr.mxu0 0.0
    %2496 = vmatpush1.msra.mxu0 0.0
    %2497 = vmatprep.subr.mxu0 0.0
    %2498 = vmatpush1.msra.mxu0 0.0
    %2499 = vmatprep.subr.mxu0 0.0
    %2500 = vmatpush1.msra.mxu0 0.0
    %2501 = vmatprep.subr.mxu0 0.0
    %2502 = vmatpush1.msra.mxu0 0.0
    %2503 = vmatprep.subr.mxu0 0.0
    %2504 = vmatpush1.msra.mxu0 0.0
    %2505 = vmatprep.subr.mxu0 0.0
    %2506 = vmatpush1.msra.mxu0 0.0
    %2507 = vmatprep.subr.mxu0 0.0
    %2508 = vmatpush1.msra.mxu0 0.0
    %2509 = vmatprep.subr.mxu0 0.0
    %2510 = vmatpush1.msra.mxu0 0.0
    %2511 = vmatprep.subr.mxu0 0.0
    %2512 = vmatpush1.msra.mxu0 0.0
    %2513 = vmatprep.subr.mxu0 0.0
    %2514 = vmatpush1.msra.mxu0 0.0
    %2515 = vmatprep.subr.mxu0 0.0
    %2516 = vmatpush1.msra.mxu0 0.0
    %2517 = vmatprep.subr.mxu0 0.0
    %2518 = vmatpush1.msra.mxu0 0.0
    %2519 = vmatprep.subr.mxu0 0.0
    %2520 = vmatpush1.msra.mxu0 0.0
    %2521 = vmatprep.mubr.f32.mxu0 0.0
    %2522 = vmatmul.mubr.f32.gmra.mrb[0].mxu0 %v2455
    %v2523 = vpop.f32.mrb[0].mxu0
    %v2524 = vadd.f32 0.0, %v2523
    %v2525 = vpop.f32.mrb[0].mxu0
    %2526 = vdwg.mxu0
    %v2527 = vmax.f32 %v2524, 0.0
    %2528 = vst [vmem:[#allocation2] sm:$0x1f] %v2527
    %v2529 = vld [vmem:[#allocation6 + $0x88] sm:$0x1f]
    %v2530 = vld [vmem:[#allocation2] sm:$0xff]
    %v2532 = vsel %vm2137, %v2529, 0
    %2534 = vmatprep.subr.mxu0 0.0
    %2535 = vmatpush1.msra.mxu0 %v2530
    %2536 = vmatprep.subr.mxu0 0.0
    %2537 = vmatpush1.msra.mxu0 0.0
    %2538 = vmatprep.subr.mxu0 0.0
    %2539 = vmatpush1.msra.mxu0 0.0
    %2540 = vmatprep.subr.mxu0 0.0
    %2541 = vmatpush1.msra.mxu0 0.0
    %2542 = vmatprep.subr.mxu0 0.0
    %2543 = vmatpush1.msra.mxu0 0.0
    %2544 = vmatprep.subr.mxu0 0.0
    %2545 = vmatpush1.msra.mxu0 0.0
    %2546 = vmatprep.subr.mxu0 0.0
    %2547 = vmatpush1.msra.mxu0 0.0
    %2548 = vmatprep.subr.mxu0 0.0
    %2549 = vmatpush1.msra.mxu0 0.0
    %2550 = vmatprep.subr.mxu0 0.0
    %2551 = vmatpush1.msra.mxu0 0.0
    %2552 = vmatprep.subr.mxu0 0.0
    %2553 = vmatpush1.msra.mxu0 0.0
    %2554 = vmatprep.subr.mxu0 0.0
    %2555 = vmatpush1.msra.mxu0 0.0
    %2556 = vmatprep.subr.mxu0 0.0
    %2557 = vmatpush1.msra.mxu0 0.0
    %2558 = vmatprep.subr.mxu0 0.0
    %2559 = vmatpush1.msra.mxu0 0.0
    %2560 = vmatprep.subr.mxu0 0.0
    %2561 = vmatpush1.msra.mxu0 0.0
    %2562 = vmatprep.subr.mxu0 0.0
    %2563 = vmatpush1.msra.mxu0 0.0
    %2564 = vmatprep.subr.mxu0 0.0
    %2565 = vmatpush1.msra.mxu0 0.0
    %2566 = vmatprep.subr.mxu0 0.0
    %2567 = vmatpush1.msra.mxu0 0.0
    %2568 = vmatprep.subr.mxu0 0.0
    %2569 = vmatpush1.msra.mxu0 0.0
    %2570 = vmatprep.subr.mxu0 0.0
    %2571 = vmatpush1.msra.mxu0 0.0
    %2572 = vmatprep.subr.mxu0 0.0
    %2573 = vmatpush1.msra.mxu0 0.0
    %2574 = vmatprep.subr.mxu0 0.0
    %2575 = vmatpush1.msra.mxu0 0.0
    %2576 = vmatprep.subr.mxu0 0.0
    %2577 = vmatpush1.msra.mxu0 0.0
    %2578 = vmatprep.subr.mxu0 0.0
    %2579 = vmatpush1.msra.mxu0 0.0
    %2580 = vmatprep.subr.mxu0 0.0
    %2581 = vmatpush1.msra.mxu0 0.0
    %2582 = vmatprep.subr.mxu0 0.0
    %2583 = vmatpush1.msra.mxu0 0.0
    %2584 = vmatprep.subr.mxu0 0.0
    %2585 = vmatpush1.msra.mxu0 0.0
    %2586 = vmatprep.subr.mxu0 0.0
    %2587 = vmatpush1.msra.mxu0 0.0
    %2588 = vmatprep.subr.mxu0 0.0
    %2589 = vmatpush1.msra.mxu0 0.0
    %2590 = vmatprep.subr.mxu0 0.0
    %2591 = vmatpush1.msra.mxu0 0.0
    %2592 = vmatprep.subr.mxu0 0.0
    %2593 = vmatpush1.msra.mxu0 0.0
    %2594 = vmatprep.subr.mxu0 0.0
    %2595 = vmatpush1.msra.mxu0 0.0
    %2596 = vmatprep.subr.mxu0 0.0
    %2597 = vmatpush1.msra.mxu0 0.0
    %2598 = vmatprep.mubr.f32.mxu0 0.0
    %2599 = vmatmul.mubr.f32.gmra.mrb[0].mxu0 %v2532
    %v2600 = vpop.f32.mrb[0].mxu0
    %v2601 = vadd.f32 0.0, %v2600
    %v2602 = vpop.f32.mrb[0].mxu0
    %2603 = vdwg.mxu0
    %v2604 = vmax.f32 %v2601, 0.0
    %2605 = vset.pattern.permute.xlu0 15
    %2606 = vperm.xlu0 %2605, %v2529
    %v2607 = vpop.permute.xlu0 %2606
    %2609 = vrot.lane.b32.xlu0 %v2529, 120
    %v2610 = vpop.permute.xlu0 %2609
    %vm2611 = vcmask 48128
    %v2612 = vsel %vm2611, %v2610, 0
    %vm2614 = vcmask 1045504
    %v2616 = vsel %vm2614, %v2448, 0
    %2618 = vmatprep.subr.mxu0 0.0
    %2619 = vmatpush1.msra.mxu0 %v2616
    %2620 = vmatprep.subr.mxu0 0.0
    %2621 = vmatpush1.msra.mxu0 0.0
    %2622 = vmatprep.subr.mxu0 0.0
    %2623 = vmatpush1.msra.mxu0 0.0
    %2624 = vmatprep.subr.mxu0 0.0
    %2625 = vmatpush1.msra.mxu0 0.0
    %2626 = vmatprep.subr.mxu0 0.0
    %2627 = vmatpush1.msra.mxu0 0.0
    %2628 = vmatprep.subr.mxu0 0.0
    %2629 = vmatpush1.msra.mxu0 0.0
    %2630 = vmatprep.subr.mxu0 0.0
    %2631 = vmatpush1.msra.mxu0 0.0
    %2632 = vmatprep.subr.mxu0 0.0
    %2633 = vmatpush1.msra.mxu0 0.0
    %2634 = vmatprep.subr.mxu0 0.0
    %2635 = vmatpush1.msra.mxu0 0.0
    %2636 = vmatprep.subr.mxu0 0.0
    %2637 = vmatpush1.msra.mxu0 0.0
    %2638 = vmatprep.subr.mxu0 0.0
    %2639 = vmatpush1.msra.mxu0 0.0
    %2640 = vmatprep.subr.mxu0 0.0
    %2641 = vmatpush1.msra.mxu0 0.0
    %2642 = vmatprep.subr.mxu0 0.0
    %2643 = vmatpush1.msra.mxu0 0.0
    %2644 = vmatprep.subr.mxu0 0.0
    %2645 = vmatpush1.msra.mxu0 0.0
    %2646 = vmatprep.subr.mxu0 0.0
    %2647 = vmatpush1.msra.mxu0 0.0
    %2648 = vmatprep.subr.mxu0 0.0
    %2649 = vmatpush1.msra.mxu0 0.0
    %2650 = vmatprep.subr.mxu0 0.0
    %2651 = vmatpush1.msra.mxu0 0.0
    %2652 = vmatprep.subr.mxu0 0.0
    %2653 = vmatpush1.msra.mxu0 0.0
    %2654 = vmatprep.subr.mxu0 0.0
    %2655 = vmatpush1.msra.mxu0 0.0
    %2656 = vmatprep.subr.mxu0 0.0
    %2657 = vmatpush1.msra.mxu0 0.0
    %2658 = vmatprep.subr.mxu0 0.0
    %2659 = vmatpush1.msra.mxu0 0.0
    %2660 = vmatprep.subr.mxu0 0.0
    %2661 = vmatpush1.msra.mxu0 0.0
    %2662 = vmatprep.subr.mxu0 0.0
    %2663 = vmatpush1.msra.mxu0 0.0
    %2664 = vmatprep.subr.mxu0 0.0
    %2665 = vmatpush1.msra.mxu0 0.0
    %2666 = vmatprep.subr.mxu0 0.0
    %2667 = vmatpush1.msra.mxu0 0.0
    %2668 = vmatprep.subr.mxu0 0.0
    %2669 = vmatpush1.msra.mxu0 0.0
    %2670 = vmatprep.subr.mxu0 0.0
    %2671 = vmatpush1.msra.mxu0 0.0
    %2672 = vmatprep.subr.mxu0 0.0
    %2673 = vmatpush1.msra.mxu0 0.0
    %2674 = vmatprep.subr.mxu0 0.0
    %2675 = vmatpush1.msra.mxu0 0.0
    %2676 = vmatprep.subr.mxu0 0.0
    %2677 = vmatpush1.msra.mxu0 0.0
    %2678 = vmatprep.subr.mxu0 0.0
    %2679 = vmatpush1.msra.mxu0 0.0
    %2680 = vmatprep.subr.mxu0 0.0
    %2681 = vmatpush1.msra.mxu0 0.0
    %2682 = vmatprep.mubr.f32.mxu0 0.0
    %2683 = vmatmul.mubr.f32.gmra.mrb[0].mxu0 %v2612
    %v2684 = vpop.f32.mrb[0].mxu0
    %v2685 = vadd.f32 %v2607, %v2684
    %v2686 = vpop.f32.mrb[0].mxu0
    %2687 = vdwg.mxu0
    %v2688 = vadd.f32 %v2604, %v2685
    %v2689 = vmax.f32 %v2688, 0.0
    %v2690 = vld [vmem:[#allocation6 + $0x88] ss:$0 sm:$0xff]
    %2692 = vset.pattern.permute.xlu0 23
    %2693 = vperm.xlu0 %2692, %v2690
    %v2694 = vpop.permute.xlu0 %2693
    %2696 = vrot.lane.b32.xlu0 %v2690, 112
    %v2697 = vpop.permute.xlu0 %2696
    %vm2698 = vcmask 39936
    %v2699 = vsel %vm2698, %v2697, 0
    %vm2701 = vcmask 1044480
    %v2703 = vsel %vm2701, %v2689, 0
    %2705 = vmatprep.subr.mxu0 0.0
    %2706 = vmatpush1.msra.mxu0 %v2703
    %2707 = vmatprep.subr.mxu0 0.0
    %2708 = vmatpush1.msra.mxu0 0.0
    %2709 = vmatprep.subr.mxu0 0.0
    %2710 = vmatpush1.msra.mxu0 0.0
    %2711 = vmatprep.subr.mxu0 0.0
    %2712 = vmatpush1.msra.mxu0 0.0
    %2713 = vmatprep.subr.mxu0 0.0
    %2714 = vmatpush1.msra.mxu0 0.0
    %2715 = vmatprep.subr.mxu0 0.0
    %2716 = vmatpush1.msra.mxu0 0.0
    %2717 = vmatprep.subr.mxu0 0.0
    %2718 = vmatpush1.msra.mxu0 0.0
    %2719 = vmatprep.subr.mxu0 0.0
    %2720 = vmatpush1.msra.mxu0 0.0
    %2721 = vmatprep.subr.mxu0 0.0
    %2722 = vmatpush1.msra.mxu0 0.0
    %2723 = vmatprep.subr.mxu0 0.0
    %2724 = vmatpush1.msra.mxu0 0.0
    %2725 = vmatprep.subr.mxu0 0.0
    %2726 = vmatpush1.msra.mxu0 0.0
    %2727 = vmatprep.subr.mxu0 0.0
    %2728 = vmatpush1.msra.mxu0 0.0
    %2729 = vmatprep.subr.mxu0 0.0
    %2730 = vmatpush1.msra.mxu0 0.0
    %2731 = vmatprep.subr.mxu0 0.0
    %2732 = vmatpush1.msra.mxu0 0.0
    %2733 = vmatprep.subr.mxu0 0.0
    %2734 = vmatpush1.msra.mxu0 0.0
    %2735 = vmatprep.subr.mxu0 0.0
    %2736 = vmatpush1.msra.mxu0 0.0
    %2737 = vmatprep.subr.mxu0 0.0
    %2738 = vmatpush1.msra.mxu0 0.0
    %2739 = vmatprep.subr.mxu0 0.0
    %2740 = vmatpush1.msra.mxu0 0.0
    %2741 = vmatprep.subr.mxu0 0.0
    %2742 = vmatpush1.msra.mxu0 0.0
    %2743 = vmatprep.subr.mxu0 0.0
    %2744 = vmatpush1.msra.mxu0 0.0
    %2745 = vmatprep.subr.mxu0 0.0
    %2746 = vmatpush1.msra.mxu0 0.0
    %2747 = vmatprep.subr.mxu0 0.0
    %2748 = vmatpush1.msra.mxu0 0.0
    %2749 = vmatprep.subr.mxu0 0.0
    %2750 = vmatpush1.msra.mxu0 0.0
    %2751 = vmatprep.subr.mxu0 0.0
    %2752 = vmatpush1.msra.mxu0 0.0
    %2753 = vmatprep.subr.mxu0 0.0
    %2754 = vmatpush1.msra.mxu0 0.0
    %2755 = vmatprep.subr.mxu0 0.0
    %2756 = vmatpush1.msra.mxu0 0.0
    %2757 = vmatprep.subr.mxu0 0.0
    %2758 = vmatpush1.msra.mxu0 0.0
    %2759 = vmatprep.subr.mxu0 0.0
    %2760 = vmatpush1.msra.mxu0 0.0
    %2761 = vmatprep.subr.mxu0 0.0
    %2762 = vmatpush1.msra.mxu0 0.0
    %2763 = vmatprep.subr.mxu0 0.0
    %2764 = vmatpush1.msra.mxu0 0.0
    %2765 = vmatprep.subr.mxu0 0.0
    %2766 = vmatpush1.msra.mxu0 0.0
    %2767 = vmatprep.subr.mxu0 0.0
    %2768 = vmatpush1.msra.mxu0 0.0
    %2769 = vmatprep.mubr.f32.mxu0 0.0
    %2770 = vmatmul.mubr.f32.gmra.mrb[0].mxu0 %v2699
    %v2771 = vpop.f32.mrb[0].mxu0
    %v2772 = vadd.f32 %v2694, %v2771
    %v2773 = vpop.f32.mrb[0].mxu0
    %2774 = vdwg.mxu0
    %2775 = vst [vmem:[#allocation8] sm:$0x1] %v2772
    // Predicated region
    $region18: #{tpu_custom_call.1} parent=1 // pred_check
      _
    $region19: #{tpu_custom_call.1} parent=1 // pred_check_branch
      %2777 = sbr.rel (0) target = $region21
    $region20: #{tpu_custom_call.1} parent=1 // pred_region
      %s2779 = ssub.s32 16, 16
      %2780 = vsyncadd [#allocation5], %s2779
      %s2782 = sshll.u32 [#allocation8], 4
      %s2783 = int_to_ptr.vmem [resolvable:$true] %s2782
      %2785 = dma.vmem_to_hbm [thread:$0]  %s2783, 16, %s2, [#allocation5]
    $region21: #{tpu_custom_call.1} parent=1 // pred_fallthru
      _
    // Predicated region
    $region22: #{tpu_custom_call.1} parent=1 // pred_check
      _
    $region23: #{tpu_custom_call.1} parent=1 // pred_check_branch
      %2787 = sbr.rel (0) target = $region25
    $region24: #{tpu_custom_call.1} parent=1 // pred_region
      %2788 = dma.done [#allocation5], 16
    $region25: #{tpu_custom_call.1} parent=1 // pred_fallthru
      _
    %2789 = vsyncpa [#allocation4], 1
    %2790 = vsyncpa [#allocation7], 1
    %2791 = vsyncpa [#allocation5], 1

</llo_original>
